<compile_context>
chip_gen: v7x
topology: tpu7x:2x2x1
jax: 0.10.0
libtpu: 0.0.40
codegen_flags: <defaults>
</compile_context>

<pallas_src>
import functools
import math

import jax
import jax.numpy as jnp
import numpy as np
from jax.experimental import pallas as pl
from jax.experimental.pallas import tpu as pltpu


# ----------------------------------------------------------------------------
# Shared body: multi-head attention (AKT monotonic variant) + residual + LN1.
# Returns x of shape (b_tile*seqlen, d_model) in f32.
# ----------------------------------------------------------------------------
def _attn_ln1_body(
    q_ref, k_ref, v_ref,
    wq_ref, bq_ref, wk_ref, bk_ref, wv_ref, bv_ref,
    wo_ref, bo_ref, gam_ref, ln1w_ref, ln1b_ref,
    *, b_tile, seqlen, d_model, n_heads, d_k, mask_val,
):
    f32 = jnp.float32
    bf16 = jnp.bfloat16
    n_rows = b_tile * seqlen

    # (B_TILE, S, D) -> (B_TILE*S, D): leading-dim merge, layout no-op.
    q_in = q_ref[...].reshape(n_rows, d_model)      # f32, kept for the residual
    k_in = k_ref[...].reshape(n_rows, d_model)
    v_in = v_ref[...].reshape(n_rows, d_model)

    # ---- full-width q/k/v projections: bf16 MXU inputs, f32 accumulation ----
    q_proj = (jnp.dot(q_in.astype(bf16), wq_ref[...], preferred_element_type=f32)
              + bq_ref[...]).astype(bf16)
    k_proj = (jnp.dot(k_in.astype(bf16), wk_ref[...], preferred_element_type=f32)
              + bk_ref[...]).astype(bf16)
    v_proj = (jnp.dot(v_in.astype(bf16), wv_ref[...], preferred_element_type=f32)
              + bv_ref[...]).astype(bf16)

    # ---- masks / distance matrices (hoisted out of the head loop) -----------
    row = jax.lax.broadcasted_iota(jnp.int32, (seqlen, seqlen), 0)   # query idx
    col = jax.lax.broadcasted_iota(jnp.int32, (seqlen, seqlen), 1)   # key idx
    src_mask = ((col - row) < mask_val)[None]          # (1, S, S) allowed pos
    mask_f = src_mask.astype(f32)
    pos_eff = jnp.abs(col - row).astype(f32)[None]     # (1, S, S)
    # disttotal - distcum  ==  sm @ rem_mat  with rem_mat[j, k] = (j > k)
    rem_mat = (row > col).astype(bf16)                 # (S, S)
    zero_row = (row == 0)[None]                        # (1, S, S)

    inv_sqrt_dk = 1.0 / math.sqrt(d_k)

    attn_acc = jnp.zeros((n_rows, d_model), f32)
    # TODO(synk): for large n_heads convert this unrolled loop to lax.fori_loop
    # (needs dynamic lane slicing); with small n_heads the accumulator keeps
    # only one head's (S, S) temporaries live at a time.
    for h in range(n_heads):
        sl = slice(h * d_k, (h + 1) * d_k)
        qh = q_proj[:, sl].reshape(b_tile, seqlen, d_k)    # (B, S, dk) bf16
        kh = k_proj[:, sl].reshape(b_tile, seqlen, d_k)
        vh = v_proj[:, sl].reshape(b_tile, seqlen, d_k)

        scores = jnp.einsum("bqd,bkd->bqk", qh, kh,
                            preferred_element_type=f32) * inv_sqrt_dk  # (B,S,S)

        # masked softmax used only for the monotonic-distance statistics
        s_m = jnp.where(src_mask, scores, jnp.float32(-1e32))
        s_m = s_m - jnp.max(s_m, axis=-1, keepdims=True)
        e = jnp.exp(s_m)
        sm = e * pl.reciprocal(jnp.sum(e, axis=-1, keepdims=True), approx=True)
        sm = sm * mask_f

        dist_rem = jnp.dot(sm.reshape(n_rows, seqlen).astype(bf16), rem_mat,
                           preferred_element_type=f32)
        dist_rem = dist_rem.reshape(b_tile, seqlen, seqlen)
        dist_scores = jnp.sqrt(jnp.maximum(dist_rem * pos_eff, 0.0))

        gamma_h = gam_ref[0, h]                 # == -softplus(gamma_h), SMEM
        total_effect = jnp.clip(jnp.exp(dist_scores * gamma_h), 1e-5, 1e5)

        scores2 = scores * total_effect
        # faithful repro: the source's non-in-place masked_fill here is a no-op
        scores2 = scores2 - jnp.max(scores2, axis=-1, keepdims=True)
        e2 = jnp.exp(scores2)
        att = e2 * pl.reciprocal(jnp.sum(e2, axis=-1, keepdims=True), approx=True)

        if mask_val == 0:                       # zero_pad=True branch
            att = jnp.where(zero_row, 0.0, att)

        # dropout(scores) -> identity (eval mode)
        out_h = jnp.einsum("bqk,bkd->bqd", att.astype(bf16), vh,
                           preferred_element_type=f32)        # (B, S, dk)
        # fold this head straight into the output projection (no concat)
        attn_acc = attn_acc + jnp.dot(
            out_h.reshape(n_rows, d_k).astype(bf16), wo_ref[h],
            preferred_element_type=f32)

    attn_out = attn_acc + bo_ref[...]

    # ---- residual + LayerNorm 1 ---------------------------------------------
    x = q_in + attn_out                         # dropout1 -> identity
    mu = jnp.mean(x, axis=-1, keepdims=True)
    var = jnp.mean((x - mu) ** 2, axis=-1, keepdims=True)
    x = (x - mu) * jax.lax.rsqrt(var + 1e-5) * ln1w_ref[...] + ln1b_ref[...]
    return x


# ----------------------------------------------------------------------------
# Kernel variants: with / without position-wise FFN (apply_pos True / False).
# ----------------------------------------------------------------------------
def _kernel_with_ffn(
    q_ref, k_ref, v_ref,
    wq_ref, bq_ref, wk_ref, bk_ref, wv_ref, bv_ref,
    wo_ref, bo_ref, gam_ref, ln1w_ref, ln1b_ref,
    w1_ref, b1_ref, w2_ref, b2_ref, ln2w_ref, ln2b_ref,
    o_ref,
    *, b_tile, seqlen, d_model, n_heads, d_k, mask_val,
):
    f32, bf16 = jnp.float32, jnp.bfloat16
    x = _attn_ln1_body(
        q_ref, k_ref, v_ref, wq_ref, bq_ref, wk_ref, bk_ref, wv_ref, bv_ref,
        wo_ref, bo_ref, gam_ref, ln1w_ref, ln1b_ref,
        b_tile=b_tile, seqlen=seqlen, d_model=d_model, n_heads=n_heads,
        d_k=d_k, mask_val=mask_val)

    # ---- position-wise FFN + residual + LayerNorm 2 -------------------------
    h1 = jnp.dot(x.astype(bf16), w1_ref[...], preferred_element_type=f32) + b1_ref[...]
    h1 = jnp.maximum(h1, 0.0)                   # ReLU, dropout -> identity
    ffn = jnp.dot(h1.astype(bf16), w2_ref[...], preferred_element_type=f32) + b2_ref[...]
    y = x + ffn                                 # dropout2 -> identity
    mu2 = jnp.mean(y, axis=-1, keepdims=True)
    var2 = jnp.mean((y - mu2) ** 2, axis=-1, keepdims=True)
    x = (y - mu2) * jax.lax.rsqrt(var2 + 1e-5) * ln2w_ref[...] + ln2b_ref[...]

    # NOTE: output kept (B_TILE, S, d_model); for realistic AKT configs d_model
    # is a multiple of 128 so stores are already lane-dense.
    o_ref[...] = x.reshape(b_tile, seqlen, d_model).astype(o_ref.dtype)


def _kernel_no_ffn(
    q_ref, k_ref, v_ref,
    wq_ref, bq_ref, wk_ref, bk_ref, wv_ref, bv_ref,
    wo_ref, bo_ref, gam_ref, ln1w_ref, ln1b_ref,
    o_ref,
    *, b_tile, seqlen, d_model, n_heads, d_k, mask_val,
):
    x = _attn_ln1_body(
        q_ref, k_ref, v_ref, wq_ref, bq_ref, wk_ref, bk_ref, wv_ref, bv_ref,
        wo_ref, bo_ref, gam_ref, ln1w_ref, ln1b_ref,
        b_tile=b_tile, seqlen=seqlen, d_model=d_model, n_heads=n_heads,
        d_k=d_k, mask_val=mask_val)
    o_ref[...] = x.reshape(b_tile, seqlen, d_model).astype(o_ref.dtype)


# ----------------------------------------------------------------------------
# Batch-tile heuristic: big enough to feed the MXU, small enough for v7x VMEM.
# ----------------------------------------------------------------------------
def _choose_b_tile(bs, seqlen, d_model, n_heads, d_ff):
    per_b = 4 * seqlen * (10 * d_model + 2 * d_ff + 8 * seqlen)   # rough f32 bytes
    vmem_cap = max(1, (20 * 1024 * 1024) // max(per_b, 1))        # v7x headroom
    rows_cap = max(1, 512 // max(seqlen, 1))                      # ~512 MXU rows/step
    cap = max(1, min(vmem_cap, rows_cap, bs))
    for c in range(cap, 0, -1):
        if bs % c == 0:
            return c
    return 1


# ----------------------------------------------------------------------------
# Wrapper (glue): parameter reshape/transpose/cast + pallas_call setup.
# ----------------------------------------------------------------------------
def transformer_layer_pallas(mask, query, key, values, p, *, n_heads, kq_same,
                             apply_pos=True, b_tile=None):
    bs, seqlen, d_model = query.shape
    assert d_model % n_heads == 0
    d_k = d_model // n_heads
    d_ff = p["w1"].shape[0]
    f32, bf16 = jnp.float32, jnp.bfloat16

    b_t = b_tile if b_tile is not None else _choose_b_tile(bs, seqlen, d_model,
                                                           n_heads, d_ff)
    assert bs % b_t == 0
    grid = (bs // b_t,)

    query = query.astype(f32)
    key = key.astype(f32)
    values = values.astype(f32)

    # PyTorch Linear stores W as (out, in); pre-transpose so the kernel does
    # x @ W.  Weight matrices are cast to bf16 (MXU-native inputs); biases and
    # LayerNorm params stay f32 (added/applied after f32 accumulation).
    if kq_same:
        wq_src, bq_src = p["wk"], p["bk"]       # q uses the k projection
    else:
        wq_src, bq_src = p["wq"], p["bq"]
    wq = wq_src.T.astype(bf16)
    bq = bq_src.reshape(1, d_model).astype(f32)
    wk = p["wk"].T.astype(bf16)
    bk = p["bk"].reshape(1, d_model).astype(f32)
    wv = p["wv"].T.astype(bf16)
    bv = p["bv"].reshape(1, d_model).astype(f32)
    # head-split output projection: attn_out = sum_h out_h @ wo_heads[h] + bo
    wo_heads = p["wo"].T.reshape(n_heads, d_k, d_model).astype(bf16)
    bo = p["bo"].reshape(1, d_model).astype(f32)
    # numerically stable -softplus(gamma), computed once outside the kernel
    neg_gamma = (-jax.nn.softplus(p["gammas"].reshape(-1))).reshape(1, n_heads).astype(f32)
    ln1w = p["ln1_w"].reshape(1, d_model).astype(f32)
    ln1b = p["ln1_b"].reshape(1, d_model).astype(f32)

    def const_spec(shape):
        # weights/biases: constant index_map + single-buffered (they never change
        # across grid steps, so no double-buffer VMEM is wasted on them).
        ndim = len(shape)
        return pl.BlockSpec(shape, lambda b, _n=ndim: (0,) * _n,
                            pipeline_mode=pl.Buffered(1))

    seq_spec = pl.BlockSpec((b_t, seqlen, d_model), lambda b: (b, 0, 0))
    smem_spec = pl.BlockSpec(memory_space=pltpu.MemorySpace.SMEM)
    out_spec = pl.BlockSpec((b_t, seqlen, d_model), lambda b: (b, 0, 0))

    in_specs = [
        seq_spec, seq_spec, seq_spec,                             # q, k, v
        const_spec((d_model, d_model)), const_spec((1, d_model)),  # wq, bq
        const_spec((d_model, d_model)), const_spec((1, d_model)),  # wk, bk
        const_spec((d_model, d_model)), const_spec((1, d_model)),  # wv, bv
        const_spec((n_heads, d_k, d_model)), const_spec((1, d_model)),  # wo, bo
        smem_spec,                                                 # -softplus(gammas)
        const_spec((1, d_model)), const_spec((1, d_model)),        # ln1 w, b
    ]
    operands = [query, key, values, wq, bq, wk, bk, wv, bv, wo_heads, bo,
                neg_gamma, ln1w, ln1b]

    if apply_pos:
        w1 = p["w1"].T.astype(bf16)
        b1 = p["b1"].reshape(1, d_ff).astype(f32)
        w2 = p["w2"].T.astype(bf16)
        b2 = p["b2"].reshape(1, d_model).astype(f32)
        ln2w = p["ln2_w"].reshape(1, d_model).astype(f32)
        ln2b = p["ln2_b"].reshape(1, d_model).astype(f32)
        in_specs += [
            const_spec((d_model, d_ff)), const_spec((1, d_ff)),    # w1, b1
            const_spec((d_ff, d_model)), const_spec((1, d_model)),  # w2, b2
            const_spec((1, d_model)), const_spec((1, d_model)),    # ln2 w, b
        ]
        operands += [w1, b1, w2, b2, ln2w, ln2b]
        kernel_fn = _kernel_with_ffn
    else:
        kernel_fn = _kernel_no_ffn

    kernel = functools.partial(
        kernel_fn,
        b_tile=b_t, seqlen=seqlen, d_model=d_model, n_heads=n_heads, d_k=d_k,
        mask_val=int(mask),
    )

    return pl.pallas_call(
        kernel,
        out_shape=jax.ShapeDtypeStruct((bs, seqlen, d_model), f32),
        grid_spec=pltpu.PrefetchScalarGridSpec(
            num_scalar_prefetch=0,
            grid=grid,
            in_specs=in_specs,
            out_specs=out_spec,
        ),
        compiler_params=pltpu.CompilerParams(
            dimension_semantics=("parallel",),
            vmem_limit_bytes=48 * 1024 * 1024,   # explicit, sized for v7x per-core VMEM
        ),
    )(*operands)


# ----------------------------------------------------------------------------
# Pure-JAX reference mirroring the PyTorch code (eval-mode dropout, f32).
# ----------------------------------------------------------------------------
def transformer_layer_ref(mask, query, key, values, p, *, n_heads, kq_same,
                          apply_pos=True):
    bs, seqlen, d_model = query.shape
    d_k = d_model // n_heads

    def linear(x, w, b):       # torch convention: w (out, in)
        return x @ w.T + b

    k = linear(key, p["wk"], p["bk"]).reshape(bs, seqlen, n_heads, d_k)
    if kq_same:
        q = linear(query, p["wk"], p["bk"]).reshape(bs, seqlen, n_heads, d_k)
    else:
        q = linear(query, p["wq"], p["bq"]).reshape(bs, seqlen, n_heads, d_k)
    v = linear(values, p["wv"], p["bv"]).reshape(bs, seqlen, n_heads, d_k)
    q, k, v = (t.transpose(0, 2, 1, 3) for t in (q, k, v))     # (bs, h, seq, dk)

    nopeek = np.triu(np.ones((1, 1, seqlen, seqlen)), k=int(mask)).astype("uint8")
    src_mask = jnp.asarray(nopeek == 0)                         # bool
    zero_pad = int(mask) == 0

    scores = jnp.einsum("bhqd,bhkd->bhqk", q, k) / math.sqrt(d_k)
    x1 = jnp.arange(seqlen)[None, :] * jnp.ones((seqlen, 1), jnp.int32)  # j
    x2 = x1.T                                                             # i

    scores_ = jnp.where(src_mask, scores, -1e32)
    scores_ = jax.nn.softmax(scores_, axis=-1)
    scores_ = scores_ * src_mask.astype(jnp.float32)
    distcum = jnp.cumsum(scores_, axis=-1)
    disttotal = jnp.sum(scores_, axis=-1, keepdims=True)
    position_effect = jnp.abs(x1 - x2)[None, None].astype(jnp.float32)
    dist_scores = jnp.sqrt(jnp.clip((disttotal - distcum) * position_effect, 0.0, None))

    gamma = -jax.nn.softplus(p["gammas"].reshape(-1)).reshape(1, n_heads, 1, 1)
    total_effect = jnp.clip(jnp.exp(dist_scores * gamma), 1e-5, 1e5)
    scores = scores * total_effect
    # (the source's non-in-place masked_fill is a no-op -> omitted)
    scores = jax.nn.softmax(scores, axis=-1)
    if zero_pad:
        scores = scores.at[:, :, 0, :].set(0.0)
    out = jnp.einsum("bhqk,bhkd->bhqd", scores, v)
    concat = out.transpose(0, 2, 1, 3).reshape(bs, seqlen, d_model)
    attn_out = linear(concat, p["wo"], p["bo"])

    def layer_norm(x, w, b):
        mu = jnp.mean(x, axis=-1, keepdims=True)
        var = jnp.mean((x - mu) ** 2, axis=-1, keepdims=True)
        return (x - mu) / jnp.sqrt(var + 1e-5) * w + b

    x = layer_norm(query + attn_out, p["ln1_w"], p["ln1_b"])
    if apply_pos:
        h1 = jax.nn.relu(linear(x, p["w1"], p["b1"]))
        x = layer_norm(x + linear(h1, p["w2"], p["b2"]), p["ln2_w"], p["ln2_b"])
    return x


# ----------------------------------------------------------------------------
if __name__ == "__main__":
    bs, seqlen, d_model, n_heads, d_ff = 2, 8, 32, 4, 64
    # TODO(synk): dropout layers are treated as eval-mode identities (inference).

    key0 = jax.random.PRNGKey(0)
    ks = jax.random.split(key0, 24)
    init = lambda k, shape, s=0.1: s * jax.random.normal(k, shape, jnp.float32)

    params = {
        "wq": init(ks[0], (d_model, d_model)), "bq": init(ks[1], (d_model,)),
        "wk": init(ks[2], (d_model, d_model)), "bk": init(ks[3], (d_model,)),
        "wv": init(ks[4], (d_model, d_model)), "bv": init(ks[5], (d_model,)),
        "wo": init(ks[6], (d_model, d_model)), "bo": init(ks[7], (d_model,)),
        "gammas": init(ks[8], (n_heads,), 0.5),
        "ln1_w": 1.0 + init(ks[9], (d_model,)), "ln1_b": init(ks[10], (d_model,)),
        "w1": init(ks[11], (d_ff, d_model)), "b1": init(ks[12], (d_ff,)),
        "w2": init(ks[13], (d_model, d_ff)), "b2": init(ks[14], (d_model,)),
        "ln2_w": 1.0 + init(ks[15], (d_model,)), "ln2_b": init(ks[16], (d_model,)),
    }

    query = jax.random.normal(ks[17], (bs, seqlen, d_model), jnp.float32)
    key_in = jax.random.normal(ks[18], (bs, seqlen, d_model), jnp.float32)
    values = jax.random.normal(ks[19], (bs, seqlen, d_model), jnp.float32)

    # configurations: (decoder-style zero_pad + kq_same), (mask=1, separate q),
    # and the attention-only path (apply_pos=False).
    configs = [
        dict(mask=0, kq_same=True, apply_pos=True),
        dict(mask=1, kq_same=False, apply_pos=True),
        dict(mask=1, kq_same=True, apply_pos=False),
    ]
    for cfg in configs:
        out = transformer_layer_pallas(cfg["mask"], query, key_in, values, params,
                                       n_heads=n_heads, kq_same=cfg["kq_same"],
                                       apply_pos=cfg["apply_pos"])
        out = jax.block_until_ready(out)
        ref = transformer_layer_ref(cfg["mask"], query, key_in, values, params,
                                    n_heads=n_heads, kq_same=cfg["kq_same"],
                                    apply_pos=cfg["apply_pos"])
        ref = jax.block_until_ready(ref)
        assert out.shape == (bs, seqlen, d_model)
        # bf16 MXU inputs with f32 accumulation vs. the pure-f32 reference
        np.testing.assert_allclose(np.asarray(out), np.asarray(ref),
                                   rtol=2e-2, atol=2e-2)

    print("KERNEL_OK")
</pallas_src>

<mosaic_0001>
module attributes {stable_mosaic.version = 11 : i64} {
  func.func @_kernel_with_ffn(%arg0: i32, %arg1: memref<2x8x32xf32, #tpu.memory_space<vmem>>, %arg2: memref<2x8x32xf32, #tpu.memory_space<vmem>>, %arg3: memref<2x8x32xf32, #tpu.memory_space<vmem>>, %arg4: memref<32x32xbf16, #tpu.memory_space<vmem>>, %arg5: memref<1x32xf32, #tpu.memory_space<vmem>>, %arg6: memref<32x32xbf16, #tpu.memory_space<vmem>>, %arg7: memref<1x32xf32, #tpu.memory_space<vmem>>, %arg8: memref<32x32xbf16, #tpu.memory_space<vmem>>, %arg9: memref<1x32xf32, #tpu.memory_space<vmem>>, %arg10: memref<4x8x32xbf16, #tpu.memory_space<vmem>>, %arg11: memref<1x32xf32, #tpu.memory_space<vmem>>, %arg12: memref<1x4xf32, #tpu.memory_space<smem>>, %arg13: memref<1x32xf32, #tpu.memory_space<vmem>>, %arg14: memref<1x32xf32, #tpu.memory_space<vmem>>, %arg15: memref<32x64xbf16, #tpu.memory_space<vmem>>, %arg16: memref<1x64xf32, #tpu.memory_space<vmem>>, %arg17: memref<64x32xbf16, #tpu.memory_space<vmem>>, %arg18: memref<1x32xf32, #tpu.memory_space<vmem>>, %arg19: memref<1x32xf32, #tpu.memory_space<vmem>>, %arg20: memref<1x32xf32, #tpu.memory_space<vmem>>, %arg21: memref<2x8x32xf32, #tpu.memory_space<vmem>>) attributes {dimension_semantics = [#tpu.dimension_semantics<parallel>], iteration_bounds = array<i64: 1>, scalar_prefetch = 0 : i64, scratch_operands = 0 : i64, tpu.core_type = #tpu.core_type<tc>, window_params = [{transform_indices = @transform_0, window_bounds = array<i64: 2, 8, 32>}, {transform_indices = @transform_1, window_bounds = array<i64: 2, 8, 32>}, {transform_indices = @transform_2, window_bounds = array<i64: 2, 8, 32>}, {pipeline_mode = #tpu.pipeline_mode<synchronous>, transform_indices = @transform_3, window_bounds = array<i64: 32, 32>}, {pipeline_mode = #tpu.pipeline_mode<synchronous>, transform_indices = @transform_4, window_bounds = array<i64: 1, 32>}, {pipeline_mode = #tpu.pipeline_mode<synchronous>, transform_indices = @transform_5, window_bounds = array<i64: 32, 32>}, {pipeline_mode = #tpu.pipeline_mode<synchronous>, transform_indices = @transform_6, window_bounds = array<i64: 1, 32>}, {pipeline_mode = #tpu.pipeline_mode<synchronous>, transform_indices = @transform_7, window_bounds = array<i64: 32, 32>}, {pipeline_mode = #tpu.pipeline_mode<synchronous>, transform_indices = @transform_8, window_bounds = array<i64: 1, 32>}, {pipeline_mode = #tpu.pipeline_mode<synchronous>, transform_indices = @transform_9, window_bounds = array<i64: 4, 8, 32>}, {pipeline_mode = #tpu.pipeline_mode<synchronous>, transform_indices = @transform_10, window_bounds = array<i64: 1, 32>}, {transform_indices = @transform_11, window_bounds = array<i64: 1, 4>}, {pipeline_mode = #tpu.pipeline_mode<synchronous>, transform_indices = @transform_12, window_bounds = array<i64: 1, 32>}, {pipeline_mode = #tpu.pipeline_mode<synchronous>, transform_indices = @transform_13, window_bounds = array<i64: 1, 32>}, {pipeline_mode = #tpu.pipeline_mode<synchronous>, transform_indices = @transform_14, window_bounds = array<i64: 32, 64>}, {pipeline_mode = #tpu.pipeline_mode<synchronous>, transform_indices = @transform_15, window_bounds = array<i64: 1, 64>}, {pipeline_mode = #tpu.pipeline_mode<synchronous>, transform_indices = @transform_16, window_bounds = array<i64: 64, 32>}, {pipeline_mode = #tpu.pipeline_mode<synchronous>, transform_indices = @transform_17, window_bounds = array<i64: 1, 32>}, {pipeline_mode = #tpu.pipeline_mode<synchronous>, transform_indices = @transform_18, window_bounds = array<i64: 1, 32>}, {pipeline_mode = #tpu.pipeline_mode<synchronous>, transform_indices = @transform_19, window_bounds = array<i64: 1, 32>}, {transform_indices = @transform_20, window_bounds = array<i64: 2, 8, 32>}]} {
    %c0 = arith.constant 0 : index
    %c0_0 = arith.constant 0 : index
    %c0_1 = arith.constant 0 : index
    %0 = vector.load %arg1[%c0, %c0_0, %c0_1] : memref<2x8x32xf32, #tpu.memory_space<vmem>>, vector<2x8x32xf32>
    %1 = vector.shape_cast %0 : vector<2x8x32xf32> to vector<16x32xf32>
    %c0_2 = arith.constant 0 : index
    %c0_3 = arith.constant 0 : index
    %c0_4 = arith.constant 0 : index
    %2 = vector.load %arg2[%c0_2, %c0_3, %c0_4] : memref<2x8x32xf32, #tpu.memory_space<vmem>>, vector<2x8x32xf32>
    %3 = vector.shape_cast %2 : vector<2x8x32xf32> to vector<16x32xf32>
    %c0_5 = arith.constant 0 : index
    %c0_6 = arith.constant 0 : index
    %c0_7 = arith.constant 0 : index
    %4 = vector.load %arg3[%c0_5, %c0_6, %c0_7] : memref<2x8x32xf32, #tpu.memory_space<vmem>>, vector<2x8x32xf32>
    %5 = vector.shape_cast %4 : vector<2x8x32xf32> to vector<16x32xf32>
    %6 = arith.truncf %1 : vector<16x32xf32> to vector<16x32xbf16>
    %c0_8 = arith.constant 0 : index
    %c0_9 = arith.constant 0 : index
    %7 = vector.load %arg4[%c0_8, %c0_9] : memref<32x32xbf16, #tpu.memory_space<vmem>>, vector<32x32xbf16>
    %cst = arith.constant dense<0.000000e+00> : vector<16x32xf32>
    %8 = tpu.matmul %6, %7, %cst {dimension_numbers = #tpu.dot_dimension_numbers<[1], [0], [0], [1], [0, 0, 1, 1], [], []>} : vector<16x32xbf16>, vector<32x32xbf16>, vector<16x32xf32> -> vector<16x32xf32>
    %c0_10 = arith.constant 0 : index
    %c0_11 = arith.constant 0 : index
    %9 = vector.load %arg5[%c0_10, %c0_11] : memref<1x32xf32, #tpu.memory_space<vmem>>, vector<1x32xf32>
    %10 = vector.broadcast %9 : vector<1x32xf32> to vector<16x32xf32>
    %11 = arith.addf %8, %10 : vector<16x32xf32>
    %12 = arith.truncf %11 : vector<16x32xf32> to vector<16x32xbf16>
    %13 = arith.truncf %3 : vector<16x32xf32> to vector<16x32xbf16>
    %c0_12 = arith.constant 0 : index
    %c0_13 = arith.constant 0 : index
    %14 = vector.load %arg6[%c0_12, %c0_13] : memref<32x32xbf16, #tpu.memory_space<vmem>>, vector<32x32xbf16>
    %cst_14 = arith.constant dense<0.000000e+00> : vector<16x32xf32>
    %15 = tpu.matmul %13, %14, %cst_14 {dimension_numbers = #tpu.dot_dimension_numbers<[1], [0], [0], [1], [0, 0, 1, 1], [], []>} : vector<16x32xbf16>, vector<32x32xbf16>, vector<16x32xf32> -> vector<16x32xf32>
    %c0_15 = arith.constant 0 : index
    %c0_16 = arith.constant 0 : index
    %16 = vector.load %arg7[%c0_15, %c0_16] : memref<1x32xf32, #tpu.memory_space<vmem>>, vector<1x32xf32>
    %17 = vector.broadcast %16 : vector<1x32xf32> to vector<16x32xf32>
    %18 = arith.addf %15, %17 : vector<16x32xf32>
    %19 = arith.truncf %18 : vector<16x32xf32> to vector<16x32xbf16>
    %20 = arith.truncf %5 : vector<16x32xf32> to vector<16x32xbf16>
    %c0_17 = arith.constant 0 : index
    %c0_18 = arith.constant 0 : index
    %21 = vector.load %arg8[%c0_17, %c0_18] : memref<32x32xbf16, #tpu.memory_space<vmem>>, vector<32x32xbf16>
    %cst_19 = arith.constant dense<0.000000e+00> : vector<16x32xf32>
    %22 = tpu.matmul %20, %21, %cst_19 {dimension_numbers = #tpu.dot_dimension_numbers<[1], [0], [0], [1], [0, 0, 1, 1], [], []>} : vector<16x32xbf16>, vector<32x32xbf16>, vector<16x32xf32> -> vector<16x32xf32>
    %c0_20 = arith.constant 0 : index
    %c0_21 = arith.constant 0 : index
    %23 = vector.load %arg9[%c0_20, %c0_21] : memref<1x32xf32, #tpu.memory_space<vmem>>, vector<1x32xf32>
    %24 = vector.broadcast %23 : vector<1x32xf32> to vector<16x32xf32>
    %25 = arith.addf %22, %24 : vector<16x32xf32>
    %26 = arith.truncf %25 : vector<16x32xf32> to vector<16x32xbf16>
    %27 = tpu.iota {dimensions = array<i32: 0>} : vector<8x8xi32>
    %28 = tpu.iota {dimensions = array<i32: 1>} : vector<8x8xi32>
    %29 = arith.subi %28, %27 : vector<8x8xi32>
    %c0_i32 = arith.constant 0 : i32
    %30 = vector.broadcast %c0_i32 : i32 to vector<8x8xi32>
    %31 = arith.cmpi slt, %29, %30 : vector<8x8xi32>
    %32 = vector.shape_cast %31 : vector<8x8xi1> to vector<1x8x8xi1>
    %33 = arith.extui %32 : vector<1x8x8xi1> to vector<1x8x8xi32>
    %34 = arith.sitofp %33 : vector<1x8x8xi32> to vector<1x8x8xf32>
    %35 = arith.subi %28, %27 : vector<8x8xi32>
    %36 = math.absi %35 : vector<8x8xi32>
    %37 = arith.sitofp %36 : vector<8x8xi32> to vector<8x8xf32>
    %38 = vector.shape_cast %37 : vector<8x8xf32> to vector<1x8x8xf32>
    %39 = arith.cmpi sgt, %27, %28 : vector<8x8xi32>
    %40 = arith.extui %39 : vector<8x8xi1> to vector<8x8xi32>
    %41 = arith.sitofp %40 : vector<8x8xi32> to vector<8x8xf32>
    %42 = arith.truncf %41 : vector<8x8xf32> to vector<8x8xbf16>
    %c0_i32_22 = arith.constant 0 : i32
    %43 = vector.broadcast %c0_i32_22 : i32 to vector<8x8xi32>
    %44 = arith.cmpi eq, %27, %43 : vector<8x8xi32>
    %45 = vector.shape_cast %44 : vector<8x8xi1> to vector<1x8x8xi1>
    %cst_23 = arith.constant 0.000000e+00 : f32
    %46 = vector.broadcast %cst_23 : f32 to vector<16x32xf32>
    %47 = vector.extract_strided_slice %12 {offsets = [0, 0], sizes = [16, 8], strides = [1, 1]} : vector<16x32xbf16> to vector<16x8xbf16>
    %48 = vector.shape_cast %47 : vector<16x8xbf16> to vector<2x8x8xbf16>
    %49 = vector.extract_strided_slice %19 {offsets = [0, 0], sizes = [16, 8], strides = [1, 1]} : vector<16x32xbf16> to vector<16x8xbf16>
    %50 = vector.shape_cast %49 : vector<16x8xbf16> to vector<2x8x8xbf16>
    %51 = vector.extract_strided_slice %26 {offsets = [0, 0], sizes = [16, 8], strides = [1, 1]} : vector<16x32xbf16> to vector<16x8xbf16>
    %52 = vector.shape_cast %51 : vector<16x8xbf16> to vector<2x8x8xbf16>
    "tpu.trace_start"() <{level = 10 : i32, message = "bqd,bkd->bqk"}> : () -> ()
    %cst_24 = arith.constant dense<0.000000e+00> : vector<2x8x8xf32>
    %53 = tpu.matmul %48, %50, %cst_24 {dimension_numbers = #tpu.dot_dimension_numbers<[2], [2], [1], [1], [0, 0, 0, 1, 1, 1], [0], [0]>} : vector<2x8x8xbf16>, vector<2x8x8xbf16>, vector<2x8x8xf32> -> vector<2x8x8xf32>
    "tpu.trace_stop"() : () -> ()
    %cst_25 = arith.constant 0.353553385 : f32
    %54 = vector.broadcast %cst_25 : f32 to vector<2x8x8xf32>
    %55 = arith.mulf %53, %54 : vector<2x8x8xf32>
    %cst_26 = arith.constant -1.000000e+32 : f32
    %56 = vector.shape_cast %32 : vector<1x8x8xi1> to vector<1x8x8xi1>
    %57 = vector.broadcast %56 : vector<1x8x8xi1> to vector<2x8x8xi1>
    %58 = vector.broadcast %cst_26 : f32 to vector<2x8x8xf32>
    %59 = arith.select %57, %55, %58 : vector<2x8x8xi1>, vector<2x8x8xf32>
    %cst_27 = arith.constant dense<0xFF800000> : vector<2x8xf32>
    %60 = vector.multi_reduction <maximumf>, %59, %cst_27 [2] : vector<2x8x8xf32> to vector<2x8xf32>
    %61 = vector.shape_cast %60 : vector<2x8xf32> to vector<2x8x1xf32>
    %62 = vector.broadcast %61 : vector<2x8x1xf32> to vector<2x8x8xf32>
    %63 = arith.subf %59, %62 : vector<2x8x8xf32>
    %64 = math.exp %63 : vector<2x8x8xf32>
    %cst_28 = arith.constant dense<0.000000e+00> : vector<2x8xf32>
    %65 = vector.multi_reduction <add>, %64, %cst_28 [2] : vector<2x8x8xf32> to vector<2x8xf32>
    %66 = vector.shape_cast %65 : vector<2x8xf32> to vector<2x8x1xf32>
    %67 = tpu.reciprocal %66 {approx = true} : vector<2x8x1xf32> -> vector<2x8x1xf32>
    %68 = vector.broadcast %67 : vector<2x8x1xf32> to vector<2x8x8xf32>
    %69 = arith.mulf %64, %68 : vector<2x8x8xf32>
    %70 = vector.broadcast %34 : vector<1x8x8xf32> to vector<2x8x8xf32>
    %71 = arith.mulf %69, %70 : vector<2x8x8xf32>
    %72 = vector.shape_cast %71 : vector<2x8x8xf32> to vector<16x8xf32>
    %73 = arith.truncf %72 : vector<16x8xf32> to vector<16x8xbf16>
    %cst_29 = arith.constant dense<0.000000e+00> : vector<16x8xf32>
    %74 = tpu.matmul %73, %42, %cst_29 {dimension_numbers = #tpu.dot_dimension_numbers<[1], [0], [0], [1], [0, 0, 1, 1], [], []>} : vector<16x8xbf16>, vector<8x8xbf16>, vector<16x8xf32> -> vector<16x8xf32>
    %75 = vector.shape_cast %74 : vector<16x8xf32> to vector<2x8x8xf32>
    %76 = vector.broadcast %38 : vector<1x8x8xf32> to vector<2x8x8xf32>
    %77 = arith.mulf %75, %76 : vector<2x8x8xf32>
    %cst_30 = arith.constant 0.000000e+00 : f32
    %78 = vector.broadcast %cst_30 : f32 to vector<2x8x8xf32>
    %79 = arith.maximumf %77, %78 : vector<2x8x8xf32>
    %80 = math.sqrt %79 : vector<2x8x8xf32>
    %c0_31 = arith.constant 0 : index
    %c0_32 = arith.constant 0 : index
    %81 = memref.load %arg12[%c0_31, %c0_32] : memref<1x4xf32, #tpu.memory_space<smem>>
    %82 = vector.broadcast %81 : f32 to vector<2x8x8xf32>
    %83 = arith.mulf %80, %82 : vector<2x8x8xf32>
    %84 = math.exp %83 : vector<2x8x8xf32>
    %cst_33 = arith.constant 9.99999974E-6 : f32
    %cst_34 = arith.constant 1.000000e+05 : f32
    %85 = vector.broadcast %cst_33 : f32 to vector<2x8x8xf32>
    %86 = arith.maximumf %85, %84 : vector<2x8x8xf32>
    %87 = vector.broadcast %cst_34 : f32 to vector<2x8x8xf32>
    %88 = arith.minimumf %87, %86 : vector<2x8x8xf32>
    %89 = arith.mulf %55, %88 : vector<2x8x8xf32>
    %cst_35 = arith.constant dense<0xFF800000> : vector<2x8xf32>
    %90 = vector.multi_reduction <maximumf>, %89, %cst_35 [2] : vector<2x8x8xf32> to vector<2x8xf32>
    %91 = vector.shape_cast %90 : vector<2x8xf32> to vector<2x8x1xf32>
    %92 = vector.broadcast %91 : vector<2x8x1xf32> to vector<2x8x8xf32>
    %93 = arith.subf %89, %92 : vector<2x8x8xf32>
    %94 = math.exp %93 : vector<2x8x8xf32>
    %cst_36 = arith.constant dense<0.000000e+00> : vector<2x8xf32>
    %95 = vector.multi_reduction <add>, %94, %cst_36 [2] : vector<2x8x8xf32> to vector<2x8xf32>
    %96 = vector.shape_cast %95 : vector<2x8xf32> to vector<2x8x1xf32>
    %97 = tpu.reciprocal %96 {approx = true} : vector<2x8x1xf32> -> vector<2x8x1xf32>
    %98 = vector.broadcast %97 : vector<2x8x1xf32> to vector<2x8x8xf32>
    %99 = arith.mulf %94, %98 : vector<2x8x8xf32>
    %cst_37 = arith.constant 0.000000e+00 : f32
    %100 = vector.shape_cast %45 : vector<1x8x8xi1> to vector<1x8x8xi1>
    %101 = vector.broadcast %100 : vector<1x8x8xi1> to vector<2x8x8xi1>
    %102 = vector.broadcast %cst_37 : f32 to vector<2x8x8xf32>
    %103 = arith.select %101, %102, %99 : vector<2x8x8xi1>, vector<2x8x8xf32>
    %104 = arith.truncf %103 : vector<2x8x8xf32> to vector<2x8x8xbf16>
    "tpu.trace_start"() <{level = 10 : i32, message = "bqk,bkd->bqd"}> : () -> ()
    %cst_38 = arith.constant dense<0.000000e+00> : vector<2x8x8xf32>
    %105 = tpu.matmul %104, %52, %cst_38 {dimension_numbers = #tpu.dot_dimension_numbers<[2], [1], [1], [2], [0, 0, 0, 1, 1, 2], [0], [0]>} : vector<2x8x8xbf16>, vector<2x8x8xbf16>, vector<2x8x8xf32> -> vector<2x8x8xf32>
    "tpu.trace_stop"() : () -> ()
    %106 = vector.shape_cast %105 : vector<2x8x8xf32> to vector<16x8xf32>
    %107 = arith.truncf %106 : vector<16x8xf32> to vector<16x8xbf16>
    %c0_39 = arith.constant 0 : index
    %c0_40 = arith.constant 0 : index
    %c0_41 = arith.constant 0 : index
    %108 = vector.load %arg10[%c0_39, %c0_40, %c0_41] : memref<4x8x32xbf16, #tpu.memory_space<vmem>>, vector<1x8x32xbf16>
    %109 = vector.shape_cast %108 : vector<1x8x32xbf16> to vector<8x32xbf16>
    %cst_42 = arith.constant dense<0.000000e+00> : vector<16x32xf32>
    %110 = tpu.matmul %107, %109, %cst_42 {dimension_numbers = #tpu.dot_dimension_numbers<[1], [0], [0], [1], [0, 0, 1, 1], [], []>} : vector<16x8xbf16>, vector<8x32xbf16>, vector<16x32xf32> -> vector<16x32xf32>
    %111 = arith.addf %46, %110 : vector<16x32xf32>
    %112 = vector.extract_strided_slice %12 {offsets = [0, 8], sizes = [16, 8], strides = [1, 1]} : vector<16x32xbf16> to vector<16x8xbf16>
    %113 = vector.shape_cast %112 : vector<16x8xbf16> to vector<2x8x8xbf16>
    %114 = vector.extract_strided_slice %19 {offsets = [0, 8], sizes = [16, 8], strides = [1, 1]} : vector<16x32xbf16> to vector<16x8xbf16>
    %115 = vector.shape_cast %114 : vector<16x8xbf16> to vector<2x8x8xbf16>
    %116 = vector.extract_strided_slice %26 {offsets = [0, 8], sizes = [16, 8], strides = [1, 1]} : vector<16x32xbf16> to vector<16x8xbf16>
    %117 = vector.shape_cast %116 : vector<16x8xbf16> to vector<2x8x8xbf16>
    "tpu.trace_start"() <{level = 10 : i32, message = "bqd,bkd->bqk"}> : () -> ()
    %cst_43 = arith.constant dense<0.000000e+00> : vector<2x8x8xf32>
    %118 = tpu.matmul %113, %115, %cst_43 {dimension_numbers = #tpu.dot_dimension_numbers<[2], [2], [1], [1], [0, 0, 0, 1, 1, 1], [0], [0]>} : vector<2x8x8xbf16>, vector<2x8x8xbf16>, vector<2x8x8xf32> -> vector<2x8x8xf32>
    "tpu.trace_stop"() : () -> ()
    %cst_44 = arith.constant 0.353553385 : f32
    %119 = vector.broadcast %cst_44 : f32 to vector<2x8x8xf32>
    %120 = arith.mulf %118, %119 : vector<2x8x8xf32>
    %cst_45 = arith.constant -1.000000e+32 : f32
    %121 = vector.shape_cast %32 : vector<1x8x8xi1> to vector<1x8x8xi1>
    %122 = vector.broadcast %121 : vector<1x8x8xi1> to vector<2x8x8xi1>
    %123 = vector.broadcast %cst_45 : f32 to vector<2x8x8xf32>
    %124 = arith.select %122, %120, %123 : vector<2x8x8xi1>, vector<2x8x8xf32>
    %cst_46 = arith.constant dense<0xFF800000> : vector<2x8xf32>
    %125 = vector.multi_reduction <maximumf>, %124, %cst_46 [2] : vector<2x8x8xf32> to vector<2x8xf32>
    %126 = vector.shape_cast %125 : vector<2x8xf32> to vector<2x8x1xf32>
    %127 = vector.broadcast %126 : vector<2x8x1xf32> to vector<2x8x8xf32>
    %128 = arith.subf %124, %127 : vector<2x8x8xf32>
    %129 = math.exp %128 : vector<2x8x8xf32>
    %cst_47 = arith.constant dense<0.000000e+00> : vector<2x8xf32>
    %130 = vector.multi_reduction <add>, %129, %cst_47 [2] : vector<2x8x8xf32> to vector<2x8xf32>
    %131 = vector.shape_cast %130 : vector<2x8xf32> to vector<2x8x1xf32>
    %132 = tpu.reciprocal %131 {approx = true} : vector<2x8x1xf32> -> vector<2x8x1xf32>
    %133 = vector.broadcast %132 : vector<2x8x1xf32> to vector<2x8x8xf32>
    %134 = arith.mulf %129, %133 : vector<2x8x8xf32>
    %135 = vector.broadcast %34 : vector<1x8x8xf32> to vector<2x8x8xf32>
    %136 = arith.mulf %134, %135 : vector<2x8x8xf32>
    %137 = vector.shape_cast %136 : vector<2x8x8xf32> to vector<16x8xf32>
    %138 = arith.truncf %137 : vector<16x8xf32> to vector<16x8xbf16>
    %cst_48 = arith.constant dense<0.000000e+00> : vector<16x8xf32>
    %139 = tpu.matmul %138, %42, %cst_48 {dimension_numbers = #tpu.dot_dimension_numbers<[1], [0], [0], [1], [0, 0, 1, 1], [], []>} : vector<16x8xbf16>, vector<8x8xbf16>, vector<16x8xf32> -> vector<16x8xf32>
    %140 = vector.shape_cast %139 : vector<16x8xf32> to vector<2x8x8xf32>
    %141 = vector.broadcast %38 : vector<1x8x8xf32> to vector<2x8x8xf32>
    %142 = arith.mulf %140, %141 : vector<2x8x8xf32>
    %cst_49 = arith.constant 0.000000e+00 : f32
    %143 = vector.broadcast %cst_49 : f32 to vector<2x8x8xf32>
    %144 = arith.maximumf %142, %143 : vector<2x8x8xf32>
    %145 = math.sqrt %144 : vector<2x8x8xf32>
    %c0_50 = arith.constant 0 : index
    %c1 = arith.constant 1 : index
    %146 = memref.load %arg12[%c0_50, %c1] : memref<1x4xf32, #tpu.memory_space<smem>>
    %147 = vector.broadcast %146 : f32 to vector<2x8x8xf32>
    %148 = arith.mulf %145, %147 : vector<2x8x8xf32>
    %149 = math.exp %148 : vector<2x8x8xf32>
    %cst_51 = arith.constant 9.99999974E-6 : f32
    %cst_52 = arith.constant 1.000000e+05 : f32
    %150 = vector.broadcast %cst_51 : f32 to vector<2x8x8xf32>
    %151 = arith.maximumf %150, %149 : vector<2x8x8xf32>
    %152 = vector.broadcast %cst_52 : f32 to vector<2x8x8xf32>
    %153 = arith.minimumf %152, %151 : vector<2x8x8xf32>
    %154 = arith.mulf %120, %153 : vector<2x8x8xf32>
    %cst_53 = arith.constant dense<0xFF800000> : vector<2x8xf32>
    %155 = vector.multi_reduction <maximumf>, %154, %cst_53 [2] : vector<2x8x8xf32> to vector<2x8xf32>
    %156 = vector.shape_cast %155 : vector<2x8xf32> to vector<2x8x1xf32>
    %157 = vector.broadcast %156 : vector<2x8x1xf32> to vector<2x8x8xf32>
    %158 = arith.subf %154, %157 : vector<2x8x8xf32>
    %159 = math.exp %158 : vector<2x8x8xf32>
    %cst_54 = arith.constant dense<0.000000e+00> : vector<2x8xf32>
    %160 = vector.multi_reduction <add>, %159, %cst_54 [2] : vector<2x8x8xf32> to vector<2x8xf32>
    %161 = vector.shape_cast %160 : vector<2x8xf32> to vector<2x8x1xf32>
    %162 = tpu.reciprocal %161 {approx = true} : vector<2x8x1xf32> -> vector<2x8x1xf32>
    %163 = vector.broadcast %162 : vector<2x8x1xf32> to vector<2x8x8xf32>
    %164 = arith.mulf %159, %163 : vector<2x8x8xf32>
    %cst_55 = arith.constant 0.000000e+00 : f32
    %165 = vector.shape_cast %45 : vector<1x8x8xi1> to vector<1x8x8xi1>
    %166 = vector.broadcast %165 : vector<1x8x8xi1> to vector<2x8x8xi1>
    %167 = vector.broadcast %cst_55 : f32 to vector<2x8x8xf32>
    %168 = arith.select %166, %167, %164 : vector<2x8x8xi1>, vector<2x8x8xf32>
    %169 = arith.truncf %168 : vector<2x8x8xf32> to vector<2x8x8xbf16>
    "tpu.trace_start"() <{level = 10 : i32, message = "bqk,bkd->bqd"}> : () -> ()
    %cst_56 = arith.constant dense<0.000000e+00> : vector<2x8x8xf32>
    %170 = tpu.matmul %169, %117, %cst_56 {dimension_numbers = #tpu.dot_dimension_numbers<[2], [1], [1], [2], [0, 0, 0, 1, 1, 2], [0], [0]>} : vector<2x8x8xbf16>, vector<2x8x8xbf16>, vector<2x8x8xf32> -> vector<2x8x8xf32>
    "tpu.trace_stop"() : () -> ()
    %171 = vector.shape_cast %170 : vector<2x8x8xf32> to vector<16x8xf32>
    %172 = arith.truncf %171 : vector<16x8xf32> to vector<16x8xbf16>
    %c1_57 = arith.constant 1 : index
    %c0_58 = arith.constant 0 : index
    %c0_59 = arith.constant 0 : index
    %173 = vector.load %arg10[%c1_57, %c0_58, %c0_59] : memref<4x8x32xbf16, #tpu.memory_space<vmem>>, vector<1x8x32xbf16>
    %174 = vector.shape_cast %173 : vector<1x8x32xbf16> to vector<8x32xbf16>
    %cst_60 = arith.constant dense<0.000000e+00> : vector<16x32xf32>
    %175 = tpu.matmul %172, %174, %cst_60 {dimension_numbers = #tpu.dot_dimension_numbers<[1], [0], [0], [1], [0, 0, 1, 1], [], []>} : vector<16x8xbf16>, vector<8x32xbf16>, vector<16x32xf32> -> vector<16x32xf32>
    %176 = arith.addf %111, %175 : vector<16x32xf32>
    %177 = vector.extract_strided_slice %12 {offsets = [0, 16], sizes = [16, 8], strides = [1, 1]} : vector<16x32xbf16> to vector<16x8xbf16>
    %178 = vector.shape_cast %177 : vector<16x8xbf16> to vector<2x8x8xbf16>
    %179 = vector.extract_strided_slice %19 {offsets = [0, 16], sizes = [16, 8], strides = [1, 1]} : vector<16x32xbf16> to vector<16x8xbf16>
    %180 = vector.shape_cast %179 : vector<16x8xbf16> to vector<2x8x8xbf16>
    %181 = vector.extract_strided_slice %26 {offsets = [0, 16], sizes = [16, 8], strides = [1, 1]} : vector<16x32xbf16> to vector<16x8xbf16>
    %182 = vector.shape_cast %181 : vector<16x8xbf16> to vector<2x8x8xbf16>
    "tpu.trace_start"() <{level = 10 : i32, message = "bqd,bkd->bqk"}> : () -> ()
    %cst_61 = arith.constant dense<0.000000e+00> : vector<2x8x8xf32>
    %183 = tpu.matmul %178, %180, %cst_61 {dimension_numbers = #tpu.dot_dimension_numbers<[2], [2], [1], [1], [0, 0, 0, 1, 1, 1], [0], [0]>} : vector<2x8x8xbf16>, vector<2x8x8xbf16>, vector<2x8x8xf32> -> vector<2x8x8xf32>
    "tpu.trace_stop"() : () -> ()
    %cst_62 = arith.constant 0.353553385 : f32
    %184 = vector.broadcast %cst_62 : f32 to vector<2x8x8xf32>
    %185 = arith.mulf %183, %184 : vector<2x8x8xf32>
    %cst_63 = arith.constant -1.000000e+32 : f32
    %186 = vector.shape_cast %32 : vector<1x8x8xi1> to vector<1x8x8xi1>
    %187 = vector.broadcast %186 : vector<1x8x8xi1> to vector<2x8x8xi1>
    %188 = vector.broadcast %cst_63 : f32 to vector<2x8x8xf32>
    %189 = arith.select %187, %185, %188 : vector<2x8x8xi1>, vector<2x8x8xf32>
    %cst_64 = arith.constant dense<0xFF800000> : vector<2x8xf32>
    %190 = vector.multi_reduction <maximumf>, %189, %cst_64 [2] : vector<2x8x8xf32> to vector<2x8xf32>
    %191 = vector.shape_cast %190 : vector<2x8xf32> to vector<2x8x1xf32>
    %192 = vector.broadcast %191 : vector<2x8x1xf32> to vector<2x8x8xf32>
    %193 = arith.subf %189, %192 : vector<2x8x8xf32>
    %194 = math.exp %193 : vector<2x8x8xf32>
    %cst_65 = arith.constant dense<0.000000e+00> : vector<2x8xf32>
    %195 = vector.multi_reduction <add>, %194, %cst_65 [2] : vector<2x8x8xf32> to vector<2x8xf32>
    %196 = vector.shape_cast %195 : vector<2x8xf32> to vector<2x8x1xf32>
    %197 = tpu.reciprocal %196 {approx = true} : vector<2x8x1xf32> -> vector<2x8x1xf32>
    %198 = vector.broadcast %197 : vector<2x8x1xf32> to vector<2x8x8xf32>
    %199 = arith.mulf %194, %198 : vector<2x8x8xf32>
    %200 = vector.broadcast %34 : vector<1x8x8xf32> to vector<2x8x8xf32>
    %201 = arith.mulf %199, %200 : vector<2x8x8xf32>
    %202 = vector.shape_cast %201 : vector<2x8x8xf32> to vector<16x8xf32>
    %203 = arith.truncf %202 : vector<16x8xf32> to vector<16x8xbf16>
    %cst_66 = arith.constant dense<0.000000e+00> : vector<16x8xf32>
    %204 = tpu.matmul %203, %42, %cst_66 {dimension_numbers = #tpu.dot_dimension_numbers<[1], [0], [0], [1], [0, 0, 1, 1], [], []>} : vector<16x8xbf16>, vector<8x8xbf16>, vector<16x8xf32> -> vector<16x8xf32>
    %205 = vector.shape_cast %204 : vector<16x8xf32> to vector<2x8x8xf32>
    %206 = vector.broadcast %38 : vector<1x8x8xf32> to vector<2x8x8xf32>
    %207 = arith.mulf %205, %206 : vector<2x8x8xf32>
    %cst_67 = arith.constant 0.000000e+00 : f32
    %208 = vector.broadcast %cst_67 : f32 to vector<2x8x8xf32>
    %209 = arith.maximumf %207, %208 : vector<2x8x8xf32>
    %210 = math.sqrt %209 : vector<2x8x8xf32>
    %c0_68 = arith.constant 0 : index
    %c2 = arith.constant 2 : index
    %211 = memref.load %arg12[%c0_68, %c2] : memref<1x4xf32, #tpu.memory_space<smem>>
    %212 = vector.broadcast %211 : f32 to vector<2x8x8xf32>
    %213 = arith.mulf %210, %212 : vector<2x8x8xf32>
    %214 = math.exp %213 : vector<2x8x8xf32>
    %cst_69 = arith.constant 9.99999974E-6 : f32
    %cst_70 = arith.constant 1.000000e+05 : f32
    %215 = vector.broadcast %cst_69 : f32 to vector<2x8x8xf32>
    %216 = arith.maximumf %215, %214 : vector<2x8x8xf32>
    %217 = vector.broadcast %cst_70 : f32 to vector<2x8x8xf32>
    %218 = arith.minimumf %217, %216 : vector<2x8x8xf32>
    %219 = arith.mulf %185, %218 : vector<2x8x8xf32>
    %cst_71 = arith.constant dense<0xFF800000> : vector<2x8xf32>
    %220 = vector.multi_reduction <maximumf>, %219, %cst_71 [2] : vector<2x8x8xf32> to vector<2x8xf32>
    %221 = vector.shape_cast %220 : vector<2x8xf32> to vector<2x8x1xf32>
    %222 = vector.broadcast %221 : vector<2x8x1xf32> to vector<2x8x8xf32>
    %223 = arith.subf %219, %222 : vector<2x8x8xf32>
    %224 = math.exp %223 : vector<2x8x8xf32>
    %cst_72 = arith.constant dense<0.000000e+00> : vector<2x8xf32>
    %225 = vector.multi_reduction <add>, %224, %cst_72 [2] : vector<2x8x8xf32> to vector<2x8xf32>
    %226 = vector.shape_cast %225 : vector<2x8xf32> to vector<2x8x1xf32>
    %227 = tpu.reciprocal %226 {approx = true} : vector<2x8x1xf32> -> vector<2x8x1xf32>
    %228 = vector.broadcast %227 : vector<2x8x1xf32> to vector<2x8x8xf32>
    %229 = arith.mulf %224, %228 : vector<2x8x8xf32>
    %cst_73 = arith.constant 0.000000e+00 : f32
    %230 = vector.shape_cast %45 : vector<1x8x8xi1> to vector<1x8x8xi1>
    %231 = vector.broadcast %230 : vector<1x8x8xi1> to vector<2x8x8xi1>
    %232 = vector.broadcast %cst_73 : f32 to vector<2x8x8xf32>
    %233 = arith.select %231, %232, %229 : vector<2x8x8xi1>, vector<2x8x8xf32>
    %234 = arith.truncf %233 : vector<2x8x8xf32> to vector<2x8x8xbf16>
    "tpu.trace_start"() <{level = 10 : i32, message = "bqk,bkd->bqd"}> : () -> ()
    %cst_74 = arith.constant dense<0.000000e+00> : vector<2x8x8xf32>
    %235 = tpu.matmul %234, %182, %cst_74 {dimension_numbers = #tpu.dot_dimension_numbers<[2], [1], [1], [2], [0, 0, 0, 1, 1, 2], [0], [0]>} : vector<2x8x8xbf16>, vector<2x8x8xbf16>, vector<2x8x8xf32> -> vector<2x8x8xf32>
    "tpu.trace_stop"() : () -> ()
    %236 = vector.shape_cast %235 : vector<2x8x8xf32> to vector<16x8xf32>
    %237 = arith.truncf %236 : vector<16x8xf32> to vector<16x8xbf16>
    %c2_75 = arith.constant 2 : index
    %c0_76 = arith.constant 0 : index
    %c0_77 = arith.constant 0 : index
    %238 = vector.load %arg10[%c2_75, %c0_76, %c0_77] : memref<4x8x32xbf16, #tpu.memory_space<vmem>>, vector<1x8x32xbf16>
    %239 = vector.shape_cast %238 : vector<1x8x32xbf16> to vector<8x32xbf16>
    %cst_78 = arith.constant dense<0.000000e+00> : vector<16x32xf32>
    %240 = tpu.matmul %237, %239, %cst_78 {dimension_numbers = #tpu.dot_dimension_numbers<[1], [0], [0], [1], [0, 0, 1, 1], [], []>} : vector<16x8xbf16>, vector<8x32xbf16>, vector<16x32xf32> -> vector<16x32xf32>
    %241 = arith.addf %176, %240 : vector<16x32xf32>
    %242 = vector.extract_strided_slice %12 {offsets = [0, 24], sizes = [16, 8], strides = [1, 1]} : vector<16x32xbf16> to vector<16x8xbf16>
    %243 = vector.shape_cast %242 : vector<16x8xbf16> to vector<2x8x8xbf16>
    %244 = vector.extract_strided_slice %19 {offsets = [0, 24], sizes = [16, 8], strides = [1, 1]} : vector<16x32xbf16> to vector<16x8xbf16>
    %245 = vector.shape_cast %244 : vector<16x8xbf16> to vector<2x8x8xbf16>
    %246 = vector.extract_strided_slice %26 {offsets = [0, 24], sizes = [16, 8], strides = [1, 1]} : vector<16x32xbf16> to vector<16x8xbf16>
    %247 = vector.shape_cast %246 : vector<16x8xbf16> to vector<2x8x8xbf16>
    "tpu.trace_start"() <{level = 10 : i32, message = "bqd,bkd->bqk"}> : () -> ()
    %cst_79 = arith.constant dense<0.000000e+00> : vector<2x8x8xf32>
    %248 = tpu.matmul %243, %245, %cst_79 {dimension_numbers = #tpu.dot_dimension_numbers<[2], [2], [1], [1], [0, 0, 0, 1, 1, 1], [0], [0]>} : vector<2x8x8xbf16>, vector<2x8x8xbf16>, vector<2x8x8xf32> -> vector<2x8x8xf32>
    "tpu.trace_stop"() : () -> ()
    %cst_80 = arith.constant 0.353553385 : f32
    %249 = vector.broadcast %cst_80 : f32 to vector<2x8x8xf32>
    %250 = arith.mulf %248, %249 : vector<2x8x8xf32>
    %cst_81 = arith.constant -1.000000e+32 : f32
    %251 = vector.shape_cast %32 : vector<1x8x8xi1> to vector<1x8x8xi1>
    %252 = vector.broadcast %251 : vector<1x8x8xi1> to vector<2x8x8xi1>
    %253 = vector.broadcast %cst_81 : f32 to vector<2x8x8xf32>
    %254 = arith.select %252, %250, %253 : vector<2x8x8xi1>, vector<2x8x8xf32>
    %cst_82 = arith.constant dense<0xFF800000> : vector<2x8xf32>
    %255 = vector.multi_reduction <maximumf>, %254, %cst_82 [2] : vector<2x8x8xf32> to vector<2x8xf32>
    %256 = vector.shape_cast %255 : vector<2x8xf32> to vector<2x8x1xf32>
    %257 = vector.broadcast %256 : vector<2x8x1xf32> to vector<2x8x8xf32>
    %258 = arith.subf %254, %257 : vector<2x8x8xf32>
    %259 = math.exp %258 : vector<2x8x8xf32>
    %cst_83 = arith.constant dense<0.000000e+00> : vector<2x8xf32>
    %260 = vector.multi_reduction <add>, %259, %cst_83 [2] : vector<2x8x8xf32> to vector<2x8xf32>
    %261 = vector.shape_cast %260 : vector<2x8xf32> to vector<2x8x1xf32>
    %262 = tpu.reciprocal %261 {approx = true} : vector<2x8x1xf32> -> vector<2x8x1xf32>
    %263 = vector.broadcast %262 : vector<2x8x1xf32> to vector<2x8x8xf32>
    %264 = arith.mulf %259, %263 : vector<2x8x8xf32>
    %265 = vector.broadcast %34 : vector<1x8x8xf32> to vector<2x8x8xf32>
    %266 = arith.mulf %264, %265 : vector<2x8x8xf32>
    %267 = vector.shape_cast %266 : vector<2x8x8xf32> to vector<16x8xf32>
    %268 = arith.truncf %267 : vector<16x8xf32> to vector<16x8xbf16>
    %cst_84 = arith.constant dense<0.000000e+00> : vector<16x8xf32>
    %269 = tpu.matmul %268, %42, %cst_84 {dimension_numbers = #tpu.dot_dimension_numbers<[1], [0], [0], [1], [0, 0, 1, 1], [], []>} : vector<16x8xbf16>, vector<8x8xbf16>, vector<16x8xf32> -> vector<16x8xf32>
    %270 = vector.shape_cast %269 : vector<16x8xf32> to vector<2x8x8xf32>
    %271 = vector.broadcast %38 : vector<1x8x8xf32> to vector<2x8x8xf32>
    %272 = arith.mulf %270, %271 : vector<2x8x8xf32>
    %cst_85 = arith.constant 0.000000e+00 : f32
    %273 = vector.broadcast %cst_85 : f32 to vector<2x8x8xf32>
    %274 = arith.maximumf %272, %273 : vector<2x8x8xf32>
    %275 = math.sqrt %274 : vector<2x8x8xf32>
    %c0_86 = arith.constant 0 : index
    %c3 = arith.constant 3 : index
    %276 = memref.load %arg12[%c0_86, %c3] : memref<1x4xf32, #tpu.memory_space<smem>>
    %277 = vector.broadcast %276 : f32 to vector<2x8x8xf32>
    %278 = arith.mulf %275, %277 : vector<2x8x8xf32>
    %279 = math.exp %278 : vector<2x8x8xf32>
    %cst_87 = arith.constant 9.99999974E-6 : f32
    %cst_88 = arith.constant 1.000000e+05 : f32
    %280 = vector.broadcast %cst_87 : f32 to vector<2x8x8xf32>
    %281 = arith.maximumf %280, %279 : vector<2x8x8xf32>
    %282 = vector.broadcast %cst_88 : f32 to vector<2x8x8xf32>
    %283 = arith.minimumf %282, %281 : vector<2x8x8xf32>
    %284 = arith.mulf %250, %283 : vector<2x8x8xf32>
    %cst_89 = arith.constant dense<0xFF800000> : vector<2x8xf32>
    %285 = vector.multi_reduction <maximumf>, %284, %cst_89 [2] : vector<2x8x8xf32> to vector<2x8xf32>
    %286 = vector.shape_cast %285 : vector<2x8xf32> to vector<2x8x1xf32>
    %287 = vector.broadcast %286 : vector<2x8x1xf32> to vector<2x8x8xf32>
    %288 = arith.subf %284, %287 : vector<2x8x8xf32>
    %289 = math.exp %288 : vector<2x8x8xf32>
    %cst_90 = arith.constant dense<0.000000e+00> : vector<2x8xf32>
    %290 = vector.multi_reduction <add>, %289, %cst_90 [2] : vector<2x8x8xf32> to vector<2x8xf32>
    %291 = vector.shape_cast %290 : vector<2x8xf32> to vector<2x8x1xf32>
    %292 = tpu.reciprocal %291 {approx = true} : vector<2x8x1xf32> -> vector<2x8x1xf32>
    %293 = vector.broadcast %292 : vector<2x8x1xf32> to vector<2x8x8xf32>
    %294 = arith.mulf %289, %293 : vector<2x8x8xf32>
    %cst_91 = arith.constant 0.000000e+00 : f32
    %295 = vector.shape_cast %45 : vector<1x8x8xi1> to vector<1x8x8xi1>
    %296 = vector.broadcast %295 : vector<1x8x8xi1> to vector<2x8x8xi1>
    %297 = vector.broadcast %cst_91 : f32 to vector<2x8x8xf32>
    %298 = arith.select %296, %297, %294 : vector<2x8x8xi1>, vector<2x8x8xf32>
    %299 = arith.truncf %298 : vector<2x8x8xf32> to vector<2x8x8xbf16>
    "tpu.trace_start"() <{level = 10 : i32, message = "bqk,bkd->bqd"}> : () -> ()
    %cst_92 = arith.constant dense<0.000000e+00> : vector<2x8x8xf32>
    %300 = tpu.matmul %299, %247, %cst_92 {dimension_numbers = #tpu.dot_dimension_numbers<[2], [1], [1], [2], [0, 0, 0, 1, 1, 2], [0], [0]>} : vector<2x8x8xbf16>, vector<2x8x8xbf16>, vector<2x8x8xf32> -> vector<2x8x8xf32>
    "tpu.trace_stop"() : () -> ()
    %301 = vector.shape_cast %300 : vector<2x8x8xf32> to vector<16x8xf32>
    %302 = arith.truncf %301 : vector<16x8xf32> to vector<16x8xbf16>
    %c3_93 = arith.constant 3 : index
    %c0_94 = arith.constant 0 : index
    %c0_95 = arith.constant 0 : index
    %303 = vector.load %arg10[%c3_93, %c0_94, %c0_95] : memref<4x8x32xbf16, #tpu.memory_space<vmem>>, vector<1x8x32xbf16>
    %304 = vector.shape_cast %303 : vector<1x8x32xbf16> to vector<8x32xbf16>
    %cst_96 = arith.constant dense<0.000000e+00> : vector<16x32xf32>
    %305 = tpu.matmul %302, %304, %cst_96 {dimension_numbers = #tpu.dot_dimension_numbers<[1], [0], [0], [1], [0, 0, 1, 1], [], []>} : vector<16x8xbf16>, vector<8x32xbf16>, vector<16x32xf32> -> vector<16x32xf32>
    %306 = arith.addf %241, %305 : vector<16x32xf32>
    %c0_97 = arith.constant 0 : index
    %c0_98 = arith.constant 0 : index
    %307 = vector.load %arg11[%c0_97, %c0_98] : memref<1x32xf32, #tpu.memory_space<vmem>>, vector<1x32xf32>
    %308 = vector.broadcast %307 : vector<1x32xf32> to vector<16x32xf32>
    %309 = arith.addf %306, %308 : vector<16x32xf32>
    %310 = arith.addf %1, %309 : vector<16x32xf32>
    %cst_99 = arith.constant dense<0.000000e+00> : vector<16xf32>
    %311 = vector.multi_reduction <add>, %310, %cst_99 [1] : vector<16x32xf32> to vector<16xf32>
    %312 = vector.shape_cast %311 : vector<16xf32> to vector<16x1xf32>
    %cst_100 = arith.constant 3.200000e+01 : f32
    %313 = vector.broadcast %cst_100 : f32 to vector<16x1xf32>
    %314 = arith.divf %312, %313 : vector<16x1xf32>
    %315 = vector.broadcast %314 : vector<16x1xf32> to vector<16x32xf32>
    %316 = arith.subf %310, %315 : vector<16x32xf32>
    %317 = arith.mulf %316, %316 : vector<16x32xf32>
    %cst_101 = arith.constant dense<0.000000e+00> : vector<16xf32>
    %318 = vector.multi_reduction <add>, %317, %cst_101 [1] : vector<16x32xf32> to vector<16xf32>
    %319 = vector.shape_cast %318 : vector<16xf32> to vector<16x1xf32>
    %cst_102 = arith.constant 3.200000e+01 : f32
    %320 = vector.broadcast %cst_102 : f32 to vector<16x1xf32>
    %321 = arith.divf %319, %320 : vector<16x1xf32>
    %322 = vector.broadcast %314 : vector<16x1xf32> to vector<16x32xf32>
    %323 = arith.subf %310, %322 : vector<16x32xf32>
    %cst_103 = arith.constant 9.99999974E-6 : f32
    %324 = vector.broadcast %cst_103 : f32 to vector<16x1xf32>
    %325 = arith.addf %321, %324 : vector<16x1xf32>
    %326 = math.rsqrt %325 : vector<16x1xf32>
    %327 = vector.broadcast %326 : vector<16x1xf32> to vector<16x32xf32>
    %328 = arith.mulf %323, %327 : vector<16x32xf32>
    %c0_104 = arith.constant 0 : index
    %c0_105 = arith.constant 0 : index
    %329 = vector.load %arg13[%c0_104, %c0_105] : memref<1x32xf32, #tpu.memory_space<vmem>>, vector<1x32xf32>
    %330 = vector.broadcast %329 : vector<1x32xf32> to vector<16x32xf32>
    %331 = arith.mulf %328, %330 : vector<16x32xf32>
    %c0_106 = arith.constant 0 : index
    %c0_107 = arith.constant 0 : index
    %332 = vector.load %arg14[%c0_106, %c0_107] : memref<1x32xf32, #tpu.memory_space<vmem>>, vector<1x32xf32>
    %333 = vector.broadcast %332 : vector<1x32xf32> to vector<16x32xf32>
    %334 = arith.addf %331, %333 : vector<16x32xf32>
    %335 = arith.truncf %334 : vector<16x32xf32> to vector<16x32xbf16>
    %c0_108 = arith.constant 0 : index
    %c0_109 = arith.constant 0 : index
    %336 = vector.load %arg15[%c0_108, %c0_109] : memref<32x64xbf16, #tpu.memory_space<vmem>>, vector<32x64xbf16>
    %cst_110 = arith.constant dense<0.000000e+00> : vector<16x64xf32>
    %337 = tpu.matmul %335, %336, %cst_110 {dimension_numbers = #tpu.dot_dimension_numbers<[1], [0], [0], [1], [0, 0, 1, 1], [], []>} : vector<16x32xbf16>, vector<32x64xbf16>, vector<16x64xf32> -> vector<16x64xf32>
    %c0_111 = arith.constant 0 : index
    %c0_112 = arith.constant 0 : index
    %338 = vector.load %arg16[%c0_111, %c0_112] : memref<1x64xf32, #tpu.memory_space<vmem>>, vector<1x64xf32>
    %339 = vector.broadcast %338 : vector<1x64xf32> to vector<16x64xf32>
    %340 = arith.addf %337, %339 : vector<16x64xf32>
    %cst_113 = arith.constant 0.000000e+00 : f32
    %341 = vector.broadcast %cst_113 : f32 to vector<16x64xf32>
    %342 = arith.maximumf %340, %341 : vector<16x64xf32>
    %343 = arith.truncf %342 : vector<16x64xf32> to vector<16x64xbf16>
    %c0_114 = arith.constant 0 : index
    %c0_115 = arith.constant 0 : index
    %344 = vector.load %arg17[%c0_114, %c0_115] : memref<64x32xbf16, #tpu.memory_space<vmem>>, vector<64x32xbf16>
    %cst_116 = arith.constant dense<0.000000e+00> : vector<16x32xf32>
    %345 = tpu.matmul %343, %344, %cst_116 {dimension_numbers = #tpu.dot_dimension_numbers<[1], [0], [0], [1], [0, 0, 1, 1], [], []>} : vector<16x64xbf16>, vector<64x32xbf16>, vector<16x32xf32> -> vector<16x32xf32>
    %c0_117 = arith.constant 0 : index
    %c0_118 = arith.constant 0 : index
    %346 = vector.load %arg18[%c0_117, %c0_118] : memref<1x32xf32, #tpu.memory_space<vmem>>, vector<1x32xf32>
    %347 = vector.broadcast %346 : vector<1x32xf32> to vector<16x32xf32>
    %348 = arith.addf %345, %347 : vector<16x32xf32>
    %349 = arith.addf %334, %348 : vector<16x32xf32>
    %cst_119 = arith.constant dense<0.000000e+00> : vector<16xf32>
    %350 = vector.multi_reduction <add>, %349, %cst_119 [1] : vector<16x32xf32> to vector<16xf32>
    %351 = vector.shape_cast %350 : vector<16xf32> to vector<16x1xf32>
    %cst_120 = arith.constant 3.200000e+01 : f32
    %352 = vector.broadcast %cst_120 : f32 to vector<16x1xf32>
    %353 = arith.divf %351, %352 : vector<16x1xf32>
    %354 = vector.broadcast %353 : vector<16x1xf32> to vector<16x32xf32>
    %355 = arith.subf %349, %354 : vector<16x32xf32>
    %356 = arith.mulf %355, %355 : vector<16x32xf32>
    %cst_121 = arith.constant dense<0.000000e+00> : vector<16xf32>
    %357 = vector.multi_reduction <add>, %356, %cst_121 [1] : vector<16x32xf32> to vector<16xf32>
    %358 = vector.shape_cast %357 : vector<16xf32> to vector<16x1xf32>
    %cst_122 = arith.constant 3.200000e+01 : f32
    %359 = vector.broadcast %cst_122 : f32 to vector<16x1xf32>
    %360 = arith.divf %358, %359 : vector<16x1xf32>
    %361 = vector.broadcast %353 : vector<16x1xf32> to vector<16x32xf32>
    %362 = arith.subf %349, %361 : vector<16x32xf32>
    %cst_123 = arith.constant 9.99999974E-6 : f32
    %363 = vector.broadcast %cst_123 : f32 to vector<16x1xf32>
    %364 = arith.addf %360, %363 : vector<16x1xf32>
    %365 = math.rsqrt %364 : vector<16x1xf32>
    %366 = vector.broadcast %365 : vector<16x1xf32> to vector<16x32xf32>
    %367 = arith.mulf %362, %366 : vector<16x32xf32>
    %c0_124 = arith.constant 0 : index
    %c0_125 = arith.constant 0 : index
    %368 = vector.load %arg19[%c0_124, %c0_125] : memref<1x32xf32, #tpu.memory_space<vmem>>, vector<1x32xf32>
    %369 = vector.broadcast %368 : vector<1x32xf32> to vector<16x32xf32>
    %370 = arith.mulf %367, %369 : vector<16x32xf32>
    %c0_126 = arith.constant 0 : index
    %c0_127 = arith.constant 0 : index
    %371 = vector.load %arg20[%c0_126, %c0_127] : memref<1x32xf32, #tpu.memory_space<vmem>>, vector<1x32xf32>
    %372 = vector.broadcast %371 : vector<1x32xf32> to vector<16x32xf32>
    %373 = arith.addf %370, %372 : vector<16x32xf32>
    %374 = vector.shape_cast %373 : vector<16x32xf32> to vector<2x8x32xf32>
    %c0_128 = arith.constant 0 : index
    %c0_129 = arith.constant 0 : index
    %c0_130 = arith.constant 0 : index
    %375 = vector.load %arg21[%c0_128, %c0_129, %c0_130] : memref<2x8x32xf32, #tpu.memory_space<vmem>>, vector<2x8x32xf32>
    tpu.vector_store %arg21[%c0_128, %c0_129, %c0_130], %374 {strides = array<i32>} : memref<2x8x32xf32, #tpu.memory_space<vmem>>, vector<2x8x32xf32>,
    return
  }
  func.func @transform_0(%arg0: i32) -> (i32, i32, i32) {
    %c0_i32 = arith.constant 0 : i32
    %c0_i32_0 = arith.constant 0 : i32
    %c0_i32_1 = arith.constant 0 : i32
    return %arg0, %c0_i32, %c0_i32_0 : i32, i32, i32
  }
  func.func @transform_1(%arg0: i32) -> (i32, i32, i32) {
    %c0_i32 = arith.constant 0 : i32
    %c0_i32_0 = arith.constant 0 : i32
    %c0_i32_1 = arith.constant 0 : i32
    return %arg0, %c0_i32, %c0_i32_0 : i32, i32, i32
  }
  func.func @transform_2(%arg0: i32) -> (i32, i32, i32) {
    %c0_i32 = arith.constant 0 : i32
    %c0_i32_0 = arith.constant 0 : i32
    %c0_i32_1 = arith.constant 0 : i32
    return %arg0, %c0_i32, %c0_i32_0 : i32, i32, i32
  }
  func.func @transform_3(%arg0: i32) -> (i32, i32) {
    %c0_i32 = arith.constant 0 : i32
    %c0_i32_0 = arith.constant 0 : i32
    %c0_i32_1 = arith.constant 0 : i32
    return %c0_i32, %c0_i32_0 : i32, i32
  }
  func.func @transform_4(%arg0: i32) -> (i32, i32) {
    %c0_i32 = arith.constant 0 : i32
    %c0_i32_0 = arith.constant 0 : i32
    %c0_i32_1 = arith.constant 0 : i32
    return %c0_i32, %c0_i32_0 : i32, i32
  }
  func.func @transform_5(%arg0: i32) -> (i32, i32) {
    %c0_i32 = arith.constant 0 : i32
    %c0_i32_0 = arith.constant 0 : i32
    %c0_i32_1 = arith.constant 0 : i32
    return %c0_i32, %c0_i32_0 : i32, i32
  }
  func.func @transform_6(%arg0: i32) -> (i32, i32) {
    %c0_i32 = arith.constant 0 : i32
    %c0_i32_0 = arith.constant 0 : i32
    %c0_i32_1 = arith.constant 0 : i32
    return %c0_i32, %c0_i32_0 : i32, i32
  }
  func.func @transform_7(%arg0: i32) -> (i32, i32) {
    %c0_i32 = arith.constant 0 : i32
    %c0_i32_0 = arith.constant 0 : i32
    %c0_i32_1 = arith.constant 0 : i32
    return %c0_i32, %c0_i32_0 : i32, i32
  }
  func.func @transform_8(%arg0: i32) -> (i32, i32) {
    %c0_i32 = arith.constant 0 : i32
    %c0_i32_0 = arith.constant 0 : i32
    %c0_i32_1 = arith.constant 0 : i32
    return %c0_i32, %c0_i32_0 : i32, i32
  }
  func.func @transform_9(%arg0: i32) -> (i32, i32, i32) {
    %c0_i32 = arith.constant 0 : i32
    %c0_i32_0 = arith.constant 0 : i32
    %c0_i32_1 = arith.constant 0 : i32
    %c0_i32_2 = arith.constant 0 : i32
    return %c0_i32, %c0_i32_0, %c0_i32_1 : i32, i32, i32
  }
  func.func @transform_10(%arg0: i32) -> (i32, i32) {
    %c0_i32 = arith.constant 0 : i32
    %c0_i32_0 = arith.constant 0 : i32
    %c0_i32_1 = arith.constant 0 : i32
    return %c0_i32, %c0_i32_0 : i32, i32
  }
  func.func @transform_11(%arg0: i32) -> (i32, i32) {
    %c0_i32 = arith.constant 0 : i32
    %c0_i32_0 = arith.constant 0 : i32
    %c0_i32_1 = arith.constant 0 : i32
    return %c0_i32, %c0_i32_0 : i32, i32
  }
  func.func @transform_12(%arg0: i32) -> (i32, i32) {
    %c0_i32 = arith.constant 0 : i32
    %c0_i32_0 = arith.constant 0 : i32
    %c0_i32_1 = arith.constant 0 : i32
    return %c0_i32, %c0_i32_0 : i32, i32
  }
  func.func @transform_13(%arg0: i32) -> (i32, i32) {
    %c0_i32 = arith.constant 0 : i32
    %c0_i32_0 = arith.constant 0 : i32
    %c0_i32_1 = arith.constant 0 : i32
    return %c0_i32, %c0_i32_0 : i32, i32
  }
  func.func @transform_14(%arg0: i32) -> (i32, i32) {
    %c0_i32 = arith.constant 0 : i32
    %c0_i32_0 = arith.constant 0 : i32
    %c0_i32_1 = arith.constant 0 : i32
    return %c0_i32, %c0_i32_0 : i32, i32
  }
  func.func @transform_15(%arg0: i32) -> (i32, i32) {
    %c0_i32 = arith.constant 0 : i32
    %c0_i32_0 = arith.constant 0 : i32
    %c0_i32_1 = arith.constant 0 : i32
    return %c0_i32, %c0_i32_0 : i32, i32
  }
  func.func @transform_16(%arg0: i32) -> (i32, i32) {
    %c0_i32 = arith.constant 0 : i32
    %c0_i32_0 = arith.constant 0 : i32
    %c0_i32_1 = arith.constant 0 : i32
    return %c0_i32, %c0_i32_0 : i32, i32
  }
  func.func @transform_17(%arg0: i32) -> (i32, i32) {
    %c0_i32 = arith.constant 0 : i32
    %c0_i32_0 = arith.constant 0 : i32
    %c0_i32_1 = arith.constant 0 : i32
    return %c0_i32, %c0_i32_0 : i32, i32
  }
  func.func @transform_18(%arg0: i32) -> (i32, i32) {
    %c0_i32 = arith.constant 0 : i32
    %c0_i32_0 = arith.constant 0 : i32
    %c0_i32_1 = arith.constant 0 : i32
    return %c0_i32, %c0_i32_0 : i32, i32
  }
  func.func @transform_19(%arg0: i32) -> (i32, i32) {
    %c0_i32 = arith.constant 0 : i32
    %c0_i32_0 = arith.constant 0 : i32
    %c0_i32_1 = arith.constant 0 : i32
    return %c0_i32, %c0_i32_0 : i32, i32
  }
  func.func @transform_20(%arg0: i32) -> (i32, i32, i32) {
    %c0_i32 = arith.constant 0 : i32
    %c0_i32_0 = arith.constant 0 : i32
    %c0_i32_1 = arith.constant 0 : i32
    return %arg0, %c0_i32, %c0_i32_0 : i32, i32, i32
  }
}

</mosaic_0001>

<llo_original>
// kernel: tpu_custom_call.1
$region0: #{tpu_custom_call.1}
  #allocation0 [shape = 'u32[]', space=smem, size = 0x4, offset = 0x4, fixed_abs, tag = 'smem constant byte address 0x4 - core index']
  #allocation1 [shape = 'u32[144,128]{1,0:T(1,128)}', space=vmem, size = 0x12000, scoped, tag = 'internal scratch']
  %s0 = inlined_call_operand.vmem [shape: f32[2,8,32], index: 0, kind: input, shape index: {}]
  %s1 = inlined_call_operand.vmem [shape: f32[2,8,32], index: 1, kind: input, shape index: {}]
  %s2 = inlined_call_operand.vmem [shape: f32[2,8,32], index: 2, kind: input, shape index: {}]
  %s3 = inlined_call_operand.hbm [shape: bf16[32,32], index: 3, kind: input, shape index: {}]
  %s4 = inlined_call_operand.vmem [shape: f32[1,32], index: 4, kind: input, shape index: {}]
  %s5 = inlined_call_operand.hbm [shape: bf16[32,32], index: 5, kind: input, shape index: {}]
  %s6 = inlined_call_operand.hbm [shape: f32[1,32], index: 6, kind: input, shape index: {}]
  %s7 = inlined_call_operand.hbm [shape: bf16[32,32], index: 7, kind: input, shape index: {}]
  %s8 = inlined_call_operand.hbm [shape: f32[1,32], index: 8, kind: input, shape index: {}]
  %s9 = inlined_call_operand.vmem [shape: bf16[4,8,32], index: 9, kind: input, shape index: {}]
  %s10 = inlined_call_operand.hbm [shape: f32[1,32], index: 10, kind: input, shape index: {}]
  %s11 = inlined_call_operand.hbm [shape: f32[1,4], index: 11, kind: input, shape index: {}]
  %s12 = inlined_call_operand.hbm [shape: f32[1,32], index: 12, kind: input, shape index: {}]
  %s13 = inlined_call_operand.hbm [shape: f32[1,32], index: 13, kind: input, shape index: {}]
  %s14 = inlined_call_operand.vmem [shape: bf16[32,64], index: 14, kind: input, shape index: {}]
  %s15 = inlined_call_operand.vmem [shape: f32[1,64], index: 15, kind: input, shape index: {}]
  %s16 = inlined_call_operand.vmem [shape: bf16[64,32], index: 16, kind: input, shape index: {}]
  %s17 = inlined_call_operand.vmem [shape: f32[1,32], index: 17, kind: input, shape index: {}]
  %s18 = inlined_call_operand.vmem [shape: f32[1,32], index: 18, kind: input, shape index: {}]
  %s19 = inlined_call_operand.vmem [shape: f32[1,32], index: 19, kind: input, shape index: {}]
  %s20 = inlined_call_operand.hbm [shape: f32[2,8,32], index: 20, kind: output, shape index: {}]
  %s21 = sld [smem:[#allocation0]]
  $region126: #{tpu_custom_call.1} parent=0
    _
  %s23 = ssub.s32 1, %s21
  %s24 = scalar_select 0, %s23, %s21
  $region1: #{tpu_custom_call.1} parent=0
    #allocation2 [shape = 'u8[8192]{0}', space=vmem, size = 0x2000, scoped, tag = 'input window, operand 3, single buffered']
    #allocation3 [shape = 's32[1]{0}', space=sflag, size = 0x4, scoped, tag = 'scoped memory for tpu_custom_call.1']
    #allocation4 [shape = 's32[1]{0}', space=sflag, size = 0x4, scoped, tag = 'scoped memory for tpu_custom_call.1']
    #allocation5 [shape = 's32[1]{0}', space=sflag, size = 0x4, scoped, tag = 'scoped memory for tpu_custom_call.1']
    #allocation6 [shape = 'u8[8192]{0}', space=vmem, size = 0x2000, scoped, tag = 'input window, operand 5, single buffered']
    #allocation7 [shape = 's32[1]{0}', space=sflag, size = 0x4, scoped, tag = 'scoped memory for tpu_custom_call.1']
    #allocation8 [shape = 'u8[512]{0}', space=vmem, size = 0x400, scoped, tag = 'input window, operand 6, single buffered']
    #allocation9 [shape = 'u8[8192]{0}', space=vmem, size = 0x2000, scoped, tag = 'input window, operand 7, single buffered']
    #allocation10 [shape = 's32[1]{0}', space=sflag, size = 0x4, scoped, tag = 'scoped memory for tpu_custom_call.1']
    #allocation11 [shape = 'u8[512]{0}', space=vmem, size = 0x400, scoped, tag = 'input window, operand 8, single buffered']
    #allocation12 [shape = 'u8[512]{0}', space=vmem, size = 0x400, scoped, tag = 'input window, operand 10, single buffered']
    #allocation13 [shape = 's32[1]{0}', space=sflag, size = 0x4, scoped, tag = 'scoped memory for tpu_custom_call.1']
    #allocation14 [shape = 'u8[512]{0}', space=smem, size = 0x200, scoped, tag = 'input window, operand 11, single buffered']
    #allocation15 [shape = 'u8[512]{0}', space=vmem, size = 0x400, scoped, tag = 'input window, operand 12, single buffered']
    #allocation16 [shape = 'u8[512]{0}', space=vmem, size = 0x400, scoped, tag = 'input window, operand 13, single buffered']
    #allocation17 [shape = 's32[1]{0}', space=sflag, size = 0x4, scoped, tag = 'scoped memory for tpu_custom_call.1']
    #allocation18 [shape = 'u8[8192]{0}', space=vmem, size = 0x2000, scoped, tag = 'output window, operand 0, single buffered']
    %25 = vsyncpa [#allocation3], 0
    %26 = vsyncpa [#allocation7], 0
    %27 = vsyncpa [#allocation10], 0
    %28 = vsyncpa [#allocation13], 0
    %29 = vsyncpa [#allocation5], 0
    %30 = vsyncpa [#allocation17], 0
    %31 = vsyncpa [#allocation4], 0
    // Predicated region
    $region2: #{tpu_custom_call.1} parent=1 // pred_check
      _
    $region3: #{tpu_custom_call.1} parent=1 // pred_check_branch
      %33 = sbr.rel (0) target = $region5
    $region4: #{tpu_custom_call.1} parent=1 // pred_region
      _
    $region5: #{tpu_custom_call.1} parent=1 // pred_fallthru
      _
    // Predicated region
    $region6: #{tpu_custom_call.1} parent=1 // pred_check
      _
    $region7: #{tpu_custom_call.1} parent=1 // pred_check_branch
      %35 = sbr.rel (0) target = $region9
    $region8: #{tpu_custom_call.1} parent=1 // pred_region
      _
    $region9: #{tpu_custom_call.1} parent=1 // pred_fallthru
      _
    // Predicated region
    $region10: #{tpu_custom_call.1} parent=1 // pred_check
      _
    $region11: #{tpu_custom_call.1} parent=1 // pred_check_branch
      %37 = sbr.rel (0) target = $region13
    $region12: #{tpu_custom_call.1} parent=1 // pred_region
      _
    $region13: #{tpu_custom_call.1} parent=1 // pred_fallthru
      _
    // Predicated region
    $region14: #{tpu_custom_call.1} parent=1 // pred_check
      _
    $region15: #{tpu_custom_call.1} parent=1 // pred_check_branch
      %39 = sbr.rel (0) target = $region17
    $region16: #{tpu_custom_call.1} parent=1 // pred_region
      %s41 = ssub.s32 256, 256
      %42 = vsyncadd [#allocation3], %s41
      %s43 = sshll.u32 [#allocation2], 4
      %s44 = int_to_ptr.vmem [resolvable:$true] %s43
      %49 = dma.hbm_to_vmem [thread:$0]  %s3, 256, %s44, [#allocation3], 64, 64, 4
    $region17: #{tpu_custom_call.1} parent=1 // pred_fallthru
      _
    // Predicated region
    $region18: #{tpu_custom_call.1} parent=1 // pred_check
      _
    $region19: #{tpu_custom_call.1} parent=1 // pred_check_branch
      %51 = sbr.rel (0) target = $region21
    $region20: #{tpu_custom_call.1} parent=1 // pred_region
      _
    $region21: #{tpu_custom_call.1} parent=1 // pred_fallthru
      _
    // Predicated region
    $region22: #{tpu_custom_call.1} parent=1 // pred_check
      _
    $region23: #{tpu_custom_call.1} parent=1 // pred_check_branch
      %53 = sbr.rel (0) target = $region25
    $region24: #{tpu_custom_call.1} parent=1 // pred_region
      %s55 = ssub.s32 256, 256
      %56 = vsyncadd [#allocation7], %s55
      %s57 = sshll.u32 [#allocation6], 4
      %s58 = int_to_ptr.vmem [resolvable:$true] %s57
      %63 = dma.hbm_to_vmem [thread:$0]  %s5, 256, %s58, [#allocation7], 64, 64, 4
    $region25: #{tpu_custom_call.1} parent=1 // pred_fallthru
      _
    // Predicated region
    $region26: #{tpu_custom_call.1} parent=1 // pred_check
      _
    $region27: #{tpu_custom_call.1} parent=1 // pred_check_branch
      %65 = sbr.rel (0) target = $region29
    $region28: #{tpu_custom_call.1} parent=1 // pred_region
      %s67 = ssub.s32 16, 16
      %68 = vsyncadd [#allocation7], %s67
      %s70 = sshll.u32 [#allocation8], 4
      %s71 = int_to_ptr.vmem [resolvable:$true] %s70
      %73 = dma.hbm_to_vmem [thread:$0]  %s6, 16, %s71, [#allocation7]
    $region29: #{tpu_custom_call.1} parent=1 // pred_fallthru
      _
    // Predicated region
    $region30: #{tpu_custom_call.1} parent=1 // pred_check
      _
    $region31: #{tpu_custom_call.1} parent=1 // pred_check_branch
      %75 = sbr.rel (0) target = $region33
    $region32: #{tpu_custom_call.1} parent=1 // pred_region
      %s77 = ssub.s32 256, 256
      %78 = vsyncadd [#allocation10], %s77
      %s79 = sshll.u32 [#allocation9], 4
      %s80 = int_to_ptr.vmem [resolvable:$true] %s79
      %85 = dma.hbm_to_vmem [thread:$0]  %s7, 256, %s80, [#allocation10], 64, 64, 4
    $region33: #{tpu_custom_call.1} parent=1 // pred_fallthru
      _
    // Predicated region
    $region34: #{tpu_custom_call.1} parent=1 // pred_check
      _
    $region35: #{tpu_custom_call.1} parent=1 // pred_check_branch
      %87 = sbr.rel (0) target = $region37
    $region36: #{tpu_custom_call.1} parent=1 // pred_region
      %s89 = ssub.s32 16, 16
      %90 = vsyncadd [#allocation10], %s89
      %s92 = sshll.u32 [#allocation11], 4
      %s93 = int_to_ptr.vmem [resolvable:$true] %s92
      %95 = dma.hbm_to_vmem [thread:$0]  %s8, 16, %s93, [#allocation10]
    $region37: #{tpu_custom_call.1} parent=1 // pred_fallthru
      _
    // Predicated region
    $region38: #{tpu_custom_call.1} parent=1 // pred_check
      _
    $region39: #{tpu_custom_call.1} parent=1 // pred_check_branch
      %97 = sbr.rel (0) target = $region41
    $region40: #{tpu_custom_call.1} parent=1 // pred_region
      _
    $region41: #{tpu_custom_call.1} parent=1 // pred_fallthru
      _
    // Predicated region
    $region42: #{tpu_custom_call.1} parent=1 // pred_check
      _
    $region43: #{tpu_custom_call.1} parent=1 // pred_check_branch
      %99 = sbr.rel (0) target = $region45
    $region44: #{tpu_custom_call.1} parent=1 // pred_region
      %s101 = ssub.s32 16, 16
      %102 = vsyncadd [#allocation13], %s101
      %s104 = sshll.u32 [#allocation12], 4
      %s105 = int_to_ptr.vmem [resolvable:$true] %s104
      %107 = dma.hbm_to_vmem [thread:$0]  %s10, 16, %s105, [#allocation13]
    $region45: #{tpu_custom_call.1} parent=1 // pred_fallthru
      _
    // Predicated region
    $region46: #{tpu_custom_call.1} parent=1 // pred_check
      _
    $region47: #{tpu_custom_call.1} parent=1 // pred_check_branch
      %109 = sbr.rel (0) target = $region49
    $region48: #{tpu_custom_call.1} parent=1 // pred_region
      %s111 = ssub.s32 16, 16
      %112 = vsyncadd [#allocation5], %s111
      %115 = dma.hbm_to_smem %s11, 16, [#allocation14], [#allocation5]
    $region49: #{tpu_custom_call.1} parent=1 // pred_fallthru
      _
    // Predicated region
    $region50: #{tpu_custom_call.1} parent=1 // pred_check
      _
    $region51: #{tpu_custom_call.1} parent=1 // pred_check_branch
      %117 = sbr.rel (0) target = $region53
    $region52: #{tpu_custom_call.1} parent=1 // pred_region
      %s119 = ssub.s32 16, 16
      %120 = vsyncadd [#allocation13], %s119
      %s122 = sshll.u32 [#allocation15], 4
      %s123 = int_to_ptr.vmem [resolvable:$true] %s122
      %125 = dma.hbm_to_vmem [thread:$0]  %s12, 16, %s123, [#allocation13]
    $region53: #{tpu_custom_call.1} parent=1 // pred_fallthru
      _
    // Predicated region
    $region54: #{tpu_custom_call.1} parent=1 // pred_check
      _
    $region55: #{tpu_custom_call.1} parent=1 // pred_check_branch
      %127 = sbr.rel (0) target = $region57
    $region56: #{tpu_custom_call.1} parent=1 // pred_region
      %s129 = ssub.s32 16, 16
      %130 = vsyncadd [#allocation17], %s129
      %s132 = sshll.u32 [#allocation16], 4
      %s133 = int_to_ptr.vmem [resolvable:$true] %s132
      %135 = dma.hbm_to_vmem [thread:$0]  %s13, 16, %s133, [#allocation17]
    $region57: #{tpu_custom_call.1} parent=1 // pred_fallthru
      _
    // Predicated region
    $region58: #{tpu_custom_call.1} parent=1 // pred_check
      _
    $region59: #{tpu_custom_call.1} parent=1 // pred_check_branch
      %137 = sbr.rel (0) target = $region61
    $region60: #{tpu_custom_call.1} parent=1 // pred_region
      _
    $region61: #{tpu_custom_call.1} parent=1 // pred_fallthru
      _
    // Predicated region
    $region62: #{tpu_custom_call.1} parent=1 // pred_check
      _
    $region63: #{tpu_custom_call.1} parent=1 // pred_check_branch
      %139 = sbr.rel (0) target = $region65
    $region64: #{tpu_custom_call.1} parent=1 // pred_region
      _
    $region65: #{tpu_custom_call.1} parent=1 // pred_fallthru
      _
    // Predicated region
    $region66: #{tpu_custom_call.1} parent=1 // pred_check
      _
    $region67: #{tpu_custom_call.1} parent=1 // pred_check_branch
      %141 = sbr.rel (0) target = $region69
    $region68: #{tpu_custom_call.1} parent=1 // pred_region
      _
    $region69: #{tpu_custom_call.1} parent=1 // pred_fallthru
      _
    // Predicated region
    $region70: #{tpu_custom_call.1} parent=1 // pred_check
      _
    $region71: #{tpu_custom_call.1} parent=1 // pred_check_branch
      %143 = sbr.rel (0) target = $region73
    $region72: #{tpu_custom_call.1} parent=1 // pred_region
      _
    $region73: #{tpu_custom_call.1} parent=1 // pred_fallthru
      _
    // Predicated region
    $region74: #{tpu_custom_call.1} parent=1 // pred_check
      _
    $region75: #{tpu_custom_call.1} parent=1 // pred_check_branch
      %145 = sbr.rel (0) target = $region77
    $region76: #{tpu_custom_call.1} parent=1 // pred_region
      _
    $region77: #{tpu_custom_call.1} parent=1 // pred_fallthru
      _
    // Predicated region
    $region78: #{tpu_custom_call.1} parent=1 // pred_check
      _
    $region79: #{tpu_custom_call.1} parent=1 // pred_check_branch
      %147 = sbr.rel (0) target = $region81
    $region80: #{tpu_custom_call.1} parent=1 // pred_region
      _
    $region81: #{tpu_custom_call.1} parent=1 // pred_fallthru
      _
    // Predicated region
    $region82: #{tpu_custom_call.1} parent=1 // pred_check
      _
    $region83: #{tpu_custom_call.1} parent=1 // pred_check_branch
      %149 = sbr.rel (0) target = $region85
    $region84: #{tpu_custom_call.1} parent=1 // pred_region
      %150 = dma.done [#allocation3], 256
    $region85: #{tpu_custom_call.1} parent=1 // pred_fallthru
      _
    // Predicated region
    $region86: #{tpu_custom_call.1} parent=1 // pred_check
      _
    $region87: #{tpu_custom_call.1} parent=1 // pred_check_branch
      %152 = sbr.rel (0) target = $region89
    $region88: #{tpu_custom_call.1} parent=1 // pred_region
      %153 = dma.done [#allocation7], 256
    $region89: #{tpu_custom_call.1} parent=1 // pred_fallthru
      _
    // Predicated region
    $region90: #{tpu_custom_call.1} parent=1 // pred_check
      _
    $region91: #{tpu_custom_call.1} parent=1 // pred_check_branch
      %155 = sbr.rel (0) target = $region93
    $region92: #{tpu_custom_call.1} parent=1 // pred_region
      %156 = dma.done [#allocation7], 16
    $region93: #{tpu_custom_call.1} parent=1 // pred_fallthru
      _
    // Predicated region
    $region94: #{tpu_custom_call.1} parent=1 // pred_check
      _
    $region95: #{tpu_custom_call.1} parent=1 // pred_check_branch
      %158 = sbr.rel (0) target = $region97
    $region96: #{tpu_custom_call.1} parent=1 // pred_region
      %159 = dma.done [#allocation10], 256
    $region97: #{tpu_custom_call.1} parent=1 // pred_fallthru
      _
    // Predicated region
    $region98: #{tpu_custom_call.1} parent=1 // pred_check
      _
    $region99: #{tpu_custom_call.1} parent=1 // pred_check_branch
      %161 = sbr.rel (0) target = $region101
    $region100: #{tpu_custom_call.1} parent=1 // pred_region
      %162 = dma.done [#allocation10], 16
    $region101: #{tpu_custom_call.1} parent=1 // pred_fallthru
      _
    // Predicated region
    $region102: #{tpu_custom_call.1} parent=1 // pred_check
      _
    $region103: #{tpu_custom_call.1} parent=1 // pred_check_branch
      %164 = sbr.rel (0) target = $region105
    $region104: #{tpu_custom_call.1} parent=1 // pred_region
      %165 = dma.done [#allocation13], 16
    $region105: #{tpu_custom_call.1} parent=1 // pred_fallthru
      _
    // Predicated region
    $region106: #{tpu_custom_call.1} parent=1 // pred_check
      _
    $region107: #{tpu_custom_call.1} parent=1 // pred_check_branch
      %167 = sbr.rel (0) target = $region109
    $region108: #{tpu_custom_call.1} parent=1 // pred_region
      %168 = dma.done [#allocation5], 16
    $region109: #{tpu_custom_call.1} parent=1 // pred_fallthru
      _
    // Predicated region
    $region110: #{tpu_custom_call.1} parent=1 // pred_check
      _
    $region111: #{tpu_custom_call.1} parent=1 // pred_check_branch
      %170 = sbr.rel (0) target = $region113
    $region112: #{tpu_custom_call.1} parent=1 // pred_region
      %171 = dma.done [#allocation13], 16
    $region113: #{tpu_custom_call.1} parent=1 // pred_fallthru
      _
    // Predicated region
    $region114: #{tpu_custom_call.1} parent=1 // pred_check
      _
    $region115: #{tpu_custom_call.1} parent=1 // pred_check_branch
      %173 = sbr.rel (0) target = $region117
    $region116: #{tpu_custom_call.1} parent=1 // pred_region
      %174 = dma.done [#allocation17], 16
    $region117: #{tpu_custom_call.1} parent=1 // pred_fallthru
      _
    %175 = sfence
    %v177 = vld [vmem:[%s0] sm:$0xff]
    %v178 = vld [vmem:[%s0 + $0x8] sm:$0xff]
    %v179 = vld [vmem:[%s1] sm:$0xff]
    %v180 = vld [vmem:[%s1 + $0x8] sm:$0xff]
    %v181 = vld [vmem:[%s2] sm:$0xff]
    %v182 = vld [vmem:[%s2 + $0x8] sm:$0xff]
    %v183 = vpack.c.bf16 %v178, %v177
    %v184 = vld [vmem:[#allocation2] sm:$0xf]
    %v185 = vld [vmem:[#allocation2 + $0x4] sm:$0xf]
    %v186 = vld [vmem:[#allocation2 + $0x8] sm:$0xf]
    %v187 = vld [vmem:[#allocation2 + $0xc] sm:$0xf]
    %v188 = vld [vmem:[%s4] sm:$0x1]
    %v190 = vlaneseq
    %v191 = vshrl.u32 %v190, 7
    %v192 = vsub.s32 0, %v191
    %v193 = vrot.slane %v188, %v192
    %v199 = vunpack.c.l.b16 %v184
    %v200 = vunpack.c.l.b16 %v185
    %v201 = vunpack.c.l.b16 %v186
    %v202 = vunpack.c.l.b16 %v187
    %v203 = vpack.c.b16 %v200, %v199
    %v204 = vpack.c.b16 %v202, %v201
    %vm207 = vcmask 261120
    %v209 = vsel %vm207, %v183, 0
    %211 = vmatprep.subr.bf16.mxu0 0
    %212 = vmatpush1.bf16.msra.mxu0 %v203
    %213 = vmatprep.subr.bf16.mxu0 0
    %214 = vmatpush1.bf16.msra.mxu0 %v204
    %215 = vmatprep.subr.bf16.mxu0 0
    %216 = vmatpush1.bf16.msra.mxu0 0
    %217 = vmatprep.subr.bf16.mxu0 0
    %218 = vmatpush1.bf16.msra.mxu0 0
    %219 = vmatprep.subr.bf16.mxu0 0
    %220 = vmatpush1.bf16.msra.mxu0 0
    %221 = vmatprep.subr.bf16.mxu0 0
    %222 = vmatpush1.bf16.msra.mxu0 0
    %223 = vmatprep.subr.bf16.mxu0 0
    %224 = vmatpush1.bf16.msra.mxu0 0
    %225 = vmatprep.subr.bf16.mxu0 0
    %226 = vmatpush1.bf16.msra.mxu0 0
    %227 = vmatprep.subr.bf16.mxu0 0
    %228 = vmatpush1.bf16.msra.mxu0 0
    %229 = vmatprep.subr.bf16.mxu0 0
    %230 = vmatpush1.bf16.msra.mxu0 0
    %231 = vmatprep.subr.bf16.mxu0 0
    %232 = vmatpush1.bf16.msra.mxu0 0
    %233 = vmatprep.subr.bf16.mxu0 0
    %234 = vmatpush1.bf16.msra.mxu0 0
    %235 = vmatprep.subr.bf16.mxu0 0
    %236 = vmatpush1.bf16.msra.mxu0 0
    %237 = vmatprep.subr.bf16.mxu0 0
    %238 = vmatpush1.bf16.msra.mxu0 0
    %239 = vmatprep.subr.bf16.mxu0 0
    %240 = vmatpush1.bf16.msra.mxu0 0
    %241 = vmatprep.subr.bf16.mxu0 0
    %242 = vmatpush1.bf16.msra.mxu0 0
    %243 = vmatprep.mubr.bf16.mxu0 0
    %244 = vmatmul.mubr.bf16.gmra.mrb[0].mxu0 %v209
    %v245 = vpop.f32.mrb[0].mxu0
    %v246 = vadd.f32 %v193, %v245
    %v247 = vpop.f32.mrb[0].mxu0
    %v248 = vpop.f32.mrb[0].mxu0
    %v249 = vadd.f32 %v193, %v248
    %v250 = vpop.f32.mrb[0].mxu0
    %251 = vdwg.mxu0
    %v252 = vpack.c.bf16 %v249, %v246
    %v253 = vpack.c.bf16 %v180, %v179
    %v254 = vld [vmem:[#allocation6] sm:$0xf]
    %v255 = vld [vmem:[#allocation6 + $0x4] sm:$0xf]
    %v256 = vld [vmem:[#allocation6 + $0x8] sm:$0xf]
    %v257 = vld [vmem:[#allocation6 + $0xc] sm:$0xf]
    %v258 = vld [vmem:[#allocation8] sm:$0x1]
    %v260 = vlaneseq
    %v261 = vshrl.u32 %v260, 7
    %v262 = vsub.s32 0, %v261
    %v263 = vrot.slane %v258, %v262
    %v269 = vunpack.c.l.b16 %v254
    %v270 = vunpack.c.l.b16 %v255
    %v271 = vunpack.c.l.b16 %v256
    %v272 = vunpack.c.l.b16 %v257
    %v273 = vpack.c.b16 %v270, %v269
    %v274 = vpack.c.b16 %v272, %v271
    %v278 = vsel %vm207, %v253, 0
    %280 = vmatprep.subr.bf16.mxu0 0
    %281 = vmatpush1.bf16.msra.mxu0 %v273
    %282 = vmatprep.subr.bf16.mxu0 0
    %283 = vmatpush1.bf16.msra.mxu0 %v274
    %284 = vmatprep.subr.bf16.mxu0 0
    %285 = vmatpush1.bf16.msra.mxu0 0
    %286 = vmatprep.subr.bf16.mxu0 0
    %287 = vmatpush1.bf16.msra.mxu0 0
    %288 = vmatprep.subr.bf16.mxu0 0
    %289 = vmatpush1.bf16.msra.mxu0 0
    %290 = vmatprep.subr.bf16.mxu0 0
    %291 = vmatpush1.bf16.msra.mxu0 0
    %292 = vmatprep.subr.bf16.mxu0 0
    %293 = vmatpush1.bf16.msra.mxu0 0
    %294 = vmatprep.subr.bf16.mxu0 0
    %295 = vmatpush1.bf16.msra.mxu0 0
    %296 = vmatprep.subr.bf16.mxu0 0
    %297 = vmatpush1.bf16.msra.mxu0 0
    %298 = vmatprep.subr.bf16.mxu0 0
    %299 = vmatpush1.bf16.msra.mxu0 0
    %300 = vmatprep.subr.bf16.mxu0 0
    %301 = vmatpush1.bf16.msra.mxu0 0
    %302 = vmatprep.subr.bf16.mxu0 0
    %303 = vmatpush1.bf16.msra.mxu0 0
    %304 = vmatprep.subr.bf16.mxu0 0
    %305 = vmatpush1.bf16.msra.mxu0 0
    %306 = vmatprep.subr.bf16.mxu0 0
    %307 = vmatpush1.bf16.msra.mxu0 0
    %308 = vmatprep.subr.bf16.mxu0 0
    %309 = vmatpush1.bf16.msra.mxu0 0
    %310 = vmatprep.subr.bf16.mxu0 0
    %311 = vmatpush1.bf16.msra.mxu0 0
    %312 = vmatprep.mubr.bf16.mxu0 0
    %313 = vmatmul.mubr.bf16.gmra.mrb[0].mxu0 %v278
    %v314 = vpop.f32.mrb[0].mxu0
    %v315 = vadd.f32 %v263, %v314
    %v316 = vpop.f32.mrb[0].mxu0
    %v317 = vpop.f32.mrb[0].mxu0
    %v318 = vadd.f32 %v263, %v317
    %v319 = vpop.f32.mrb[0].mxu0
    %320 = vdwg.mxu0
    %v321 = vpack.c.bf16 %v318, %v315
    %v322 = vpack.c.bf16 %v182, %v181
    %v323 = vld [vmem:[#allocation9] sm:$0xf]
    %v324 = vld [vmem:[#allocation9 + $0x4] sm:$0xf]
    %v325 = vld [vmem:[#allocation9 + $0x8] sm:$0xf]
    %v326 = vld [vmem:[#allocation9 + $0xc] sm:$0xf]
    %v327 = vld [vmem:[#allocation11] sm:$0x1]
    %v329 = vlaneseq
    %v330 = vshrl.u32 %v329, 7
    %v331 = vsub.s32 0, %v330
    %v332 = vrot.slane %v327, %v331
    %v338 = vunpack.c.l.b16 %v323
    %v339 = vunpack.c.l.b16 %v324
    %v340 = vunpack.c.l.b16 %v325
    %v341 = vunpack.c.l.b16 %v326
    %v342 = vpack.c.b16 %v339, %v338
    %v343 = vpack.c.b16 %v341, %v340
    %v347 = vsel %vm207, %v322, 0
    %349 = vmatprep.subr.bf16.mxu0 0
    %350 = vmatpush1.bf16.msra.mxu0 %v342
    %351 = vmatprep.subr.bf16.mxu0 0
    %352 = vmatpush1.bf16.msra.mxu0 %v343
    %353 = vmatprep.subr.bf16.mxu0 0
    %354 = vmatpush1.bf16.msra.mxu0 0
    %355 = vmatprep.subr.bf16.mxu0 0
    %356 = vmatpush1.bf16.msra.mxu0 0
    %357 = vmatprep.subr.bf16.mxu0 0
    %358 = vmatpush1.bf16.msra.mxu0 0
    %359 = vmatprep.subr.bf16.mxu0 0
    %360 = vmatpush1.bf16.msra.mxu0 0
    %361 = vmatprep.subr.bf16.mxu0 0
    %362 = vmatpush1.bf16.msra.mxu0 0
    %363 = vmatprep.subr.bf16.mxu0 0
    %364 = vmatpush1.bf16.msra.mxu0 0
    %365 = vmatprep.subr.bf16.mxu0 0
    %366 = vmatpush1.bf16.msra.mxu0 0
    %367 = vmatprep.subr.bf16.mxu0 0
    %368 = vmatpush1.bf16.msra.mxu0 0
    %369 = vmatprep.subr.bf16.mxu0 0
    %370 = vmatpush1.bf16.msra.mxu0 0
    %371 = vmatprep.subr.bf16.mxu0 0
    %372 = vmatpush1.bf16.msra.mxu0 0
    %373 = vmatprep.subr.bf16.mxu0 0
    %374 = vmatpush1.bf16.msra.mxu0 0
    %375 = vmatprep.subr.bf16.mxu0 0
    %376 = vmatpush1.bf16.msra.mxu0 0
    %377 = vmatprep.subr.bf16.mxu0 0
    %378 = vmatpush1.bf16.msra.mxu0 0
    %379 = vmatprep.subr.bf16.mxu0 0
    %380 = vmatpush1.bf16.msra.mxu0 0
    %381 = vmatprep.mubr.bf16.mxu0 0
    %382 = vmatmul.mubr.bf16.gmra.mrb[0].mxu0 %v347
    %v383 = vpop.f32.mrb[0].mxu0
    %v384 = vadd.f32 %v332, %v383
    %v385 = vpop.f32.mrb[0].mxu0
    %v386 = vpop.f32.mrb[0].mxu0
    %v387 = vadd.f32 %v332, %v386
    %v388 = vpop.f32.mrb[0].mxu0
    %389 = vdwg.mxu0
    %v390 = vpack.c.bf16 %v387, %v384
    %v391 = vlaneseq
    %v392 = vshrl.u32 %v391, 7
    %v393 = vlaneseq
    %v394 = vand.u32 %v393, 127
    %v395 = vsub.s32 %v394, %v392
    %vm396 = vcmp.lt.s32.totalorder %v395, 0
    %v397 = vsel %vm396, 1, 0
    %v398 = vcvt.s32.f32 %v397
    %v399 = vsub.s32 0, %v395
    %v400 = vsel %vm396, %v399, %v395
    %v401 = vcvt.s32.f32 %v400
    %vm402 = vcmp.gt.s32.totalorder %v392, %v394
    %v403 = vsel %vm402, 1, 0
    %v404 = vcvt.s32.f32 %v403
    %v405 = vpack.c.bf16 %v404, %v404
    %vm406 = vcmp.eq.s32.totalorder %v392, 0
    %v408 = vunpack.c.l.b16 %v252
    %v409 = vunpack.c.h.b16 %v252
    %v410 = vpack.c.b16 %v408, %v408
    %v411 = vpack.c.b16 %v409, %v409
    %v413 = vunpack.c.l.b16 %v321
    %v414 = vunpack.c.h.b16 %v321
    %v415 = vpack.c.b16 %v413, %v413
    %v416 = vpack.c.b16 %v414, %v414
    %v418 = vunpack.c.l.b16 %v390
    %v419 = vunpack.c.h.b16 %v390
    %v420 = vpack.c.b16 %v418, %v418
    %v421 = vpack.c.b16 %v419, %v419
    %vm422 = vcmask 64512
    %v424 = vsel %vm422, %v410, 0
    %v427 = vsel %vm422, %v415, 0
    %429 = vmatprep.subr.bf16.mxu0 0
    %430 = vmatpush1.bf16.xpose.msra.mxu0 %v427
    %431 = vmatprep.subr.bf16.mxu0 0
    %432 = vmatpush1.bf16.xpose.msra.mxu0 0
    %433 = vmatprep.subr.bf16.mxu0 0
    %434 = vmatpush1.bf16.xpose.msra.mxu0 0
    %435 = vmatprep.subr.bf16.mxu0 0
    %436 = vmatpush1.bf16.xpose.msra.mxu0 0
    %437 = vmatprep.subr.bf16.mxu0 0
    %438 = vmatpush1.bf16.xpose.msra.mxu0 0
    %439 = vmatprep.subr.bf16.mxu0 0
    %440 = vmatpush1.bf16.xpose.msra.mxu0 0
    %441 = vmatprep.subr.bf16.mxu0 0
    %442 = vmatpush1.bf16.xpose.msra.mxu0 0
    %443 = vmatprep.subr.bf16.mxu0 0
    %444 = vmatpush1.bf16.xpose.msra.mxu0 0
    %445 = vmatprep.subr.bf16.mxu0 0
    %446 = vmatpush1.bf16.xpose.msra.mxu0 0
    %447 = vmatprep.subr.bf16.mxu0 0
    %448 = vmatpush1.bf16.xpose.msra.mxu0 0
    %449 = vmatprep.subr.bf16.mxu0 0
    %450 = vmatpush1.bf16.xpose.msra.mxu0 0
    %451 = vmatprep.subr.bf16.mxu0 0
    %452 = vmatpush1.bf16.xpose.msra.mxu0 0
    %453 = vmatprep.subr.bf16.mxu0 0
    %454 = vmatpush1.bf16.xpose.msra.mxu0 0
    %455 = vmatprep.subr.bf16.mxu0 0
    %456 = vmatpush1.bf16.xpose.msra.mxu0 0
    %457 = vmatprep.subr.bf16.mxu0 0
    %458 = vmatpush1.bf16.xpose.msra.mxu0 0
    %459 = vmatprep.subr.bf16.mxu0 0
    %460 = vmatpush1.bf16.xpose.msra.mxu0 0
    %461 = vmatprep.mubr.bf16.mxu0 0
    %462 = vmatmul.mubr.bf16.gmra.mrb[0].mxu0 %v424
    %v463 = vpop.f32.mrb[0].mxu0
    %v464 = vadd.f32 0.0, %v463
    %v465 = vpop.f32.mrb[0].mxu0
    %v466 = vpop.f32.mrb[0].mxu0
    %v467 = vpop.f32.mrb[0].mxu0
    %468 = vdwg.mxu0
    %v470 = vsel %vm422, %v411, 0
    %v473 = vsel %vm422, %v416, 0
    %475 = vmatprep.subr.bf16.mxu0 0
    %476 = vmatpush1.bf16.xpose.msra.mxu0 %v473
    %477 = vmatprep.subr.bf16.mxu0 0
    %478 = vmatpush1.bf16.xpose.msra.mxu0 0
    %479 = vmatprep.subr.bf16.mxu0 0
    %480 = vmatpush1.bf16.xpose.msra.mxu0 0
    %481 = vmatprep.subr.bf16.mxu0 0
    %482 = vmatpush1.bf16.xpose.msra.mxu0 0
    %483 = vmatprep.subr.bf16.mxu0 0
    %484 = vmatpush1.bf16.xpose.msra.mxu0 0
    %485 = vmatprep.subr.bf16.mxu0 0
    %486 = vmatpush1.bf16.xpose.msra.mxu0 0
    %487 = vmatprep.subr.bf16.mxu0 0
    %488 = vmatpush1.bf16.xpose.msra.mxu0 0
    %489 = vmatprep.subr.bf16.mxu0 0
    %490 = vmatpush1.bf16.xpose.msra.mxu0 0
    %491 = vmatprep.subr.bf16.mxu0 0
    %492 = vmatpush1.bf16.xpose.msra.mxu0 0
    %493 = vmatprep.subr.bf16.mxu0 0
    %494 = vmatpush1.bf16.xpose.msra.mxu0 0
    %495 = vmatprep.subr.bf16.mxu0 0
    %496 = vmatpush1.bf16.xpose.msra.mxu0 0
    %497 = vmatprep.subr.bf16.mxu0 0
    %498 = vmatpush1.bf16.xpose.msra.mxu0 0
    %499 = vmatprep.subr.bf16.mxu0 0
    %500 = vmatpush1.bf16.xpose.msra.mxu0 0
    %501 = vmatprep.subr.bf16.mxu0 0
    %502 = vmatpush1.bf16.xpose.msra.mxu0 0
    %503 = vmatprep.subr.bf16.mxu0 0
    %504 = vmatpush1.bf16.xpose.msra.mxu0 0
    %505 = vmatprep.subr.bf16.mxu0 0
    %506 = vmatpush1.bf16.xpose.msra.mxu0 0
    %507 = vmatprep.mubr.bf16.mxu0 0
    %508 = vmatmul.mubr.bf16.gmra.mrb[0].mxu0 %v470
    %v509 = vpop.f32.mrb[0].mxu0
    %v510 = vadd.f32 0.0, %v509
    %v511 = vpop.f32.mrb[0].mxu0
    %v512 = vpop.f32.mrb[0].mxu0
    %v513 = vpop.f32.mrb[0].mxu0
    %514 = vdwg.mxu0
    %v515 = vmul.f32 %v464, 0.35355338
    %v516 = vmul.f32 %v510, 0.35355338
    %vm517 = vcmp.eq.s32.totalorder %v397, 1
    %v518 = vsel %vm517, %v515, -1e+32
    %v519 = vsel %vm517, %v516, -1e+32
    %v520 = vsel %vm422, %v518, -inf
    %521 = vmax.xlane.f32.xlu0 %v520
    %v522 = vpop.xlane.xlu0 %521
    %v523 = vsel %vm422, %v519, -inf
    %524 = vmax.xlane.f32.xlu0 %v523
    %v525 = vpop.xlane.xlu0 %524
    %v526 = vsub.f32 %v518, %v522
    %v527 = vsub.f32 %v519, %v525
    %v528 = vmul.f32 %v526, 1.442695
    %v529 = vpow.pop %v528
    %v530 = vmul.f32 %v527, 1.442695
    %v531 = vpow.pop %v530
    %v532 = vsel %vm422, %v529, 0.0
    %533 = vadd.xlane.f32.xlu0 %v532
    %v534 = vpop.xlane.xlu0 %533
    %v535 = vsel %vm422, %v531, 0.0
    %536 = vadd.xlane.f32.xlu0 %v535
    %v537 = vpop.xlane.xlu0 %536
    %v538 = vrcp.pop %v534
    %v539 = vrcp.pop %v537
    %v540 = vmul.f32 %v529, %v538
    %v541 = vmul.f32 %v531, %v539
    %v542 = vmul.f32 %v540, %v398
    %v543 = vmul.f32 %v541, %v398
    %v544 = vpack.c.bf16 %v543, %v542
    %v546 = vsel %vm422, %v544, 0
    %vm548 = vcmask 1043456
    %v550 = vsel %vm548, %v405, 0
    %552 = vmatprep.subr.bf16.mxu0 0
    %553 = vmatpush1.bf16.msra.mxu0 %v550
    %554 = vmatprep.subr.bf16.mxu0 0
    %555 = vmatpush1.bf16.msra.mxu0 0
    %556 = vmatprep.subr.bf16.mxu0 0
    %557 = vmatpush1.bf16.msra.mxu0 0
    %558 = vmatprep.subr.bf16.mxu0 0
    %559 = vmatpush1.bf16.msra.mxu0 0
    %560 = vmatprep.subr.bf16.mxu0 0
    %561 = vmatpush1.bf16.msra.mxu0 0
    %562 = vmatprep.subr.bf16.mxu0 0
    %563 = vmatpush1.bf16.msra.mxu0 0
    %564 = vmatprep.subr.bf16.mxu0 0
    %565 = vmatpush1.bf16.msra.mxu0 0
    %566 = vmatprep.subr.bf16.mxu0 0
    %567 = vmatpush1.bf16.msra.mxu0 0
    %568 = vmatprep.subr.bf16.mxu0 0
    %569 = vmatpush1.bf16.msra.mxu0 0
    %570 = vmatprep.subr.bf16.mxu0 0
    %571 = vmatpush1.bf16.msra.mxu0 0
    %572 = vmatprep.subr.bf16.mxu0 0
    %573 = vmatpush1.bf16.msra.mxu0 0
    %574 = vmatprep.subr.bf16.mxu0 0
    %575 = vmatpush1.bf16.msra.mxu0 0
    %576 = vmatprep.subr.bf16.mxu0 0
    %577 = vmatpush1.bf16.msra.mxu0 0
    %578 = vmatprep.subr.bf16.mxu0 0
    %579 = vmatpush1.bf16.msra.mxu0 0
    %580 = vmatprep.subr.bf16.mxu0 0
    %581 = vmatpush1.bf16.msra.mxu0 0
    %582 = vmatprep.subr.bf16.mxu0 0
    %583 = vmatpush1.bf16.msra.mxu0 0
    %584 = vmatprep.mubr.bf16.mxu0 0
    %585 = vmatmul.mubr.bf16.gmra.mrb[0].mxu0 %v546
    %v586 = vpop.f32.mrb[0].mxu0
    %v587 = vadd.f32 0.0, %v586
    %v588 = vpop.f32.mrb[0].mxu0
    %v589 = vpop.f32.mrb[0].mxu0
    %v590 = vadd.f32 0.0, %v589
    %v591 = vpop.f32.mrb[0].mxu0
    %592 = vdwg.mxu0
    %v593 = vmul.f32 %v587, %v401
    %v594 = vmul.f32 %v590, %v401
    %v595 = vmax.f32 %v593, 0.0
    %v596 = vmax.f32 %v594, 0.0
    %v597 = vrsqrt.pop %v595
    %v598 = vmul.f32 %v595, %v597
    %vm599 = vcmp.eq.f32.partialorder %v595, inf
    %v600 = vsel %vm599, %v595, %v598
    %vm601 = vcmp.eq.f32.partialorder %v595, 0.0
    %v602 = vand.u32 %v595, 2147483648
    %v603 = vsel %vm601, %v602, %v600
    %v604 = vrsqrt.pop %v596
    %v605 = vmul.f32 %v596, %v604
    %vm606 = vcmp.eq.f32.partialorder %v596, inf
    %v607 = vsel %vm606, %v596, %v605
    %vm608 = vcmp.eq.f32.partialorder %v596, 0.0
    %v609 = vand.u32 %v596, 2147483648
    %v610 = vsel %vm608, %v609, %v607
    %s611 = sld [smem:[#allocation14]]
    %v612 = vstv %s611
    %v613 = vmul.f32 %v603, %v612
    %v614 = vmul.f32 %v610, %v612
    %v615 = vmul.f32 %v613, 1.442695
    %v616 = vpow.pop %v615
    %v617 = vmul.f32 %v614, 1.442695
    %v618 = vpow.pop %v617
    %v619 = vmax.f32 %v616, 1e-05
    %v620 = vmax.f32 %v618, 1e-05
    %v621 = vmin.f32 %v619, 100000.0
    %v622 = vmin.f32 %v620, 100000.0
    %v623 = vmul.f32 %v515, %v621
    %v624 = vmul.f32 %v516, %v622
    %v625 = vsel %vm422, %v623, -inf
    %626 = vmax.xlane.f32.xlu0 %v625
    %v627 = vpop.xlane.xlu0 %626
    %v628 = vsel %vm422, %v624, -inf
    %629 = vmax.xlane.f32.xlu0 %v628
    %v630 = vpop.xlane.xlu0 %629
    %v631 = vsub.f32 %v623, %v627
    %v632 = vsub.f32 %v624, %v630
    %v633 = vmul.f32 %v631, 1.442695
    %v634 = vpow.pop %v633
    %v635 = vmul.f32 %v632, 1.442695
    %v636 = vpow.pop %v635
    %v637 = vsel %vm422, %v634, 0.0
    %638 = vadd.xlane.f32.xlu0 %v637
    %v639 = vpop.xlane.xlu0 %638
    %v640 = vsel %vm422, %v636, 0.0
    %641 = vadd.xlane.f32.xlu0 %v640
    %v642 = vpop.xlane.xlu0 %641
    %v643 = vrcp.pop %v639
    %v644 = vrcp.pop %v642
    %v645 = vmul.f32 %v634, %v643
    %v646 = vmul.f32 %v636, %v644
    %v647 = vsel %vm406, 1, 0
    %vm648 = vcmp.eq.s32.totalorder %v647, 1
    %v649 = vsel %vm648, 0.0, %v645
    %v650 = vsel %vm648, 0.0, %v646
    %v651 = vpack.c.bf16 %v649, %v649
    %v652 = vpack.c.bf16 %v650, %v650
    %v654 = vsel %vm422, %v651, 0
    %v657 = vsel %vm548, %v420, 0
    %659 = vmatprep.subr.bf16.mxu0 0
    %660 = vmatpush1.bf16.msra.mxu0 %v657
    %661 = vmatprep.subr.bf16.mxu0 0
    %662 = vmatpush1.bf16.msra.mxu0 0
    %663 = vmatprep.subr.bf16.mxu0 0
    %664 = vmatpush1.bf16.msra.mxu0 0
    %665 = vmatprep.subr.bf16.mxu0 0
    %666 = vmatpush1.bf16.msra.mxu0 0
    %667 = vmatprep.subr.bf16.mxu0 0
    %668 = vmatpush1.bf16.msra.mxu0 0
    %669 = vmatprep.subr.bf16.mxu0 0
    %670 = vmatpush1.bf16.msra.mxu0 0
    %671 = vmatprep.subr.bf16.mxu0 0
    %672 = vmatpush1.bf16.msra.mxu0 0
    %673 = vmatprep.subr.bf16.mxu0 0
    %674 = vmatpush1.bf16.msra.mxu0 0
    %675 = vmatprep.subr.bf16.mxu0 0
    %676 = vmatpush1.bf16.msra.mxu0 0
    %677 = vmatprep.subr.bf16.mxu0 0
    %678 = vmatpush1.bf16.msra.mxu0 0
    %679 = vmatprep.subr.bf16.mxu0 0
    %680 = vmatpush1.bf16.msra.mxu0 0
    %681 = vmatprep.subr.bf16.mxu0 0
    %682 = vmatpush1.bf16.msra.mxu0 0
    %683 = vmatprep.subr.bf16.mxu0 0
    %684 = vmatpush1.bf16.msra.mxu0 0
    %685 = vmatprep.subr.bf16.mxu0 0
    %686 = vmatpush1.bf16.msra.mxu0 0
    %687 = vmatprep.subr.bf16.mxu0 0
    %688 = vmatpush1.bf16.msra.mxu0 0
    %689 = vmatprep.subr.bf16.mxu0 0
    %690 = vmatpush1.bf16.msra.mxu0 0
    %691 = vmatprep.mubr.bf16.mxu0 0
    %692 = vmatmul.mubr.bf16.gmra.mrb[0].mxu0 %v654
    %v693 = vpop.f32.mrb[0].mxu0
    %v694 = vadd.f32 0.0, %v693
    %v695 = vpop.f32.mrb[0].mxu0
    %v696 = vpop.f32.mrb[0].mxu0
    %v697 = vpop.f32.mrb[0].mxu0
    %698 = vdwg.mxu0
    %v700 = vsel %vm422, %v652, 0
    %v703 = vsel %vm548, %v421, 0
    %705 = vmatprep.subr.bf16.mxu0 0
    %706 = vmatpush1.bf16.msra.mxu0 %v703
    %707 = vmatprep.subr.bf16.mxu0 0
    %708 = vmatpush1.bf16.msra.mxu0 0
    %709 = vmatprep.subr.bf16.mxu0 0
    %710 = vmatpush1.bf16.msra.mxu0 0
    %711 = vmatprep.subr.bf16.mxu0 0
    %712 = vmatpush1.bf16.msra.mxu0 0
    %713 = vmatprep.subr.bf16.mxu0 0
    %714 = vmatpush1.bf16.msra.mxu0 0
    %715 = vmatprep.subr.bf16.mxu0 0
    %716 = vmatpush1.bf16.msra.mxu0 0
    %717 = vmatprep.subr.bf16.mxu0 0
    %718 = vmatpush1.bf16.msra.mxu0 0
    %719 = vmatprep.subr.bf16.mxu0 0
    %720 = vmatpush1.bf16.msra.mxu0 0
    %721 = vmatprep.subr.bf16.mxu0 0
    %722 = vmatpush1.bf16.msra.mxu0 0
    %723 = vmatprep.subr.bf16.mxu0 0
    %724 = vmatpush1.bf16.msra.mxu0 0
    %725 = vmatprep.subr.bf16.mxu0 0
    %726 = vmatpush1.bf16.msra.mxu0 0
    %727 = vmatprep.subr.bf16.mxu0 0
    %728 = vmatpush1.bf16.msra.mxu0 0
    %729 = vmatprep.subr.bf16.mxu0 0
    %730 = vmatpush1.bf16.msra.mxu0 0
    %731 = vmatprep.subr.bf16.mxu0 0
    %732 = vmatpush1.bf16.msra.mxu0 0
    %733 = vmatprep.subr.bf16.mxu0 0
    %734 = vmatpush1.bf16.msra.mxu0 0
    %735 = vmatprep.subr.bf16.mxu0 0
    %736 = vmatpush1.bf16.msra.mxu0 0
    %737 = vmatprep.mubr.bf16.mxu0 0
    %738 = vmatmul.mubr.bf16.gmra.mrb[0].mxu0 %v700
    %v739 = vpop.f32.mrb[0].mxu0
    %v740 = vadd.f32 0.0, %v739
    %v741 = vpop.f32.mrb[0].mxu0
    %v742 = vpop.f32.mrb[0].mxu0
    %v743 = vpop.f32.mrb[0].mxu0
    %744 = vdwg.mxu0
    %v745 = vpack.c.bf16 %v740, %v694
    %v746 = vld [vmem:[%s9] sm:$0xf]
    %747 = vrot.lane.b32.xlu0 %v410, 120
    %v748 = vpop.permute.xlu0 %747
    %749 = vrot.lane.b32.xlu0 %v415, 120
    %v750 = vpop.permute.xlu0 %749
    %v752 = vsel %vm422, %v748, 0
    %v755 = vsel %vm422, %v750, 0
    %757 = vmatprep.subr.bf16.mxu0 0
    %758 = vmatpush1.bf16.xpose.msra.mxu0 %v755
    %759 = vmatprep.subr.bf16.mxu0 0
    %760 = vmatpush1.bf16.xpose.msra.mxu0 0
    %761 = vmatprep.subr.bf16.mxu0 0
    %762 = vmatpush1.bf16.xpose.msra.mxu0 0
    %763 = vmatprep.subr.bf16.mxu0 0
    %764 = vmatpush1.bf16.xpose.msra.mxu0 0
    %765 = vmatprep.subr.bf16.mxu0 0
    %766 = vmatpush1.bf16.xpose.msra.mxu0 0
    %767 = vmatprep.subr.bf16.mxu0 0
    %768 = vmatpush1.bf16.xpose.msra.mxu0 0
    %769 = vmatprep.subr.bf16.mxu0 0
    %770 = vmatpush1.bf16.xpose.msra.mxu0 0
    %771 = vmatprep.subr.bf16.mxu0 0
    %772 = vmatpush1.bf16.xpose.msra.mxu0 0
    %773 = vmatprep.subr.bf16.mxu0 0
    %774 = vmatpush1.bf16.xpose.msra.mxu0 0
    %775 = vmatprep.subr.bf16.mxu0 0
    %776 = vmatpush1.bf16.xpose.msra.mxu0 0
    %777 = vmatprep.subr.bf16.mxu0 0
    %778 = vmatpush1.bf16.xpose.msra.mxu0 0
    %779 = vmatprep.subr.bf16.mxu0 0
    %780 = vmatpush1.bf16.xpose.msra.mxu0 0
    %781 = vmatprep.subr.bf16.mxu0 0
    %782 = vmatpush1.bf16.xpose.msra.mxu0 0
    %783 = vmatprep.subr.bf16.mxu0 0
    %784 = vmatpush1.bf16.xpose.msra.mxu0 0
    %785 = vmatprep.subr.bf16.mxu0 0
    %786 = vmatpush1.bf16.xpose.msra.mxu0 0
    %787 = vmatprep.subr.bf16.mxu0 0
    %788 = vmatpush1.bf16.xpose.msra.mxu0 0
    %789 = vmatprep.mubr.bf16.mxu0 0
    %790 = vmatmul.mubr.bf16.gmra.mrb[0].mxu0 %v752
    %v791 = vpop.f32.mrb[0].mxu0
    %v792 = vadd.f32 0.0, %v791
    %v793 = vpop.f32.mrb[0].mxu0
    %v794 = vpop.f32.mrb[0].mxu0
    %v795 = vpop.f32.mrb[0].mxu0
    %796 = vdwg.mxu0
    %797 = vrot.lane.b32.xlu0 %v411, 120
    %v798 = vpop.permute.xlu0 %797
    %799 = vrot.lane.b32.xlu0 %v416, 120
    %v800 = vpop.permute.xlu0 %799
    %v802 = vsel %vm422, %v798, 0
    %v805 = vsel %vm422, %v800, 0
    %807 = vmatprep.subr.bf16.mxu0 0
    %808 = vmatpush1.bf16.xpose.msra.mxu0 %v805
    %809 = vmatprep.subr.bf16.mxu0 0
    %810 = vmatpush1.bf16.xpose.msra.mxu0 0
    %811 = vmatprep.subr.bf16.mxu0 0
    %812 = vmatpush1.bf16.xpose.msra.mxu0 0
    %813 = vmatprep.subr.bf16.mxu0 0
    %814 = vmatpush1.bf16.xpose.msra.mxu0 0
    %815 = vmatprep.subr.bf16.mxu0 0
    %816 = vmatpush1.bf16.xpose.msra.mxu0 0
    %817 = vmatprep.subr.bf16.mxu0 0
    %818 = vmatpush1.bf16.xpose.msra.mxu0 0
    %819 = vmatprep.subr.bf16.mxu0 0
    %820 = vmatpush1.bf16.xpose.msra.mxu0 0
    %821 = vmatprep.subr.bf16.mxu0 0
    %822 = vmatpush1.bf16.xpose.msra.mxu0 0
    %823 = vmatprep.subr.bf16.mxu0 0
    %824 = vmatpush1.bf16.xpose.msra.mxu0 0
    %825 = vmatprep.subr.bf16.mxu0 0
    %826 = vmatpush1.bf16.xpose.msra.mxu0 0
    %827 = vmatprep.subr.bf16.mxu0 0
    %828 = vmatpush1.bf16.xpose.msra.mxu0 0
    %829 = vmatprep.subr.bf16.mxu0 0
    %830 = vmatpush1.bf16.xpose.msra.mxu0 0
    %831 = vmatprep.subr.bf16.mxu0 0
    %832 = vmatpush1.bf16.xpose.msra.mxu0 0
    %833 = vmatprep.subr.bf16.mxu0 0
    %834 = vmatpush1.bf16.xpose.msra.mxu0 0
    %835 = vmatprep.subr.bf16.mxu0 0
    %836 = vmatpush1.bf16.xpose.msra.mxu0 0
    %837 = vmatprep.subr.bf16.mxu0 0
    %838 = vmatpush1.bf16.xpose.msra.mxu0 0
    %839 = vmatprep.mubr.bf16.mxu0 0
    %840 = vmatmul.mubr.bf16.gmra.mrb[0].mxu0 %v802
    %v841 = vpop.f32.mrb[0].mxu0
    %v842 = vadd.f32 0.0, %v841
    %v843 = vpop.f32.mrb[0].mxu0
    %v844 = vpop.f32.mrb[0].mxu0
    %v845 = vpop.f32.mrb[0].mxu0
    %846 = vdwg.mxu0
    %v847 = vmul.f32 %v792, 0.35355338
    %v848 = vmul.f32 %v842, 0.35355338
    %v849 = vsel %vm517, %v847, -1e+32
    %v850 = vsel %vm517, %v848, -1e+32
    %v851 = vsel %vm422, %v849, -inf
    %852 = vmax.xlane.f32.xlu0 %v851
    %v853 = vpop.xlane.xlu0 %852
    %v854 = vsel %vm422, %v850, -inf
    %855 = vmax.xlane.f32.xlu0 %v854
    %v856 = vpop.xlane.xlu0 %855
    %v857 = vsub.f32 %v849, %v853
    %v858 = vsub.f32 %v850, %v856
    %v859 = vmul.f32 %v857, 1.442695
    %v860 = vpow.pop %v859
    %v861 = vmul.f32 %v858, 1.442695
    %v862 = vpow.pop %v861
    %v863 = vsel %vm422, %v860, 0.0
    %864 = vadd.xlane.f32.xlu0 %v863
    %v865 = vpop.xlane.xlu0 %864
    %v866 = vsel %vm422, %v862, 0.0
    %867 = vadd.xlane.f32.xlu0 %v866
    %v868 = vpop.xlane.xlu0 %867
    %v869 = vrcp.pop %v865
    %v870 = vrcp.pop %v868
    %v871 = vmul.f32 %v860, %v869
    %v872 = vmul.f32 %v862, %v870
    %v873 = vmul.f32 %v871, %v398
    %v874 = vmul.f32 %v872, %v398
    %v875 = vpack.c.bf16 %v874, %v873
    %v877 = vsel %vm422, %v875, 0
    %879 = vmatprep.subr.bf16.mxu0 0
    %880 = vmatpush1.bf16.msra.mxu0 %v550
    %881 = vmatprep.subr.bf16.mxu0 0
    %882 = vmatpush1.bf16.msra.mxu0 0
    %883 = vmatprep.subr.bf16.mxu0 0
    %884 = vmatpush1.bf16.msra.mxu0 0
    %885 = vmatprep.subr.bf16.mxu0 0
    %886 = vmatpush1.bf16.msra.mxu0 0
    %887 = vmatprep.subr.bf16.mxu0 0
    %888 = vmatpush1.bf16.msra.mxu0 0
    %889 = vmatprep.subr.bf16.mxu0 0
    %890 = vmatpush1.bf16.msra.mxu0 0
    %891 = vmatprep.subr.bf16.mxu0 0
    %892 = vmatpush1.bf16.msra.mxu0 0
    %893 = vmatprep.subr.bf16.mxu0 0
    %894 = vmatpush1.bf16.msra.mxu0 0
    %895 = vmatprep.subr.bf16.mxu0 0
    %896 = vmatpush1.bf16.msra.mxu0 0
    %897 = vmatprep.subr.bf16.mxu0 0
    %898 = vmatpush1.bf16.msra.mxu0 0
    %899 = vmatprep.subr.bf16.mxu0 0
    %900 = vmatpush1.bf16.msra.mxu0 0
    %901 = vmatprep.subr.bf16.mxu0 0
    %902 = vmatpush1.bf16.msra.mxu0 0
    %903 = vmatprep.subr.bf16.mxu0 0
    %904 = vmatpush1.bf16.msra.mxu0 0
    %905 = vmatprep.subr.bf16.mxu0 0
    %906 = vmatpush1.bf16.msra.mxu0 0
    %907 = vmatprep.subr.bf16.mxu0 0
    %908 = vmatpush1.bf16.msra.mxu0 0
    %909 = vmatprep.subr.bf16.mxu0 0
    %910 = vmatpush1.bf16.msra.mxu0 0
    %911 = vmatprep.mubr.bf16.mxu0 0
    %912 = vmatmul.mubr.bf16.gmra.mrb[0].mxu0 %v877
    %v913 = vpop.f32.mrb[0].mxu0
    %v914 = vadd.f32 0.0, %v913
    %v915 = vpop.f32.mrb[0].mxu0
    %v916 = vpop.f32.mrb[0].mxu0
    %v917 = vadd.f32 0.0, %v916
    %v918 = vpop.f32.mrb[0].mxu0
    %919 = vdwg.mxu0
    %v920 = vmul.f32 %v914, %v401
    %v921 = vmul.f32 %v917, %v401
    %v922 = vmax.f32 %v920, 0.0
    %v923 = vmax.f32 %v921, 0.0
    %v924 = vrsqrt.pop %v922
    %v925 = vmul.f32 %v922, %v924
    %vm926 = vcmp.eq.f32.partialorder %v922, inf
    %v927 = vsel %vm926, %v922, %v925
    %vm928 = vcmp.eq.f32.partialorder %v922, 0.0
    %v929 = vand.u32 %v922, 2147483648
    %v930 = vsel %vm928, %v929, %v927
    %v931 = vrsqrt.pop %v923
    %v932 = vmul.f32 %v923, %v931
    %vm933 = vcmp.eq.f32.partialorder %v923, inf
    %v934 = vsel %vm933, %v923, %v932
    %vm935 = vcmp.eq.f32.partialorder %v923, 0.0
    %v936 = vand.u32 %v923, 2147483648
    %v937 = vsel %vm935, %v936, %v934
    %s938 = sld [smem:[#allocation14 + $0x1]]
    %v939 = vstv %s938
    %v940 = vmul.f32 %v930, %v939
    %v941 = vmul.f32 %v937, %v939
    %v942 = vmul.f32 %v940, 1.442695
    %v943 = vpow.pop %v942
    %v944 = vmul.f32 %v941, 1.442695
    %v945 = vpow.pop %v944
    %v946 = vmax.f32 %v943, 1e-05
    %v947 = vmax.f32 %v945, 1e-05
    %v948 = vmin.f32 %v946, 100000.0
    %v949 = vmin.f32 %v947, 100000.0
    %v950 = vmul.f32 %v847, %v948
    %v951 = vmul.f32 %v848, %v949
    %v952 = vsel %vm422, %v950, -inf
    %953 = vmax.xlane.f32.xlu0 %v952
    %v954 = vpop.xlane.xlu0 %953
    %v955 = vsel %vm422, %v951, -inf
    %956 = vmax.xlane.f32.xlu0 %v955
    %v957 = vpop.xlane.xlu0 %956
    %v958 = vsub.f32 %v950, %v954
    %v959 = vsub.f32 %v951, %v957
    %v960 = vmul.f32 %v958, 1.442695
    %v961 = vpow.pop %v960
    %v962 = vmul.f32 %v959, 1.442695
    %v963 = vpow.pop %v962
    %v964 = vsel %vm422, %v961, 0.0
    %965 = vadd.xlane.f32.xlu0 %v964
    %v966 = vpop.xlane.xlu0 %965
    %v967 = vsel %vm422, %v963, 0.0
    %968 = vadd.xlane.f32.xlu0 %v967
    %v969 = vpop.xlane.xlu0 %968
    %v970 = vrcp.pop %v966
    %v971 = vrcp.pop %v969
    %v972 = vmul.f32 %v961, %v970
    %v973 = vmul.f32 %v963, %v971
    %v974 = vsel %vm648, 0.0, %v972
    %v975 = vsel %vm648, 0.0, %v973
    %v976 = vpack.c.bf16 %v974, %v974
    %v977 = vpack.c.bf16 %v975, %v975
    %978 = vrot.lane.b32.xlu0 %v420, 120
    %v979 = vpop.permute.xlu0 %978
    %v981 = vsel %vm422, %v976, 0
    %v984 = vsel %vm548, %v979, 0
    %986 = vmatprep.subr.bf16.mxu0 0
    %987 = vmatpush1.bf16.msra.mxu0 %v984
    %988 = vmatprep.subr.bf16.mxu0 0
    %989 = vmatpush1.bf16.msra.mxu0 0
    %990 = vmatprep.subr.bf16.mxu0 0
    %991 = vmatpush1.bf16.msra.mxu0 0
    %992 = vmatprep.subr.bf16.mxu0 0
    %993 = vmatpush1.bf16.msra.mxu0 0
    %994 = vmatprep.subr.bf16.mxu0 0
    %995 = vmatpush1.bf16.msra.mxu0 0
    %996 = vmatprep.subr.bf16.mxu0 0
    %997 = vmatpush1.bf16.msra.mxu0 0
    %998 = vmatprep.subr.bf16.mxu0 0
    %999 = vmatpush1.bf16.msra.mxu0 0
    %1000 = vmatprep.subr.bf16.mxu0 0
    %1001 = vmatpush1.bf16.msra.mxu0 0
    %1002 = vmatprep.subr.bf16.mxu0 0
    %1003 = vmatpush1.bf16.msra.mxu0 0
    %1004 = vmatprep.subr.bf16.mxu0 0
    %1005 = vmatpush1.bf16.msra.mxu0 0
    %1006 = vmatprep.subr.bf16.mxu0 0
    %1007 = vmatpush1.bf16.msra.mxu0 0
    %1008 = vmatprep.subr.bf16.mxu0 0
    %1009 = vmatpush1.bf16.msra.mxu0 0
    %1010 = vmatprep.subr.bf16.mxu0 0
    %1011 = vmatpush1.bf16.msra.mxu0 0
    %1012 = vmatprep.subr.bf16.mxu0 0
    %1013 = vmatpush1.bf16.msra.mxu0 0
    %1014 = vmatprep.subr.bf16.mxu0 0
    %1015 = vmatpush1.bf16.msra.mxu0 0
    %1016 = vmatprep.subr.bf16.mxu0 0
    %1017 = vmatpush1.bf16.msra.mxu0 0
    %1018 = vmatprep.mubr.bf16.mxu0 0
    %1019 = vmatmul.mubr.bf16.gmra.mrb[0].mxu0 %v981
    %v1020 = vpop.f32.mrb[0].mxu0
    %v1021 = vadd.f32 0.0, %v1020
    %v1022 = vpop.f32.mrb[0].mxu0
    %v1023 = vpop.f32.mrb[0].mxu0
    %v1024 = vpop.f32.mrb[0].mxu0
    %1025 = vdwg.mxu0
    %1026 = vrot.lane.b32.xlu0 %v421, 120
    %v1027 = vpop.permute.xlu0 %1026
    %v1029 = vsel %vm422, %v977, 0
    %v1032 = vsel %vm548, %v1027, 0
    %1034 = vmatprep.subr.bf16.mxu0 0
    %1035 = vmatpush1.bf16.msra.mxu0 %v1032
    %1036 = vmatprep.subr.bf16.mxu0 0
    %1037 = vmatpush1.bf16.msra.mxu0 0
    %1038 = vmatprep.subr.bf16.mxu0 0
    %1039 = vmatpush1.bf16.msra.mxu0 0
    %1040 = vmatprep.subr.bf16.mxu0 0
    %1041 = vmatpush1.bf16.msra.mxu0 0
    %1042 = vmatprep.subr.bf16.mxu0 0
    %1043 = vmatpush1.bf16.msra.mxu0 0
    %1044 = vmatprep.subr.bf16.mxu0 0
    %1045 = vmatpush1.bf16.msra.mxu0 0
    %1046 = vmatprep.subr.bf16.mxu0 0
    %1047 = vmatpush1.bf16.msra.mxu0 0
    %1048 = vmatprep.subr.bf16.mxu0 0
    %1049 = vmatpush1.bf16.msra.mxu0 0
    %1050 = vmatprep.subr.bf16.mxu0 0
    %1051 = vmatpush1.bf16.msra.mxu0 0
    %1052 = vmatprep.subr.bf16.mxu0 0
    %1053 = vmatpush1.bf16.msra.mxu0 0
    %1054 = vmatprep.subr.bf16.mxu0 0
    %1055 = vmatpush1.bf16.msra.mxu0 0
    %1056 = vmatprep.subr.bf16.mxu0 0
    %1057 = vmatpush1.bf16.msra.mxu0 0
    %1058 = vmatprep.subr.bf16.mxu0 0
    %1059 = vmatpush1.bf16.msra.mxu0 0
    %1060 = vmatprep.subr.bf16.mxu0 0
    %1061 = vmatpush1.bf16.msra.mxu0 0
    %1062 = vmatprep.subr.bf16.mxu0 0
    %1063 = vmatpush1.bf16.msra.mxu0 0
    %1064 = vmatprep.subr.bf16.mxu0 0
    %1065 = vmatpush1.bf16.msra.mxu0 0
    %1066 = vmatprep.mubr.bf16.mxu0 0
    %1067 = vmatmul.mubr.bf16.gmra.mrb[0].mxu0 %v1029
    %v1068 = vpop.f32.mrb[0].mxu0
    %v1069 = vadd.f32 0.0, %v1068
    %v1070 = vpop.f32.mrb[0].mxu0
    %v1071 = vpop.f32.mrb[0].mxu0
    %v1072 = vpop.f32.mrb[0].mxu0
    %1073 = vdwg.mxu0
    %v1074 = vpack.c.bf16 %v1069, %v1021
    %s1075 = scalar_lea.vmem %s9, 4
    %v1076 = vld [vmem:[%s1075] sm:$0xf]
    %v1078 = vsel %vm422, %v1074, 0
    %v1081 = vsel %vm548, %v1076, 0
    %1083 = vmatprep.subr.bf16.mxu0 0
    %1084 = vmatpush1.bf16.msra.mxu0 %v1081
    %1085 = vmatprep.subr.bf16.mxu0 0
    %1086 = vmatpush1.bf16.msra.mxu0 0
    %1087 = vmatprep.subr.bf16.mxu0 0
    %1088 = vmatpush1.bf16.msra.mxu0 0
    %1089 = vmatprep.subr.bf16.mxu0 0
    %1090 = vmatpush1.bf16.msra.mxu0 0
    %1091 = vmatprep.subr.bf16.mxu0 0
    %1092 = vmatpush1.bf16.msra.mxu0 0
    %1093 = vmatprep.subr.bf16.mxu0 0
    %1094 = vmatpush1.bf16.msra.mxu0 0
    %1095 = vmatprep.subr.bf16.mxu0 0
    %1096 = vmatpush1.bf16.msra.mxu0 0
    %1097 = vmatprep.subr.bf16.mxu0 0
    %1098 = vmatpush1.bf16.msra.mxu0 0
    %1099 = vmatprep.subr.bf16.mxu0 0
    %1100 = vmatpush1.bf16.msra.mxu0 0
    %1101 = vmatprep.subr.bf16.mxu0 0
    %1102 = vmatpush1.bf16.msra.mxu0 0
    %1103 = vmatprep.subr.bf16.mxu0 0
    %1104 = vmatpush1.bf16.msra.mxu0 0
    %1105 = vmatprep.subr.bf16.mxu0 0
    %1106 = vmatpush1.bf16.msra.mxu0 0
    %1107 = vmatprep.subr.bf16.mxu0 0
    %1108 = vmatpush1.bf16.msra.mxu0 0
    %1109 = vmatprep.subr.bf16.mxu0 0
    %1110 = vmatpush1.bf16.msra.mxu0 0
    %1111 = vmatprep.subr.bf16.mxu0 0
    %1112 = vmatpush1.bf16.msra.mxu0 0
    %1113 = vmatprep.subr.bf16.mxu0 0
    %1114 = vmatpush1.bf16.msra.mxu0 0
    %1115 = vmatprep.mubr.bf16.mxu0 0
    %1116 = vmatmul.mubr.bf16.gmra.mrb[0].mxu0 %v1078
    %v1117 = vpop.f32.mrb[0].mxu0
    %v1118 = vadd.f32 0.0, %v1117
    %v1119 = vpop.f32.mrb[0].mxu0
    %v1120 = vpop.f32.mrb[0].mxu0
    %v1121 = vadd.f32 0.0, %v1120
    %v1122 = vpop.f32.mrb[0].mxu0
    %1123 = vdwg.mxu0
    %v1125 = vsel %vm422, %v745, 0
    %v1128 = vsel %vm548, %v746, 0
    %1130 = vmatprep.subr.bf16.mxu0 0
    %1131 = vmatpush1.bf16.msra.mxu0 %v1128
    %1132 = vmatprep.subr.bf16.mxu0 0
    %1133 = vmatpush1.bf16.msra.mxu0 0
    %1134 = vmatprep.subr.bf16.mxu0 0
    %1135 = vmatpush1.bf16.msra.mxu0 0
    %1136 = vmatprep.subr.bf16.mxu0 0
    %1137 = vmatpush1.bf16.msra.mxu0 0
    %1138 = vmatprep.subr.bf16.mxu0 0
    %1139 = vmatpush1.bf16.msra.mxu0 0
    %1140 = vmatprep.subr.bf16.mxu0 0
    %1141 = vmatpush1.bf16.msra.mxu0 0
    %1142 = vmatprep.subr.bf16.mxu0 0
    %1143 = vmatpush1.bf16.msra.mxu0 0
    %1144 = vmatprep.subr.bf16.mxu0 0
    %1145 = vmatpush1.bf16.msra.mxu0 0
    %1146 = vmatprep.subr.bf16.mxu0 0
    %1147 = vmatpush1.bf16.msra.mxu0 0
    %1148 = vmatprep.subr.bf16.mxu0 0
    %1149 = vmatpush1.bf16.msra.mxu0 0
    %1150 = vmatprep.subr.bf16.mxu0 0
    %1151 = vmatpush1.bf16.msra.mxu0 0
    %1152 = vmatprep.subr.bf16.mxu0 0
    %1153 = vmatpush1.bf16.msra.mxu0 0
    %1154 = vmatprep.subr.bf16.mxu0 0
    %1155 = vmatpush1.bf16.msra.mxu0 0
    %1156 = vmatprep.subr.bf16.mxu0 0
    %1157 = vmatpush1.bf16.msra.mxu0 0
    %1158 = vmatprep.subr.bf16.mxu0 0
    %1159 = vmatpush1.bf16.msra.mxu0 0
    %1160 = vmatprep.subr.bf16.mxu0 0
    %1161 = vmatpush1.bf16.msra.mxu0 0
    %1162 = vmatprep.mubr.bf16.mxu0 0
    %1163 = vmatmul.mubr.bf16.gmra.mrb[0].mxu0 %v1125
    %v1164 = vpop.f32.mrb[0].mxu0
    %v1165 = vadd.f32 %v1118, %v1164
    %v1166 = vpop.f32.mrb[0].mxu0
    %v1167 = vpop.f32.mrb[0].mxu0
    %v1168 = vadd.f32 %v1121, %v1167
    %v1169 = vpop.f32.mrb[0].mxu0
    %1170 = vdwg.mxu0
    %1171 = vrot.lane.b32.xlu0 %v410, 112
    %v1172 = vpop.permute.xlu0 %1171
    %1173 = vrot.lane.b32.xlu0 %v415, 112
    %v1174 = vpop.permute.xlu0 %1173
    %v1176 = vsel %vm422, %v1172, 0
    %v1179 = vsel %vm422, %v1174, 0
    %1181 = vmatprep.subr.bf16.mxu0 0
    %1182 = vmatpush1.bf16.xpose.msra.mxu0 %v1179
    %1183 = vmatprep.subr.bf16.mxu0 0
    %1184 = vmatpush1.bf16.xpose.msra.mxu0 0
    %1185 = vmatprep.subr.bf16.mxu0 0
    %1186 = vmatpush1.bf16.xpose.msra.mxu0 0
    %1187 = vmatprep.subr.bf16.mxu0 0
    %1188 = vmatpush1.bf16.xpose.msra.mxu0 0
    %1189 = vmatprep.subr.bf16.mxu0 0
    %1190 = vmatpush1.bf16.xpose.msra.mxu0 0
    %1191 = vmatprep.subr.bf16.mxu0 0
    %1192 = vmatpush1.bf16.xpose.msra.mxu0 0
    %1193 = vmatprep.subr.bf16.mxu0 0
    %1194 = vmatpush1.bf16.xpose.msra.mxu0 0
    %1195 = vmatprep.subr.bf16.mxu0 0
    %1196 = vmatpush1.bf16.xpose.msra.mxu0 0
    %1197 = vmatprep.subr.bf16.mxu0 0
    %1198 = vmatpush1.bf16.xpose.msra.mxu0 0
    %1199 = vmatprep.subr.bf16.mxu0 0
    %1200 = vmatpush1.bf16.xpose.msra.mxu0 0
    %1201 = vmatprep.subr.bf16.mxu0 0
    %1202 = vmatpush1.bf16.xpose.msra.mxu0 0
    %1203 = vmatprep.subr.bf16.mxu0 0
    %1204 = vmatpush1.bf16.xpose.msra.mxu0 0
    %1205 = vmatprep.subr.bf16.mxu0 0
    %1206 = vmatpush1.bf16.xpose.msra.mxu0 0
    %1207 = vmatprep.subr.bf16.mxu0 0
    %1208 = vmatpush1.bf16.xpose.msra.mxu0 0
    %1209 = vmatprep.subr.bf16.mxu0 0
    %1210 = vmatpush1.bf16.xpose.msra.mxu0 0
    %1211 = vmatprep.subr.bf16.mxu0 0
    %1212 = vmatpush1.bf16.xpose.msra.mxu0 0
    %1213 = vmatprep.mubr.bf16.mxu0 0
    %1214 = vmatmul.mubr.bf16.gmra.mrb[0].mxu0 %v1176
    %v1215 = vpop.f32.mrb[0].mxu0
    %v1216 = vadd.f32 0.0, %v1215
    %v1217 = vpop.f32.mrb[0].mxu0
    %v1218 = vpop.f32.mrb[0].mxu0
    %v1219 = vpop.f32.mrb[0].mxu0
    %1220 = vdwg.mxu0
    %1221 = vrot.lane.b32.xlu0 %v411, 112
    %v1222 = vpop.permute.xlu0 %1221
    %1223 = vrot.lane.b32.xlu0 %v416, 112
    %v1224 = vpop.permute.xlu0 %1223
    %v1226 = vsel %vm422, %v1222, 0
    %v1229 = vsel %vm422, %v1224, 0
    %1231 = vmatprep.subr.bf16.mxu0 0
    %1232 = vmatpush1.bf16.xpose.msra.mxu0 %v1229
    %1233 = vmatprep.subr.bf16.mxu0 0
    %1234 = vmatpush1.bf16.xpose.msra.mxu0 0
    %1235 = vmatprep.subr.bf16.mxu0 0
    %1236 = vmatpush1.bf16.xpose.msra.mxu0 0
    %1237 = vmatprep.subr.bf16.mxu0 0
    %1238 = vmatpush1.bf16.xpose.msra.mxu0 0
    %1239 = vmatprep.subr.bf16.mxu0 0
    %1240 = vmatpush1.bf16.xpose.msra.mxu0 0
    %1241 = vmatprep.subr.bf16.mxu0 0
    %1242 = vmatpush1.bf16.xpose.msra.mxu0 0
    %1243 = vmatprep.subr.bf16.mxu0 0
    %1244 = vmatpush1.bf16.xpose.msra.mxu0 0
    %1245 = vmatprep.subr.bf16.mxu0 0
    %1246 = vmatpush1.bf16.xpose.msra.mxu0 0
    %1247 = vmatprep.subr.bf16.mxu0 0
    %1248 = vmatpush1.bf16.xpose.msra.mxu0 0
    %1249 = vmatprep.subr.bf16.mxu0 0
    %1250 = vmatpush1.bf16.xpose.msra.mxu0 0
    %1251 = vmatprep.subr.bf16.mxu0 0
    %1252 = vmatpush1.bf16.xpose.msra.mxu0 0
    %1253 = vmatprep.subr.bf16.mxu0 0
    %1254 = vmatpush1.bf16.xpose.msra.mxu0 0
    %1255 = vmatprep.subr.bf16.mxu0 0
    %1256 = vmatpush1.bf16.xpose.msra.mxu0 0
    %1257 = vmatprep.subr.bf16.mxu0 0
    %1258 = vmatpush1.bf16.xpose.msra.mxu0 0
    %1259 = vmatprep.subr.bf16.mxu0 0
    %1260 = vmatpush1.bf16.xpose.msra.mxu0 0
    %1261 = vmatprep.subr.bf16.mxu0 0
    %1262 = vmatpush1.bf16.xpose.msra.mxu0 0
    %1263 = vmatprep.mubr.bf16.mxu0 0
    %1264 = vmatmul.mubr.bf16.gmra.mrb[0].mxu0 %v1226
    %v1265 = vpop.f32.mrb[0].mxu0
    %v1266 = vadd.f32 0.0, %v1265
    %v1267 = vpop.f32.mrb[0].mxu0
    %v1268 = vpop.f32.mrb[0].mxu0
    %v1269 = vpop.f32.mrb[0].mxu0
    %1270 = vdwg.mxu0
    %v1271 = vmul.f32 %v1216, 0.35355338
    %v1272 = vmul.f32 %v1266, 0.35355338
    %v1273 = vsel %vm517, %v1271, -1e+32
    %v1274 = vsel %vm517, %v1272, -1e+32
    %v1275 = vsel %vm422, %v1273, -inf
    %1276 = vmax.xlane.f32.xlu0 %v1275
    %v1277 = vpop.xlane.xlu0 %1276
    %v1278 = vsel %vm422, %v1274, -inf
    %1279 = vmax.xlane.f32.xlu0 %v1278
    %v1280 = vpop.xlane.xlu0 %1279
    %v1281 = vsub.f32 %v1273, %v1277
    %v1282 = vsub.f32 %v1274, %v1280
    %v1283 = vmul.f32 %v1281, 1.442695
    %v1284 = vpow.pop %v1283
    %v1285 = vmul.f32 %v1282, 1.442695
    %v1286 = vpow.pop %v1285
    %v1287 = vsel %vm422, %v1284, 0.0
    %1288 = vadd.xlane.f32.xlu0 %v1287
    %v1289 = vpop.xlane.xlu0 %1288
    %v1290 = vsel %vm422, %v1286, 0.0
    %1291 = vadd.xlane.f32.xlu0 %v1290
    %v1292 = vpop.xlane.xlu0 %1291
    %v1293 = vrcp.pop %v1289
    %v1294 = vrcp.pop %v1292
    %v1295 = vmul.f32 %v1284, %v1293
    %v1296 = vmul.f32 %v1286, %v1294
    %v1297 = vmul.f32 %v1295, %v398
    %v1298 = vmul.f32 %v1296, %v398
    %v1299 = vpack.c.bf16 %v1298, %v1297
    %v1301 = vsel %vm422, %v1299, 0
    %1303 = vmatprep.subr.bf16.mxu0 0
    %1304 = vmatpush1.bf16.msra.mxu0 %v550
    %1305 = vmatprep.subr.bf16.mxu0 0
    %1306 = vmatpush1.bf16.msra.mxu0 0
    %1307 = vmatprep.subr.bf16.mxu0 0
    %1308 = vmatpush1.bf16.msra.mxu0 0
    %1309 = vmatprep.subr.bf16.mxu0 0
    %1310 = vmatpush1.bf16.msra.mxu0 0
    %1311 = vmatprep.subr.bf16.mxu0 0
    %1312 = vmatpush1.bf16.msra.mxu0 0
    %1313 = vmatprep.subr.bf16.mxu0 0
    %1314 = vmatpush1.bf16.msra.mxu0 0
    %1315 = vmatprep.subr.bf16.mxu0 0
    %1316 = vmatpush1.bf16.msra.mxu0 0
    %1317 = vmatprep.subr.bf16.mxu0 0
    %1318 = vmatpush1.bf16.msra.mxu0 0
    %1319 = vmatprep.subr.bf16.mxu0 0
    %1320 = vmatpush1.bf16.msra.mxu0 0
    %1321 = vmatprep.subr.bf16.mxu0 0
    %1322 = vmatpush1.bf16.msra.mxu0 0
    %1323 = vmatprep.subr.bf16.mxu0 0
    %1324 = vmatpush1.bf16.msra.mxu0 0
    %1325 = vmatprep.subr.bf16.mxu0 0
    %1326 = vmatpush1.bf16.msra.mxu0 0
    %1327 = vmatprep.subr.bf16.mxu0 0
    %1328 = vmatpush1.bf16.msra.mxu0 0
    %1329 = vmatprep.subr.bf16.mxu0 0
    %1330 = vmatpush1.bf16.msra.mxu0 0
    %1331 = vmatprep.subr.bf16.mxu0 0
    %1332 = vmatpush1.bf16.msra.mxu0 0
    %1333 = vmatprep.subr.bf16.mxu0 0
    %1334 = vmatpush1.bf16.msra.mxu0 0
    %1335 = vmatprep.mubr.bf16.mxu0 0
    %1336 = vmatmul.mubr.bf16.gmra.mrb[0].mxu0 %v1301
    %v1337 = vpop.f32.mrb[0].mxu0
    %v1338 = vadd.f32 0.0, %v1337
    %v1339 = vpop.f32.mrb[0].mxu0
    %v1340 = vpop.f32.mrb[0].mxu0
    %v1341 = vadd.f32 0.0, %v1340
    %v1342 = vpop.f32.mrb[0].mxu0
    %1343 = vdwg.mxu0
    %v1344 = vmul.f32 %v1338, %v401
    %v1345 = vmul.f32 %v1341, %v401
    %v1346 = vmax.f32 %v1344, 0.0
    %v1347 = vmax.f32 %v1345, 0.0
    %v1348 = vrsqrt.pop %v1346
    %v1349 = vmul.f32 %v1346, %v1348
    %vm1350 = vcmp.eq.f32.partialorder %v1346, inf
    %v1351 = vsel %vm1350, %v1346, %v1349
    %vm1352 = vcmp.eq.f32.partialorder %v1346, 0.0
    %v1353 = vand.u32 %v1346, 2147483648
    %v1354 = vsel %vm1352, %v1353, %v1351
    %v1355 = vrsqrt.pop %v1347
    %v1356 = vmul.f32 %v1347, %v1355
    %vm1357 = vcmp.eq.f32.partialorder %v1347, inf
    %v1358 = vsel %vm1357, %v1347, %v1356
    %vm1359 = vcmp.eq.f32.partialorder %v1347, 0.0
    %v1360 = vand.u32 %v1347, 2147483648
    %v1361 = vsel %vm1359, %v1360, %v1358
    %s1362 = sld [smem:[#allocation14 + $0x2]]
    %v1363 = vstv %s1362
    %v1364 = vmul.f32 %v1354, %v1363
    %v1365 = vmul.f32 %v1361, %v1363
    %v1366 = vmul.f32 %v1364, 1.442695
    %v1367 = vpow.pop %v1366
    %v1368 = vmul.f32 %v1365, 1.442695
    %v1369 = vpow.pop %v1368
    %v1370 = vmax.f32 %v1367, 1e-05
    %v1371 = vmax.f32 %v1369, 1e-05
    %v1372 = vmin.f32 %v1370, 100000.0
    %v1373 = vmin.f32 %v1371, 100000.0
    %v1374 = vmul.f32 %v1271, %v1372
    %v1375 = vmul.f32 %v1272, %v1373
    %v1376 = vsel %vm422, %v1374, -inf
    %1377 = vmax.xlane.f32.xlu0 %v1376
    %v1378 = vpop.xlane.xlu0 %1377
    %v1379 = vsel %vm422, %v1375, -inf
    %1380 = vmax.xlane.f32.xlu0 %v1379
    %v1381 = vpop.xlane.xlu0 %1380
    %v1382 = vsub.f32 %v1374, %v1378
    %v1383 = vsub.f32 %v1375, %v1381
    %v1384 = vmul.f32 %v1382, 1.442695
    %v1385 = vpow.pop %v1384
    %v1386 = vmul.f32 %v1383, 1.442695
    %v1387 = vpow.pop %v1386
    %v1388 = vsel %vm422, %v1385, 0.0
    %1389 = vadd.xlane.f32.xlu0 %v1388
    %v1390 = vpop.xlane.xlu0 %1389
    %v1391 = vsel %vm422, %v1387, 0.0
    %1392 = vadd.xlane.f32.xlu0 %v1391
    %v1393 = vpop.xlane.xlu0 %1392
    %v1394 = vrcp.pop %v1390
    %v1395 = vrcp.pop %v1393
    %v1396 = vmul.f32 %v1385, %v1394
    %v1397 = vmul.f32 %v1387, %v1395
    %v1398 = vsel %vm648, 0.0, %v1396
    %v1399 = vsel %vm648, 0.0, %v1397
    %v1400 = vpack.c.bf16 %v1398, %v1398
    %v1401 = vpack.c.bf16 %v1399, %v1399
    %1402 = vrot.lane.b32.xlu0 %v420, 112
    %v1403 = vpop.permute.xlu0 %1402
    %v1405 = vsel %vm422, %v1400, 0
    %v1408 = vsel %vm548, %v1403, 0
    %1410 = vmatprep.subr.bf16.mxu0 0
    %1411 = vmatpush1.bf16.msra.mxu0 %v1408
    %1412 = vmatprep.subr.bf16.mxu0 0
    %1413 = vmatpush1.bf16.msra.mxu0 0
    %1414 = vmatprep.subr.bf16.mxu0 0
    %1415 = vmatpush1.bf16.msra.mxu0 0
    %1416 = vmatprep.subr.bf16.mxu0 0
    %1417 = vmatpush1.bf16.msra.mxu0 0
    %1418 = vmatprep.subr.bf16.mxu0 0
    %1419 = vmatpush1.bf16.msra.mxu0 0
    %1420 = vmatprep.subr.bf16.mxu0 0
    %1421 = vmatpush1.bf16.msra.mxu0 0
    %1422 = vmatprep.subr.bf16.mxu0 0
    %1423 = vmatpush1.bf16.msra.mxu0 0
    %1424 = vmatprep.subr.bf16.mxu0 0
    %1425 = vmatpush1.bf16.msra.mxu0 0
    %1426 = vmatprep.subr.bf16.mxu0 0
    %1427 = vmatpush1.bf16.msra.mxu0 0
    %1428 = vmatprep.subr.bf16.mxu0 0
    %1429 = vmatpush1.bf16.msra.mxu0 0
    %1430 = vmatprep.subr.bf16.mxu0 0
    %1431 = vmatpush1.bf16.msra.mxu0 0
    %1432 = vmatprep.subr.bf16.mxu0 0
    %1433 = vmatpush1.bf16.msra.mxu0 0
    %1434 = vmatprep.subr.bf16.mxu0 0
    %1435 = vmatpush1.bf16.msra.mxu0 0
    %1436 = vmatprep.subr.bf16.mxu0 0
    %1437 = vmatpush1.bf16.msra.mxu0 0
    %1438 = vmatprep.subr.bf16.mxu0 0
    %1439 = vmatpush1.bf16.msra.mxu0 0
    %1440 = vmatprep.subr.bf16.mxu0 0
    %1441 = vmatpush1.bf16.msra.mxu0 0
    %1442 = vmatprep.mubr.bf16.mxu0 0
    %1443 = vmatmul.mubr.bf16.gmra.mrb[0].mxu0 %v1405
    %v1444 = vpop.f32.mrb[0].mxu0
    %v1445 = vadd.f32 0.0, %v1444
    %v1446 = vpop.f32.mrb[0].mxu0
    %v1447 = vpop.f32.mrb[0].mxu0
    %v1448 = vpop.f32.mrb[0].mxu0
    %1449 = vdwg.mxu0
    %1450 = vrot.lane.b32.xlu0 %v421, 112
    %v1451 = vpop.permute.xlu0 %1450
    %v1453 = vsel %vm422, %v1401, 0
    %v1456 = vsel %vm548, %v1451, 0
    %1458 = vmatprep.subr.bf16.mxu0 0
    %1459 = vmatpush1.bf16.msra.mxu0 %v1456
    %1460 = vmatprep.subr.bf16.mxu0 0
    %1461 = vmatpush1.bf16.msra.mxu0 0
    %1462 = vmatprep.subr.bf16.mxu0 0
    %1463 = vmatpush1.bf16.msra.mxu0 0
    %1464 = vmatprep.subr.bf16.mxu0 0
    %1465 = vmatpush1.bf16.msra.mxu0 0
    %1466 = vmatprep.subr.bf16.mxu0 0
    %1467 = vmatpush1.bf16.msra.mxu0 0
    %1468 = vmatprep.subr.bf16.mxu0 0
    %1469 = vmatpush1.bf16.msra.mxu0 0
    %1470 = vmatprep.subr.bf16.mxu0 0
    %1471 = vmatpush1.bf16.msra.mxu0 0
    %1472 = vmatprep.subr.bf16.mxu0 0
    %1473 = vmatpush1.bf16.msra.mxu0 0
    %1474 = vmatprep.subr.bf16.mxu0 0
    %1475 = vmatpush1.bf16.msra.mxu0 0
    %1476 = vmatprep.subr.bf16.mxu0 0
    %1477 = vmatpush1.bf16.msra.mxu0 0
    %1478 = vmatprep.subr.bf16.mxu0 0
    %1479 = vmatpush1.bf16.msra.mxu0 0
    %1480 = vmatprep.subr.bf16.mxu0 0
    %1481 = vmatpush1.bf16.msra.mxu0 0
    %1482 = vmatprep.subr.bf16.mxu0 0
    %1483 = vmatpush1.bf16.msra.mxu0 0
    %1484 = vmatprep.subr.bf16.mxu0 0
    %1485 = vmatpush1.bf16.msra.mxu0 0
    %1486 = vmatprep.subr.bf16.mxu0 0
    %1487 = vmatpush1.bf16.msra.mxu0 0
    %1488 = vmatprep.subr.bf16.mxu0 0
    %1489 = vmatpush1.bf16.msra.mxu0 0
    %1490 = vmatprep.mubr.bf16.mxu0 0
    %1491 = vmatmul.mubr.bf16.gmra.mrb[0].mxu0 %v1453
    %v1492 = vpop.f32.mrb[0].mxu0
    %v1493 = vadd.f32 0.0, %v1492
    %v1494 = vpop.f32.mrb[0].mxu0
    %v1495 = vpop.f32.mrb[0].mxu0
    %v1496 = vpop.f32.mrb[0].mxu0
    %1497 = vdwg.mxu0
    %v1498 = vpack.c.bf16 %v1493, %v1445
    %s1499 = scalar_lea.vmem %s9, 8
    %v1500 = vld [vmem:[%s1499] sm:$0xf]
    %v1502 = vsel %vm422, %v1498, 0
    %v1505 = vsel %vm548, %v1500, 0
    %1507 = vmatprep.subr.bf16.mxu0 0
    %1508 = vmatpush1.bf16.msra.mxu0 %v1505
    %1509 = vmatprep.subr.bf16.mxu0 0
    %1510 = vmatpush1.bf16.msra.mxu0 0
    %1511 = vmatprep.subr.bf16.mxu0 0
    %1512 = vmatpush1.bf16.msra.mxu0 0
    %1513 = vmatprep.subr.bf16.mxu0 0
    %1514 = vmatpush1.bf16.msra.mxu0 0
    %1515 = vmatprep.subr.bf16.mxu0 0
    %1516 = vmatpush1.bf16.msra.mxu0 0
    %1517 = vmatprep.subr.bf16.mxu0 0
    %1518 = vmatpush1.bf16.msra.mxu0 0
    %1519 = vmatprep.subr.bf16.mxu0 0
    %1520 = vmatpush1.bf16.msra.mxu0 0
    %1521 = vmatprep.subr.bf16.mxu0 0
    %1522 = vmatpush1.bf16.msra.mxu0 0
    %1523 = vmatprep.subr.bf16.mxu0 0
    %1524 = vmatpush1.bf16.msra.mxu0 0
    %1525 = vmatprep.subr.bf16.mxu0 0
    %1526 = vmatpush1.bf16.msra.mxu0 0
    %1527 = vmatprep.subr.bf16.mxu0 0
    %1528 = vmatpush1.bf16.msra.mxu0 0
    %1529 = vmatprep.subr.bf16.mxu0 0
    %1530 = vmatpush1.bf16.msra.mxu0 0
    %1531 = vmatprep.subr.bf16.mxu0 0
    %1532 = vmatpush1.bf16.msra.mxu0 0
    %1533 = vmatprep.subr.bf16.mxu0 0
    %1534 = vmatpush1.bf16.msra.mxu0 0
    %1535 = vmatprep.subr.bf16.mxu0 0
    %1536 = vmatpush1.bf16.msra.mxu0 0
    %1537 = vmatprep.subr.bf16.mxu0 0
    %1538 = vmatpush1.bf16.msra.mxu0 0
    %1539 = vmatprep.mubr.bf16.mxu0 0
    %1540 = vmatmul.mubr.bf16.gmra.mrb[0].mxu0 %v1502
    %v1541 = vpop.f32.mrb[0].mxu0
    %v1542 = vadd.f32 0.0, %v1541
    %v1543 = vpop.f32.mrb[0].mxu0
    %v1544 = vpop.f32.mrb[0].mxu0
    %v1545 = vadd.f32 0.0, %v1544
    %v1546 = vpop.f32.mrb[0].mxu0
    %1547 = vdwg.mxu0
    %v1548 = vadd.f32 %v1165, %v1542
    %v1549 = vadd.f32 %v1168, %v1545
    %1550 = vrot.lane.b32.xlu0 %v410, 104
    %v1551 = vpop.permute.xlu0 %1550
    %1552 = vrot.lane.b32.xlu0 %v415, 104
    %v1553 = vpop.permute.xlu0 %1552
    %v1555 = vsel %vm422, %v1551, 0
    %v1558 = vsel %vm422, %v1553, 0
    %1560 = vmatprep.subr.bf16.mxu0 0
    %1561 = vmatpush1.bf16.xpose.msra.mxu0 %v1558
    %1562 = vmatprep.subr.bf16.mxu0 0
    %1563 = vmatpush1.bf16.xpose.msra.mxu0 0
    %1564 = vmatprep.subr.bf16.mxu0 0
    %1565 = vmatpush1.bf16.xpose.msra.mxu0 0
    %1566 = vmatprep.subr.bf16.mxu0 0
    %1567 = vmatpush1.bf16.xpose.msra.mxu0 0
    %1568 = vmatprep.subr.bf16.mxu0 0
    %1569 = vmatpush1.bf16.xpose.msra.mxu0 0
    %1570 = vmatprep.subr.bf16.mxu0 0
    %1571 = vmatpush1.bf16.xpose.msra.mxu0 0
    %1572 = vmatprep.subr.bf16.mxu0 0
    %1573 = vmatpush1.bf16.xpose.msra.mxu0 0
    %1574 = vmatprep.subr.bf16.mxu0 0
    %1575 = vmatpush1.bf16.xpose.msra.mxu0 0
    %1576 = vmatprep.subr.bf16.mxu0 0
    %1577 = vmatpush1.bf16.xpose.msra.mxu0 0
    %1578 = vmatprep.subr.bf16.mxu0 0
    %1579 = vmatpush1.bf16.xpose.msra.mxu0 0
    %1580 = vmatprep.subr.bf16.mxu0 0
    %1581 = vmatpush1.bf16.xpose.msra.mxu0 0
    %1582 = vmatprep.subr.bf16.mxu0 0
    %1583 = vmatpush1.bf16.xpose.msra.mxu0 0
    %1584 = vmatprep.subr.bf16.mxu0 0
    %1585 = vmatpush1.bf16.xpose.msra.mxu0 0
    %1586 = vmatprep.subr.bf16.mxu0 0
    %1587 = vmatpush1.bf16.xpose.msra.mxu0 0
    %1588 = vmatprep.subr.bf16.mxu0 0
    %1589 = vmatpush1.bf16.xpose.msra.mxu0 0
    %1590 = vmatprep.subr.bf16.mxu0 0
    %1591 = vmatpush1.bf16.xpose.msra.mxu0 0
    %1592 = vmatprep.mubr.bf16.mxu0 0
    %1593 = vmatmul.mubr.bf16.gmra.mrb[0].mxu0 %v1555
    %v1594 = vpop.f32.mrb[0].mxu0
    %v1595 = vadd.f32 0.0, %v1594
    %v1596 = vpop.f32.mrb[0].mxu0
    %v1597 = vpop.f32.mrb[0].mxu0
    %v1598 = vpop.f32.mrb[0].mxu0
    %1599 = vdwg.mxu0
    %1600 = vrot.lane.b32.xlu0 %v411, 104
    %v1601 = vpop.permute.xlu0 %1600
    %1602 = vrot.lane.b32.xlu0 %v416, 104
    %v1603 = vpop.permute.xlu0 %1602
    %v1605 = vsel %vm422, %v1601, 0
    %v1608 = vsel %vm422, %v1603, 0
    %1610 = vmatprep.subr.bf16.mxu0 0
    %1611 = vmatpush1.bf16.xpose.msra.mxu0 %v1608
    %1612 = vmatprep.subr.bf16.mxu0 0
    %1613 = vmatpush1.bf16.xpose.msra.mxu0 0
    %1614 = vmatprep.subr.bf16.mxu0 0
    %1615 = vmatpush1.bf16.xpose.msra.mxu0 0
    %1616 = vmatprep.subr.bf16.mxu0 0
    %1617 = vmatpush1.bf16.xpose.msra.mxu0 0
    %1618 = vmatprep.subr.bf16.mxu0 0
    %1619 = vmatpush1.bf16.xpose.msra.mxu0 0
    %1620 = vmatprep.subr.bf16.mxu0 0
    %1621 = vmatpush1.bf16.xpose.msra.mxu0 0
    %1622 = vmatprep.subr.bf16.mxu0 0
    %1623 = vmatpush1.bf16.xpose.msra.mxu0 0
    %1624 = vmatprep.subr.bf16.mxu0 0
    %1625 = vmatpush1.bf16.xpose.msra.mxu0 0
    %1626 = vmatprep.subr.bf16.mxu0 0
    %1627 = vmatpush1.bf16.xpose.msra.mxu0 0
    %1628 = vmatprep.subr.bf16.mxu0 0
    %1629 = vmatpush1.bf16.xpose.msra.mxu0 0
    %1630 = vmatprep.subr.bf16.mxu0 0
    %1631 = vmatpush1.bf16.xpose.msra.mxu0 0
    %1632 = vmatprep.subr.bf16.mxu0 0
    %1633 = vmatpush1.bf16.xpose.msra.mxu0 0
    %1634 = vmatprep.subr.bf16.mxu0 0
    %1635 = vmatpush1.bf16.xpose.msra.mxu0 0
    %1636 = vmatprep.subr.bf16.mxu0 0
    %1637 = vmatpush1.bf16.xpose.msra.mxu0 0
    %1638 = vmatprep.subr.bf16.mxu0 0
    %1639 = vmatpush1.bf16.xpose.msra.mxu0 0
    %1640 = vmatprep.subr.bf16.mxu0 0
    %1641 = vmatpush1.bf16.xpose.msra.mxu0 0
    %1642 = vmatprep.mubr.bf16.mxu0 0
    %1643 = vmatmul.mubr.bf16.gmra.mrb[0].mxu0 %v1605
    %v1644 = vpop.f32.mrb[0].mxu0
    %v1645 = vadd.f32 0.0, %v1644
    %v1646 = vpop.f32.mrb[0].mxu0
    %v1647 = vpop.f32.mrb[0].mxu0
    %v1648 = vpop.f32.mrb[0].mxu0
    %1649 = vdwg.mxu0
    %v1650 = vmul.f32 %v1595, 0.35355338
    %v1651 = vmul.f32 %v1645, 0.35355338
    %v1652 = vsel %vm517, %v1650, -1e+32
    %v1653 = vsel %vm517, %v1651, -1e+32
    %v1654 = vsel %vm422, %v1652, -inf
    %1655 = vmax.xlane.f32.xlu0 %v1654
    %v1656 = vpop.xlane.xlu0 %1655
    %v1657 = vsel %vm422, %v1653, -inf
    %1658 = vmax.xlane.f32.xlu0 %v1657
    %v1659 = vpop.xlane.xlu0 %1658
    %v1660 = vsub.f32 %v1652, %v1656
    %v1661 = vsub.f32 %v1653, %v1659
    %v1662 = vmul.f32 %v1660, 1.442695
    %v1663 = vpow.pop %v1662
    %v1664 = vmul.f32 %v1661, 1.442695
    %v1665 = vpow.pop %v1664
    %v1666 = vsel %vm422, %v1663, 0.0
    %1667 = vadd.xlane.f32.xlu0 %v1666
    %v1668 = vpop.xlane.xlu0 %1667
    %v1669 = vsel %vm422, %v1665, 0.0
    %1670 = vadd.xlane.f32.xlu0 %v1669
    %v1671 = vpop.xlane.xlu0 %1670
    %v1672 = vrcp.pop %v1668
    %v1673 = vrcp.pop %v1671
    %v1674 = vmul.f32 %v1663, %v1672
    %v1675 = vmul.f32 %v1665, %v1673
    %v1676 = vmul.f32 %v1674, %v398
    %v1677 = vmul.f32 %v1675, %v398
    %v1678 = vpack.c.bf16 %v1677, %v1676
    %v1680 = vsel %vm422, %v1678, 0
    %1682 = vmatprep.subr.bf16.mxu0 0
    %1683 = vmatpush1.bf16.msra.mxu0 %v550
    %1684 = vmatprep.subr.bf16.mxu0 0
    %1685 = vmatpush1.bf16.msra.mxu0 0
    %1686 = vmatprep.subr.bf16.mxu0 0
    %1687 = vmatpush1.bf16.msra.mxu0 0
    %1688 = vmatprep.subr.bf16.mxu0 0
    %1689 = vmatpush1.bf16.msra.mxu0 0
    %1690 = vmatprep.subr.bf16.mxu0 0
    %1691 = vmatpush1.bf16.msra.mxu0 0
    %1692 = vmatprep.subr.bf16.mxu0 0
    %1693 = vmatpush1.bf16.msra.mxu0 0
    %1694 = vmatprep.subr.bf16.mxu0 0
    %1695 = vmatpush1.bf16.msra.mxu0 0
    %1696 = vmatprep.subr.bf16.mxu0 0
    %1697 = vmatpush1.bf16.msra.mxu0 0
    %1698 = vmatprep.subr.bf16.mxu0 0
    %1699 = vmatpush1.bf16.msra.mxu0 0
    %1700 = vmatprep.subr.bf16.mxu0 0
    %1701 = vmatpush1.bf16.msra.mxu0 0
    %1702 = vmatprep.subr.bf16.mxu0 0
    %1703 = vmatpush1.bf16.msra.mxu0 0
    %1704 = vmatprep.subr.bf16.mxu0 0
    %1705 = vmatpush1.bf16.msra.mxu0 0
    %1706 = vmatprep.subr.bf16.mxu0 0
    %1707 = vmatpush1.bf16.msra.mxu0 0
    %1708 = vmatprep.subr.bf16.mxu0 0
    %1709 = vmatpush1.bf16.msra.mxu0 0
    %1710 = vmatprep.subr.bf16.mxu0 0
    %1711 = vmatpush1.bf16.msra.mxu0 0
    %1712 = vmatprep.subr.bf16.mxu0 0
    %1713 = vmatpush1.bf16.msra.mxu0 0
    %1714 = vmatprep.mubr.bf16.mxu0 0
    %1715 = vmatmul.mubr.bf16.gmra.mrb[0].mxu0 %v1680
    %v1716 = vpop.f32.mrb[0].mxu0
    %v1717 = vadd.f32 0.0, %v1716
    %v1718 = vpop.f32.mrb[0].mxu0
    %v1719 = vpop.f32.mrb[0].mxu0
    %v1720 = vadd.f32 0.0, %v1719
    %v1721 = vpop.f32.mrb[0].mxu0
    %1722 = vdwg.mxu0
    %v1723 = vmul.f32 %v1717, %v401
    %v1724 = vmul.f32 %v1720, %v401
    %v1725 = vmax.f32 %v1723, 0.0
    %v1726 = vmax.f32 %v1724, 0.0
    %v1727 = vrsqrt.pop %v1725
    %v1728 = vmul.f32 %v1725, %v1727
    %vm1729 = vcmp.eq.f32.partialorder %v1725, inf
    %v1730 = vsel %vm1729, %v1725, %v1728
    %vm1731 = vcmp.eq.f32.partialorder %v1725, 0.0
    %v1732 = vand.u32 %v1725, 2147483648
    %v1733 = vsel %vm1731, %v1732, %v1730
    %v1734 = vrsqrt.pop %v1726
    %v1735 = vmul.f32 %v1726, %v1734
    %vm1736 = vcmp.eq.f32.partialorder %v1726, inf
    %v1737 = vsel %vm1736, %v1726, %v1735
    %vm1738 = vcmp.eq.f32.partialorder %v1726, 0.0
    %v1739 = vand.u32 %v1726, 2147483648
    %v1740 = vsel %vm1738, %v1739, %v1737
    %s1741 = sld [smem:[#allocation14 + $0x3]]
    %v1742 = vstv %s1741
    %v1743 = vmul.f32 %v1733, %v1742
    %v1744 = vmul.f32 %v1740, %v1742
    %v1745 = vmul.f32 %v1743, 1.442695
    %v1746 = vpow.pop %v1745
    %v1747 = vmul.f32 %v1744, 1.442695
    %v1748 = vpow.pop %v1747
    %v1749 = vmax.f32 %v1746, 1e-05
    %v1750 = vmax.f32 %v1748, 1e-05
    %v1751 = vmin.f32 %v1749, 100000.0
    %v1752 = vmin.f32 %v1750, 100000.0
    %v1753 = vmul.f32 %v1650, %v1751
    %v1754 = vmul.f32 %v1651, %v1752
    %v1755 = vsel %vm422, %v1753, -inf
    %1756 = vmax.xlane.f32.xlu0 %v1755
    %v1757 = vpop.xlane.xlu0 %1756
    %v1758 = vsel %vm422, %v1754, -inf
    %1759 = vmax.xlane.f32.xlu0 %v1758
    %v1760 = vpop.xlane.xlu0 %1759
    %v1761 = vsub.f32 %v1753, %v1757
    %v1762 = vsub.f32 %v1754, %v1760
    %v1763 = vmul.f32 %v1761, 1.442695
    %v1764 = vpow.pop %v1763
    %v1765 = vmul.f32 %v1762, 1.442695
    %v1766 = vpow.pop %v1765
    %v1767 = vsel %vm422, %v1764, 0.0
    %1768 = vadd.xlane.f32.xlu0 %v1767
    %v1769 = vpop.xlane.xlu0 %1768
    %v1770 = vsel %vm422, %v1766, 0.0
    %1771 = vadd.xlane.f32.xlu0 %v1770
    %v1772 = vpop.xlane.xlu0 %1771
    %v1773 = vrcp.pop %v1769
    %v1774 = vrcp.pop %v1772
    %v1775 = vmul.f32 %v1764, %v1773
    %v1776 = vmul.f32 %v1766, %v1774
    %v1777 = vsel %vm648, 0.0, %v1775
    %v1778 = vsel %vm648, 0.0, %v1776
    %v1779 = vpack.c.bf16 %v1777, %v1777
    %v1780 = vpack.c.bf16 %v1778, %v1778
    %1781 = vrot.lane.b32.xlu0 %v420, 104
    %v1782 = vpop.permute.xlu0 %1781
    %v1784 = vsel %vm422, %v1779, 0
    %v1787 = vsel %vm548, %v1782, 0
    %1789 = vmatprep.subr.bf16.mxu0 0
    %1790 = vmatpush1.bf16.msra.mxu0 %v1787
    %1791 = vmatprep.subr.bf16.mxu0 0
    %1792 = vmatpush1.bf16.msra.mxu0 0
    %1793 = vmatprep.subr.bf16.mxu0 0
    %1794 = vmatpush1.bf16.msra.mxu0 0
    %1795 = vmatprep.subr.bf16.mxu0 0
    %1796 = vmatpush1.bf16.msra.mxu0 0
    %1797 = vmatprep.subr.bf16.mxu0 0
    %1798 = vmatpush1.bf16.msra.mxu0 0
    %1799 = vmatprep.subr.bf16.mxu0 0
    %1800 = vmatpush1.bf16.msra.mxu0 0
    %1801 = vmatprep.subr.bf16.mxu0 0
    %1802 = vmatpush1.bf16.msra.mxu0 0
    %1803 = vmatprep.subr.bf16.mxu0 0
    %1804 = vmatpush1.bf16.msra.mxu0 0
    %1805 = vmatprep.subr.bf16.mxu0 0
    %1806 = vmatpush1.bf16.msra.mxu0 0
    %1807 = vmatprep.subr.bf16.mxu0 0
    %1808 = vmatpush1.bf16.msra.mxu0 0
    %1809 = vmatprep.subr.bf16.mxu0 0
    %1810 = vmatpush1.bf16.msra.mxu0 0
    %1811 = vmatprep.subr.bf16.mxu0 0
    %1812 = vmatpush1.bf16.msra.mxu0 0
    %1813 = vmatprep.subr.bf16.mxu0 0
    %1814 = vmatpush1.bf16.msra.mxu0 0
    %1815 = vmatprep.subr.bf16.mxu0 0
    %1816 = vmatpush1.bf16.msra.mxu0 0
    %1817 = vmatprep.subr.bf16.mxu0 0
    %1818 = vmatpush1.bf16.msra.mxu0 0
    %1819 = vmatprep.subr.bf16.mxu0 0
    %1820 = vmatpush1.bf16.msra.mxu0 0
    %1821 = vmatprep.mubr.bf16.mxu0 0
    %1822 = vmatmul.mubr.bf16.gmra.mrb[0].mxu0 %v1784
    %v1823 = vpop.f32.mrb[0].mxu0
    %v1824 = vadd.f32 0.0, %v1823
    %v1825 = vpop.f32.mrb[0].mxu0
    %v1826 = vpop.f32.mrb[0].mxu0
    %v1827 = vpop.f32.mrb[0].mxu0
    %1828 = vdwg.mxu0
    %1829 = vrot.lane.b32.xlu0 %v421, 104
    %v1830 = vpop.permute.xlu0 %1829
    %v1832 = vsel %vm422, %v1780, 0
    %v1835 = vsel %vm548, %v1830, 0
    %1837 = vmatprep.subr.bf16.mxu0 0
    %1838 = vmatpush1.bf16.msra.mxu0 %v1835
    %1839 = vmatprep.subr.bf16.mxu0 0
    %1840 = vmatpush1.bf16.msra.mxu0 0
    %1841 = vmatprep.subr.bf16.mxu0 0
    %1842 = vmatpush1.bf16.msra.mxu0 0
    %1843 = vmatprep.subr.bf16.mxu0 0
    %1844 = vmatpush1.bf16.msra.mxu0 0
    %1845 = vmatprep.subr.bf16.mxu0 0
    %1846 = vmatpush1.bf16.msra.mxu0 0
    %1847 = vmatprep.subr.bf16.mxu0 0
    %1848 = vmatpush1.bf16.msra.mxu0 0
    %1849 = vmatprep.subr.bf16.mxu0 0
    %1850 = vmatpush1.bf16.msra.mxu0 0
    %1851 = vmatprep.subr.bf16.mxu0 0
    %1852 = vmatpush1.bf16.msra.mxu0 0
    %1853 = vmatprep.subr.bf16.mxu0 0
    %1854 = vmatpush1.bf16.msra.mxu0 0
    %1855 = vmatprep.subr.bf16.mxu0 0
    %1856 = vmatpush1.bf16.msra.mxu0 0
    %1857 = vmatprep.subr.bf16.mxu0 0
    %1858 = vmatpush1.bf16.msra.mxu0 0
    %1859 = vmatprep.subr.bf16.mxu0 0
    %1860 = vmatpush1.bf16.msra.mxu0 0
    %1861 = vmatprep.subr.bf16.mxu0 0
    %1862 = vmatpush1.bf16.msra.mxu0 0
    %1863 = vmatprep.subr.bf16.mxu0 0
    %1864 = vmatpush1.bf16.msra.mxu0 0
    %1865 = vmatprep.subr.bf16.mxu0 0
    %1866 = vmatpush1.bf16.msra.mxu0 0
    %1867 = vmatprep.subr.bf16.mxu0 0
    %1868 = vmatpush1.bf16.msra.mxu0 0
    %1869 = vmatprep.mubr.bf16.mxu0 0
    %1870 = vmatmul.mubr.bf16.gmra.mrb[0].mxu0 %v1832
    %v1871 = vpop.f32.mrb[0].mxu0
    %v1872 = vadd.f32 0.0, %v1871
    %v1873 = vpop.f32.mrb[0].mxu0
    %v1874 = vpop.f32.mrb[0].mxu0
    %v1875 = vpop.f32.mrb[0].mxu0
    %1876 = vdwg.mxu0
    %v1877 = vpack.c.bf16 %v1872, %v1824
    %s1878 = scalar_lea.vmem %s9, 12
    %v1879 = vld [vmem:[%s1878] sm:$0xf]
    %v1881 = vsel %vm422, %v1877, 0
    %v1884 = vsel %vm548, %v1879, 0
    %1886 = vmatprep.subr.bf16.mxu0 0
    %1887 = vmatpush1.bf16.msra.mxu0 %v1884
    %1888 = vmatprep.subr.bf16.mxu0 0
    %1889 = vmatpush1.bf16.msra.mxu0 0
    %1890 = vmatprep.subr.bf16.mxu0 0
    %1891 = vmatpush1.bf16.msra.mxu0 0
    %1892 = vmatprep.subr.bf16.mxu0 0
    %1893 = vmatpush1.bf16.msra.mxu0 0
    %1894 = vmatprep.subr.bf16.mxu0 0
    %1895 = vmatpush1.bf16.msra.mxu0 0
    %1896 = vmatprep.subr.bf16.mxu0 0
    %1897 = vmatpush1.bf16.msra.mxu0 0
    %1898 = vmatprep.subr.bf16.mxu0 0
    %1899 = vmatpush1.bf16.msra.mxu0 0
    %1900 = vmatprep.subr.bf16.mxu0 0
    %1901 = vmatpush1.bf16.msra.mxu0 0
    %1902 = vmatprep.subr.bf16.mxu0 0
    %1903 = vmatpush1.bf16.msra.mxu0 0
    %1904 = vmatprep.subr.bf16.mxu0 0
    %1905 = vmatpush1.bf16.msra.mxu0 0
    %1906 = vmatprep.subr.bf16.mxu0 0
    %1907 = vmatpush1.bf16.msra.mxu0 0
    %1908 = vmatprep.subr.bf16.mxu0 0
    %1909 = vmatpush1.bf16.msra.mxu0 0
    %1910 = vmatprep.subr.bf16.mxu0 0
    %1911 = vmatpush1.bf16.msra.mxu0 0
    %1912 = vmatprep.subr.bf16.mxu0 0
    %1913 = vmatpush1.bf16.msra.mxu0 0
    %1914 = vmatprep.subr.bf16.mxu0 0
    %1915 = vmatpush1.bf16.msra.mxu0 0
    %1916 = vmatprep.subr.bf16.mxu0 0
    %1917 = vmatpush1.bf16.msra.mxu0 0
    %1918 = vmatprep.mubr.bf16.mxu0 0
    %1919 = vmatmul.mubr.bf16.gmra.mrb[0].mxu0 %v1881
    %v1920 = vpop.f32.mrb[0].mxu0
    %v1921 = vadd.f32 0.0, %v1920
    %v1922 = vpop.f32.mrb[0].mxu0
    %v1923 = vpop.f32.mrb[0].mxu0
    %v1924 = vadd.f32 0.0, %v1923
    %v1925 = vpop.f32.mrb[0].mxu0
    %1926 = vdwg.mxu0
    %v1927 = vadd.f32 %v1548, %v1921
    %v1928 = vadd.f32 %v1549, %v1924
    %v1929 = vld [vmem:[#allocation12] sm:$0x1]
    %v1931 = vlaneseq
    %v1932 = vshrl.u32 %v1931, 7
    %v1933 = vsub.s32 0, %v1932
    %v1934 = vrot.slane %v1929, %v1933
    %v1936 = vadd.f32 %v1927, %v1934
    %v1937 = vadd.f32 %v1928, %v1934
    %v1938 = vadd.f32 %v177, %v1936
    %v1939 = vadd.f32 %v178, %v1937
    %v1940 = vsel %vm207, %v1938, 0.0
    %1941 = vadd.xlane.f32.xlu0 %v1940
    %v1942 = vpop.xlane.xlu0 %1941
    %v1943 = vsel %vm207, %v1939, 0.0
    %1944 = vadd.xlane.f32.xlu0 %v1943
    %v1945 = vpop.xlane.xlu0 %1944
    %v1946 = vrcp.pop 32.0
    %v1947 = vmul.f32 %v1942, %v1946
    %v1948 = vmul.f32 %v1945, %v1946
    %v1949 = vsub.f32 %v1938, %v1947
    %v1950 = vsub.f32 %v1939, %v1948
    %v1951 = vmul.f32 %v1949, %v1949
    %v1952 = vmul.f32 %v1950, %v1950
    %v1953 = vsel %vm207, %v1951, 0.0
    %1954 = vadd.xlane.f32.xlu0 %v1953
    %v1955 = vpop.xlane.xlu0 %1954
    %v1956 = vsel %vm207, %v1952, 0.0
    %1957 = vadd.xlane.f32.xlu0 %v1956
    %v1958 = vpop.xlane.xlu0 %1957
    %v1959 = vmul.f32 %v1955, %v1946
    %v1960 = vmul.f32 %v1958, %v1946
    %v1961 = vadd.f32 %v1959, 1e-05
    %v1962 = vadd.f32 %v1960, 1e-05
    %v1963 = vrsqrt.pop %v1961
    %v1964 = vrsqrt.pop %v1962
    %v1965 = vmul.f32 %v1949, %v1963
    %v1966 = vmul.f32 %v1950, %v1964
    %v1967 = vld [vmem:[#allocation15] sm:$0x1]
    %v1969 = vlaneseq
    %v1970 = vshrl.u32 %v1969, 7
    %v1971 = vsub.s32 0, %v1970
    %v1972 = vrot.slane %v1967, %v1971
    %v1974 = vmul.f32 %v1965, %v1972
    %v1975 = vmul.f32 %v1966, %v1972
    %v1976 = vld [vmem:[#allocation16] sm:$0x1]
    %v1978 = vlaneseq
    %v1979 = vshrl.u32 %v1978, 7
    %v1980 = vsub.s32 0, %v1979
    %v1981 = vrot.slane %v1976, %v1980
    %v1983 = vadd.f32 %v1974, %v1981
    %v1984 = vadd.f32 %v1975, %v1981
    %v1985 = vpack.c.bf16 %v1984, %v1983
    %v1986 = vld [vmem:[%s14] sm:$0xf]
    %v1987 = vld [vmem:[%s14 + $0x4] sm:$0xf]
    %v1988 = vld [vmem:[%s14 + $0x8] sm:$0xf]
    %v1989 = vld [vmem:[%s14 + $0xc] sm:$0xf]
    %v1990 = vld [vmem:[%s15] sm:$0x1]
    %v1992 = vlaneseq
    %v1993 = vshrl.u32 %v1992, 7
    %v1994 = vsub.s32 0, %v1993
    %v1995 = vrot.slane %v1990, %v1994
    %v2001 = vunpack.c.l.b16 %v1986
    %v2002 = vunpack.c.l.b16 %v1987
    %v2003 = vunpack.c.l.b16 %v1988
    %v2004 = vunpack.c.l.b16 %v1989
    %v2005 = vpack.c.b16 %v2002, %v2001
    %v2006 = vpack.c.b16 %v2004, %v2003
    %v2010 = vsel %vm207, %v1985, 0
    %2012 = vmatprep.subr.bf16.mxu0 0
    %2013 = vmatpush1.bf16.msra.mxu0 %v2005
    %2014 = vmatprep.subr.bf16.mxu0 0
    %2015 = vmatpush1.bf16.msra.mxu0 %v2006
    %2016 = vmatprep.subr.bf16.mxu0 0
    %2017 = vmatpush1.bf16.msra.mxu0 0
    %2018 = vmatprep.subr.bf16.mxu0 0
    %2019 = vmatpush1.bf16.msra.mxu0 0
    %2020 = vmatprep.subr.bf16.mxu0 0
    %2021 = vmatpush1.bf16.msra.mxu0 0
    %2022 = vmatprep.subr.bf16.mxu0 0
    %2023 = vmatpush1.bf16.msra.mxu0 0
    %2024 = vmatprep.subr.bf16.mxu0 0
    %2025 = vmatpush1.bf16.msra.mxu0 0
    %2026 = vmatprep.subr.bf16.mxu0 0
    %2027 = vmatpush1.bf16.msra.mxu0 0
    %2028 = vmatprep.subr.bf16.mxu0 0
    %2029 = vmatpush1.bf16.msra.mxu0 0
    %2030 = vmatprep.subr.bf16.mxu0 0
    %2031 = vmatpush1.bf16.msra.mxu0 0
    %2032 = vmatprep.subr.bf16.mxu0 0
    %2033 = vmatpush1.bf16.msra.mxu0 0
    %2034 = vmatprep.subr.bf16.mxu0 0
    %2035 = vmatpush1.bf16.msra.mxu0 0
    %2036 = vmatprep.subr.bf16.mxu0 0
    %2037 = vmatpush1.bf16.msra.mxu0 0
    %2038 = vmatprep.subr.bf16.mxu0 0
    %2039 = vmatpush1.bf16.msra.mxu0 0
    %2040 = vmatprep.subr.bf16.mxu0 0
    %2041 = vmatpush1.bf16.msra.mxu0 0
    %2042 = vmatprep.subr.bf16.mxu0 0
    %2043 = vmatpush1.bf16.msra.mxu0 0
    %2044 = vmatprep.mubr.bf16.mxu0 0
    %2045 = vmatmul.mubr.bf16.gmra.mrb[0].mxu0 %v2010
    %v2046 = vpop.f32.mrb[0].mxu0
    %v2047 = vadd.f32 %v1995, %v2046
    %v2048 = vpop.f32.mrb[0].mxu0
    %v2049 = vpop.f32.mrb[0].mxu0
    %v2050 = vadd.f32 %v1995, %v2049
    %v2051 = vpop.f32.mrb[0].mxu0
    %2052 = vdwg.mxu0
    %v2053 = vmax.f32 %v2047, 0.0
    %v2054 = vmax.f32 %v2050, 0.0
    %v2055 = vpack.c.bf16 %v2054, %v2053
    %v2056 = vld [vmem:[%s16] sm:$0xf]
    %v2057 = vld [vmem:[%s16 + $0x4] sm:$0xf]
    %v2058 = vld [vmem:[%s16 + $0x8] sm:$0xf]
    %v2059 = vld [vmem:[%s16 + $0xc] sm:$0xf]
    %v2060 = vld [vmem:[%s16 + $0x10] sm:$0xf]
    %v2061 = vld [vmem:[%s16 + $0x14] sm:$0xf]
    %v2062 = vld [vmem:[%s16 + $0x18] sm:$0xf]
    %v2063 = vld [vmem:[%s16 + $0x1c] sm:$0xf]
    %v2064 = vld [vmem:[%s17] sm:$0x1]
    %v2066 = vlaneseq
    %v2067 = vshrl.u32 %v2066, 7
    %v2068 = vsub.s32 0, %v2067
    %v2069 = vrot.slane %v2064, %v2068
    %v2079 = vunpack.c.l.b16 %v2056
    %v2080 = vunpack.c.l.b16 %v2057
    %v2081 = vunpack.c.l.b16 %v2058
    %v2082 = vunpack.c.l.b16 %v2059
    %v2083 = vunpack.c.l.b16 %v2060
    %v2084 = vunpack.c.l.b16 %v2061
    %v2085 = vunpack.c.l.b16 %v2062
    %v2086 = vunpack.c.l.b16 %v2063
    %v2087 = vpack.c.b16 %v2080, %v2079
    %v2088 = vpack.c.b16 %v2082, %v2081
    %v2089 = vpack.c.b16 %v2084, %v2083
    %v2090 = vpack.c.b16 %v2086, %v2085
    %vm2095 = vcmask 523264
    %v2097 = vsel %vm2095, %v2055, 0
    %2099 = vmatprep.subr.bf16.mxu0 0
    %2100 = vmatpush1.bf16.msra.mxu0 %v2087
    %2101 = vmatprep.subr.bf16.mxu0 0
    %2102 = vmatpush1.bf16.msra.mxu0 %v2088
    %2103 = vmatprep.subr.bf16.mxu0 0
    %2104 = vmatpush1.bf16.msra.mxu0 %v2089
    %2105 = vmatprep.subr.bf16.mxu0 0
    %2106 = vmatpush1.bf16.msra.mxu0 %v2090
    %2107 = vmatprep.subr.bf16.mxu0 0
    %2108 = vmatpush1.bf16.msra.mxu0 0
    %2109 = vmatprep.subr.bf16.mxu0 0
    %2110 = vmatpush1.bf16.msra.mxu0 0
    %2111 = vmatprep.subr.bf16.mxu0 0
    %2112 = vmatpush1.bf16.msra.mxu0 0
    %2113 = vmatprep.subr.bf16.mxu0 0
    %2114 = vmatpush1.bf16.msra.mxu0 0
    %2115 = vmatprep.subr.bf16.mxu0 0
    %2116 = vmatpush1.bf16.msra.mxu0 0
    %2117 = vmatprep.subr.bf16.mxu0 0
    %2118 = vmatpush1.bf16.msra.mxu0 0
    %2119 = vmatprep.subr.bf16.mxu0 0
    %2120 = vmatpush1.bf16.msra.mxu0 0
    %2121 = vmatprep.subr.bf16.mxu0 0
    %2122 = vmatpush1.bf16.msra.mxu0 0
    %2123 = vmatprep.subr.bf16.mxu0 0
    %2124 = vmatpush1.bf16.msra.mxu0 0
    %2125 = vmatprep.subr.bf16.mxu0 0
    %2126 = vmatpush1.bf16.msra.mxu0 0
    %2127 = vmatprep.subr.bf16.mxu0 0
    %2128 = vmatpush1.bf16.msra.mxu0 0
    %2129 = vmatprep.subr.bf16.mxu0 0
    %2130 = vmatpush1.bf16.msra.mxu0 0
    %2131 = vmatprep.mubr.bf16.mxu0 0
    %2132 = vmatmul.mubr.bf16.gmra.mrb[0].mxu0 %v2097
    %v2133 = vpop.f32.mrb[0].mxu0
    %v2134 = vadd.f32 %v2069, %v2133
    %v2135 = vpop.f32.mrb[0].mxu0
    %v2136 = vpop.f32.mrb[0].mxu0
    %v2137 = vadd.f32 %v2069, %v2136
    %v2138 = vpop.f32.mrb[0].mxu0
    %2139 = vdwg.mxu0
    %v2140 = vadd.f32 %v1983, %v2134
    %v2141 = vadd.f32 %v1984, %v2137
    %v2142 = vsel %vm207, %v2140, 0.0
    %2143 = vadd.xlane.f32.xlu0 %v2142
    %v2144 = vpop.xlane.xlu0 %2143
    %v2145 = vsel %vm207, %v2141, 0.0
    %2146 = vadd.xlane.f32.xlu0 %v2145
    %v2147 = vpop.xlane.xlu0 %2146
    %v2148 = vmul.f32 %v2144, %v1946
    %v2149 = vmul.f32 %v2147, %v1946
    %v2150 = vsub.f32 %v2140, %v2148
    %v2151 = vsub.f32 %v2141, %v2149
    %v2152 = vmul.f32 %v2150, %v2150
    %v2153 = vmul.f32 %v2151, %v2151
    %v2154 = vsel %vm207, %v2152, 0.0
    %2155 = vadd.xlane.f32.xlu0 %v2154
    %v2156 = vpop.xlane.xlu0 %2155
    %v2157 = vsel %vm207, %v2153, 0.0
    %2158 = vadd.xlane.f32.xlu0 %v2157
    %v2159 = vpop.xlane.xlu0 %2158
    %v2160 = vmul.f32 %v2156, %v1946
    %v2161 = vmul.f32 %v2159, %v1946
    %v2162 = vadd.f32 %v2160, 1e-05
    %v2163 = vadd.f32 %v2161, 1e-05
    %v2164 = vrsqrt.pop %v2162
    %v2165 = vrsqrt.pop %v2163
    %v2166 = vmul.f32 %v2150, %v2164
    %v2167 = vmul.f32 %v2151, %v2165
    %v2168 = vld [vmem:[%s18] sm:$0x1]
    %v2170 = vlaneseq
    %v2171 = vshrl.u32 %v2170, 7
    %v2172 = vsub.s32 0, %v2171
    %v2173 = vrot.slane %v2168, %v2172
    %v2175 = vmul.f32 %v2166, %v2173
    %v2176 = vmul.f32 %v2167, %v2173
    %v2177 = vld [vmem:[%s19] sm:$0x1]
    %v2179 = vlaneseq
    %v2180 = vshrl.u32 %v2179, 7
    %v2181 = vsub.s32 0, %v2180
    %v2182 = vrot.slane %v2177, %v2181
    %v2184 = vadd.f32 %v2175, %v2182
    %v2185 = vadd.f32 %v2176, %v2182
    %2186 = vst.msk [vmem:[#allocation18] sm:$0xff] %vm207, %v2184
    %2187 = vst.msk [vmem:[#allocation18 + $0x8] sm:$0xff] %vm207, %v2185
    // Predicated region
    $region118: #{tpu_custom_call.1} parent=1 // pred_check
      _
    $region119: #{tpu_custom_call.1} parent=1 // pred_check_branch
      %2189 = sbr.rel (0) target = $region121
    $region120: #{tpu_custom_call.1} parent=1 // pred_region
      %s2191 = ssub.s32 256, 256
      %2192 = vsyncadd [#allocation4], %s2191
      %s2193 = sshll.u32 [#allocation18], 4
      %s2194 = int_to_ptr.vmem [resolvable:$true] %s2193
      %2199 = dma.vmem_to_hbm [thread:$0]  %s2194, 256, %s20, [#allocation4], 128, 128, 8
    $region121: #{tpu_custom_call.1} parent=1 // pred_fallthru
      _
    // Predicated region
    $region122: #{tpu_custom_call.1} parent=1 // pred_check
      _
    $region123: #{tpu_custom_call.1} parent=1 // pred_check_branch
      %2201 = sbr.rel (0) target = $region125
    $region124: #{tpu_custom_call.1} parent=1 // pred_region
      %2202 = dma.done [#allocation4], 256
    $region125: #{tpu_custom_call.1} parent=1 // pred_fallthru
      _
    %2203 = vsyncpa [#allocation3], 1
    %2204 = vsyncpa [#allocation7], 1
    %2205 = vsyncpa [#allocation10], 1
    %2206 = vsyncpa [#allocation13], 1
    %2207 = vsyncpa [#allocation17], 1
    %2208 = vsyncpa [#allocation4], 1
    %2209 = vsyncpa [#allocation5], 1

</llo_original>
